<compile_context>
chip_gen: v7x
topology: tpu7x:2x2x1
jax: 0.10.0
libtpu: 0.0.40
codegen_flags: <defaults>
</compile_context>

<pallas_src>
import jax
import jax.numpy as jnp
from jax.experimental import pallas as pl
from jax.experimental.pallas import tpu as pltpu

BN_EPS = 1e-5


# --------------------------- fused Pallas kernel -----------------------------
def _init_s2_kernel(col1_ref, w1_ref, b1_ref, w2_ref, b2_ref, w3_ref, b3_ref,
                    out_ref, pad_ref):
    """One (batch, row-tile) grid step of the fused conv-BN-ReLU stack."""
    tr = col1_ref.shape[1] - 4            # output rows produced this step
    wo = col1_ref.shape[2]                # output width
    planes = pad_ref.shape[2]
    r = pl.program_id(1)
    last = pl.num_programs(1) - 1

    # --- border columns of the single, reused padded staging scratch --------
    # Zeroed every step (only 2*(tr+4) tiny rows) so correctness never depends
    # on grid-step ordering under megacore splitting.
    zcol = jnp.zeros((tr + 4, 1, planes), pad_ref.dtype)
    pad_ref[:, 0:1, :] = zcol
    pad_ref[:, wo + 1:wo + 2, :] = zcol

    # --- conv1 (stride 2) + folded BN + ReLU: one wide-K im2col matmul ------
    # The col1 block already carries this tile's 2-row halo (tr+4 rows).
    col1 = col1_ref[0].reshape((tr + 4) * wo, col1_ref.shape[3])
    y1 = jnp.dot(col1, w1_ref[...], preferred_element_type=jnp.float32)
    y1 = jnp.maximum(y1 + b1_ref[...], 0.0)
    pad_ref[:, 1:wo + 1, :] = y1.reshape(tr + 4, wo, planes).astype(pad_ref.dtype)

    # Halo rows falling outside the image are conv2's zero padding.
    zrow2 = jnp.zeros((2, wo, planes), pad_ref.dtype)

    @pl.when(r == 0)
    def _():
        pad_ref[0:2, 1:wo + 1, :] = zrow2

    @pl.when(r == last)
    def _():
        pad_ref[tr + 2:tr + 4, 1:wo + 1, :] = zrow2

    # --- conv2 + folded BN + ReLU: single K = 9*planes im2col matmul --------
    col2 = jnp.concatenate(
        [pad_ref[ky:ky + tr + 2, kx:kx + wo, :]
         for ky in range(3) for kx in range(3)],
        axis=-1).reshape((tr + 2) * wo, 9 * planes)
    y2 = jnp.dot(col2, w2_ref[...], preferred_element_type=jnp.float32)
    y2 = jnp.maximum(y2 + b2_ref[...], 0.0)
    # Reuse the same scratch: rows 0..tr+1 become relu(conv2); conv3 never
    # reads rows tr+2..tr+3, so the stale conv1 rows there are dead.
    pad_ref[0:tr + 2, 1:wo + 1, :] = (
        y2.reshape(tr + 2, wo, planes).astype(pad_ref.dtype))

    zrow1 = jnp.zeros((1, wo, planes), pad_ref.dtype)

    @pl.when(r == 0)
    def _():
        pad_ref[0:1, 1:wo + 1, :] = zrow1

    @pl.when(r == last)
    def _():
        pad_ref[tr + 1:tr + 2, 1:wo + 1, :] = zrow1

    # --- conv3 + folded BN + ReLU --------------------------------------------
    col3 = jnp.concatenate(
        [pad_ref[ky:ky + tr, kx:kx + wo, :]
         for ky in range(3) for kx in range(3)],
        axis=-1).reshape(tr * wo, 9 * planes)
    y3 = jnp.dot(col3, w3_ref[...], preferred_element_type=jnp.float32)
    y3 = jnp.maximum(y3 + b3_ref[...], 0.0)

    # Channel-major (cout, tr*wo): lane-dense stores + free metadata reshape
    # back to NCHW in the wrapper (cheaper than an XLA transpose over HBM).
    out_ref[0] = y3.T.astype(out_ref.dtype)


# ------------------------------- wrapper --------------------------------------
def _fold_bn(w, b, g, be, m, v):
    """Fold eval-mode BN into a 3x3 conv.

    Returns ((9*Cin, Cout) bf16 weight matrix, (1, Cout) f32 bias)."""
    s = g * jax.lax.rsqrt(v + BN_EPS)
    wmat = jnp.transpose(w, (2, 3, 1, 0)).reshape(-1, w.shape[0]) * s[None, :]
    bias = (b - m) * s + be
    return wmat.astype(jnp.bfloat16), bias.reshape(1, -1).astype(jnp.float32)


def _vmem_limit_bytes():
    """Generation-aware VMEM budget: ~7/8 of physical (≈56 MiB on v7x,
    ≈112 MiB on v5e/v6e); safe 64 MiB fallback if the query is unavailable."""
    try:
        cap = int(pltpu.get_tpu_info().vmem_capacity_bytes)
        return (cap // 8) * 7
    except Exception:
        return 64 * 1024 * 1024


def init_s2_forward(x, params, tile_rows=None):
    """Forward pass of init_s2.  x is NCHW float32, returns NCHW float32."""
    n, cin, h, w = x.shape
    assert h % 2 == 0 and w % 2 == 0, "even spatial dims expected"
    ho, wo = h // 2, w // 2
    planes = params["w2"].shape[0]
    cout = params["w3"].shape[0]

    # Row-tile selection: keep the output block lane-dense (tr*wo % 128 == 0)
    # or fall back to a single full-height tile.
    if tile_rows is None:
        tile_rows = 8 if (ho % 8 == 0 and (8 * wo) % 128 == 0) else ho
    tr = tile_rows
    assert ho % tr == 0, "tile_rows must divide the output height"
    num_tiles = ho // tr
    assert num_tiles == 1 or (tr * wo) % 128 == 0, \
        "row tile must give lane-dense output blocks"

    # conv1 im2col built in the wrapper (the raw input is the smallest tensor
    # in the block).  Each row tile's tr+4 conv1 rows (2-row halo, zero rows
    # outside the image) are stored contiguously so a plain Blocked BlockSpec
    # can fetch exactly one tile per grid step.
    x_nhwc = jnp.transpose(x, (0, 2, 3, 1))
    xpad = jnp.pad(x_nhwc, ((0, 0), (1, 1), (1, 1), (0, 0)))
    taps = [xpad[:, ky:ky + 2 * ho:2, kx:kx + 2 * wo:2, :]
            for ky in range(3) for kx in range(3)]
    col1 = jnp.concatenate(taps, axis=-1)                    # (n, ho, wo, 9*cin)
    col1 = jnp.pad(col1, ((0, 0), (2, 2), (0, 0), (0, 0)))   # zero halo rows
    col1 = jnp.concatenate([col1[:, r * tr:r * tr + tr + 4]
                            for r in range(num_tiles)], axis=1)
    col1 = col1.astype(jnp.bfloat16)        # (n, num_tiles*(tr+4), wo, 9*cin)

    # Fold BN into the conv weights / biases (eval mode); keep wide-K layout.
    w1m, b1v = _fold_bn(params["w1"], params["b1"], params["g1"],
                        params["be1"], params["m1"], params["v1"])
    w2m, b2v = _fold_bn(params["w2"], params["b2"], params["g2"],
                        params["be2"], params["m2"], params["v2"])
    w3m, b3v = _fold_bn(params["w3"], params["b3"], params["g3"],
                        params["be3"], params["m3"], params["v3"])

    def const_spec(a):
        return pl.BlockSpec(a.shape, lambda b, r, nd=a.ndim: (0,) * nd)

    out = pl.pallas_call(
        _init_s2_kernel,
        out_shape=jax.ShapeDtypeStruct((n, cout, ho * wo), jnp.float32),
        grid=(n, num_tiles),
        in_specs=[
            pl.BlockSpec((1, tr + 4, wo, 9 * cin), lambda b, r: (b, r, 0, 0)),
            const_spec(w1m), const_spec(b1v),
            const_spec(w2m), const_spec(b2v),
            const_spec(w3m), const_spec(b3v),
        ],
        out_specs=pl.BlockSpec((1, cout, tr * wo), lambda b, r: (b, 0, r)),
        scratch_shapes=[
            # Single reused bf16 padded staging buffer for relu(conv1) and
            # relu(conv2): (tr+4, wo+2, planes).
            pltpu.VMEM((tr + 4, wo + 2, planes), jnp.bfloat16),
        ],
        compiler_params=pltpu.CompilerParams(
            dimension_semantics=("parallel", "parallel"),
            vmem_limit_bytes=_vmem_limit_bytes(),
        ),
    )(col1, w1m, b1v, w2m, b2v, w3m, b3v)

    # Free metadata reshape back to NCHW (no transpose pass in XLA).
    return out.reshape(n, cout, ho, wo)


# ---------------- pure-JAX reference (f32, for a sanity check) ----------------
def init_s2_reference(x, params):
    def conv(x, w, b, stride):
        y = jax.lax.conv_general_dilated(
            x, w, (stride, stride), [(1, 1), (1, 1)],
            dimension_numbers=('NCHW', 'OIHW', 'NCHW'))
        return y + b.reshape(1, -1, 1, 1)

    def bn(y, g, be, m, v):
        sh = lambda a: a.reshape(1, -1, 1, 1)
        return (y - sh(m)) * jax.lax.rsqrt(sh(v) + BN_EPS) * sh(g) + sh(be)

    y = jax.nn.relu(bn(conv(x, params["w1"], params["b1"], 2),
                       params["g1"], params["be1"], params["m1"], params["v1"]))
    y = jax.nn.relu(bn(conv(y, params["w2"], params["b2"], 1),
                       params["g2"], params["be2"], params["m2"], params["v2"]))
    y = jax.nn.relu(bn(conv(y, params["w3"], params["b3"], 1),
                       params["g3"], params["be3"], params["m3"], params["v3"]))
    return y


def init_params(key, inplanes, planes, outplanes):
    ks = jax.random.split(key, 18)

    def bn_params(k0, k1, k2, k3, c):
        return (1.0 + 0.1 * jax.random.normal(k0, (c,), jnp.float32),
                0.1 * jax.random.normal(k1, (c,), jnp.float32),
                0.1 * jax.random.normal(k2, (c,), jnp.float32),
                jax.random.uniform(k3, (c,), jnp.float32, 0.5, 1.5))

    g1, be1, m1, v1 = bn_params(ks[2], ks[3], ks[4], ks[5], planes)
    g2, be2, m2, v2 = bn_params(ks[8], ks[9], ks[10], ks[11], planes)
    g3, be3, m3, v3 = bn_params(ks[14], ks[15], ks[16], ks[17], outplanes)
    return {
        "w1": 0.1 * jax.random.normal(ks[0], (planes, inplanes, 3, 3), jnp.float32),
        "b1": 0.1 * jax.random.normal(ks[1], (planes,), jnp.float32),
        "g1": g1, "be1": be1, "m1": m1, "v1": v1,
        "w2": 0.1 * jax.random.normal(ks[6], (planes, planes, 3, 3), jnp.float32),
        "b2": 0.1 * jax.random.normal(ks[7], (planes,), jnp.float32),
        "g2": g2, "be2": be2, "m2": m2, "v2": v2,
        "w3": 0.1 * jax.random.normal(ks[12], (outplanes, planes, 3, 3), jnp.float32),
        "b3": 0.1 * jax.random.normal(ks[13], (outplanes,), jnp.float32),
        "g3": g3, "be3": be3, "m3": m3, "v3": v3,
    }


if __name__ == "__main__":
    key = jax.random.PRNGKey(0)
    kx, kp = jax.random.split(key)

    # Small demo shapes; H=W=32 gives 2 row tiles (exercises the halo path)
    # and a lane-dense (tr*wo = 128) output block.
    N, CIN, H, W = 2, 4, 32, 32
    PLANES, COUT = 32, 64                      # typical ICNet stem widths
    x = jax.random.normal(kx, (N, CIN, H, W), jnp.float32)
    params = init_params(kp, CIN, PLANES, COUT)

    out = init_s2_forward(x, params)
    jax.block_until_ready(out)

    ref = init_s2_reference(x, params)
    assert out.shape == (N, COUT, H // 2, W // 2)
    # bf16 MXU operands with f32 accumulation -> small relative error vs f32 ref
    assert jnp.allclose(out, ref, atol=3e-2, rtol=3e-2), "init_s2 output mismatch"

    print("KERNEL_OK")
</pallas_src>

<mosaic_0001>
module attributes {stable_mosaic.version = 11 : i64} {
  func.func @_init_s2_kernel(%arg0: i32, %arg1: i32, %arg2: memref<1x12x16x36xbf16, #tpu.memory_space<vmem>>, %arg3: memref<36x32xbf16, #tpu.memory_space<vmem>>, %arg4: memref<1x32xf32, #tpu.memory_space<vmem>>, %arg5: memref<288x32xbf16, #tpu.memory_space<vmem>>, %arg6: memref<1x32xf32, #tpu.memory_space<vmem>>, %arg7: memref<288x64xbf16, #tpu.memory_space<vmem>>, %arg8: memref<1x64xf32, #tpu.memory_space<vmem>>, %arg9: memref<1x64x128xf32, #tpu.memory_space<vmem>>, %arg10: memref<12x18x32xbf16, #tpu.memory_space<vmem>>) attributes {dimension_semantics = [#tpu.dimension_semantics<parallel>, #tpu.dimension_semantics<parallel>], iteration_bounds = array<i64: 2, 2>, scalar_prefetch = 0 : i64, scratch_operands = 1 : i64, tpu.core_type = #tpu.core_type<tc>, window_params = [{transform_indices = @transform_0, window_bounds = array<i64: 1, 12, 16, 36>}, {pipeline_mode = #tpu.pipeline_mode<synchronous>, transform_indices = @transform_1, window_bounds = array<i64: 36, 32>}, {pipeline_mode = #tpu.pipeline_mode<synchronous>, transform_indices = @transform_2, window_bounds = array<i64: 1, 32>}, {pipeline_mode = #tpu.pipeline_mode<synchronous>, transform_indices = @transform_3, window_bounds = array<i64: 288, 32>}, {pipeline_mode = #tpu.pipeline_mode<synchronous>, transform_indices = @transform_4, window_bounds = array<i64: 1, 32>}, {pipeline_mode = #tpu.pipeline_mode<synchronous>, transform_indices = @transform_5, window_bounds = array<i64: 288, 64>}, {pipeline_mode = #tpu.pipeline_mode<synchronous>, transform_indices = @transform_6, window_bounds = array<i64: 1, 64>}, {transform_indices = @transform_7, window_bounds = array<i64: 1, 64, 128>}]} {
    %cst = arith.constant 0.000000e+00 : bf16
    %0 = vector.broadcast %cst : bf16 to vector<12x1x32xbf16>
    %c0 = arith.constant 0 : index
    %c0_0 = arith.constant 0 : index
    %c0_1 = arith.constant 0 : index
    %1 = vector.load %arg10[%c0, %c0_0, %c0_1] : memref<12x18x32xbf16, #tpu.memory_space<vmem>>, vector<12x1x32xbf16>
    tpu.vector_store %arg10[%c0, %c0_0, %c0_1], %0 {strides = array<i32>} : memref<12x18x32xbf16, #tpu.memory_space<vmem>>, vector<12x1x32xbf16>,
    %c0_2 = arith.constant 0 : index
    %c17 = arith.constant 17 : index
    %c0_3 = arith.constant 0 : index
    %2 = vector.load %arg10[%c0_2, %c17, %c0_3] : memref<12x18x32xbf16, #tpu.memory_space<vmem>>, vector<12x1x32xbf16>
    tpu.vector_store %arg10[%c0_2, %c17, %c0_3], %0 {strides = array<i32>} : memref<12x18x32xbf16, #tpu.memory_space<vmem>>, vector<12x1x32xbf16>,
    %c0_4 = arith.constant 0 : index
    %c0_5 = arith.constant 0 : index
    %c0_6 = arith.constant 0 : index
    %c0_7 = arith.constant 0 : index
    %3 = vector.load %arg2[%c0_4, %c0_5, %c0_6, %c0_7] : memref<1x12x16x36xbf16, #tpu.memory_space<vmem>>, vector<1x12x16x36xbf16>
    %4 = vector.shape_cast %3 : vector<1x12x16x36xbf16> to vector<12x16x36xbf16>
    %5 = vector.shape_cast %4 : vector<12x16x36xbf16> to vector<192x36xbf16>
    %c0_8 = arith.constant 0 : index
    %c0_9 = arith.constant 0 : index
    %6 = vector.load %arg3[%c0_8, %c0_9] : memref<36x32xbf16, #tpu.memory_space<vmem>>, vector<36x32xbf16>
    %cst_10 = arith.constant dense<0.000000e+00> : vector<192x32xf32>
    %7 = tpu.matmul %5, %6, %cst_10 {dimension_numbers = #tpu.dot_dimension_numbers<[1], [0], [0], [1], [0, 0, 1, 1], [], []>} : vector<192x36xbf16>, vector<36x32xbf16>, vector<192x32xf32> -> vector<192x32xf32>
    %c0_11 = arith.constant 0 : index
    %c0_12 = arith.constant 0 : index
    %8 = vector.load %arg4[%c0_11, %c0_12] : memref<1x32xf32, #tpu.memory_space<vmem>>, vector<1x32xf32>
    %9 = vector.broadcast %8 : vector<1x32xf32> to vector<192x32xf32>
    %10 = arith.addf %7, %9 : vector<192x32xf32>
    %cst_13 = arith.constant 0.000000e+00 : f32
    %11 = vector.broadcast %cst_13 : f32 to vector<192x32xf32>
    %12 = arith.maximumf %10, %11 : vector<192x32xf32>
    %13 = vector.shape_cast %12 : vector<192x32xf32> to vector<12x16x32xf32>
    %14 = arith.truncf %13 : vector<12x16x32xf32> to vector<12x16x32xbf16>
    %c0_14 = arith.constant 0 : index
    %c1 = arith.constant 1 : index
    %c0_15 = arith.constant 0 : index
    %15 = vector.load %arg10[%c0_14, %c1, %c0_15] : memref<12x18x32xbf16, #tpu.memory_space<vmem>>, vector<12x16x32xbf16>
    tpu.vector_store %arg10[%c0_14, %c1, %c0_15], %14 {strides = array<i32>} : memref<12x18x32xbf16, #tpu.memory_space<vmem>>, vector<12x16x32xbf16>,
    %cst_16 = arith.constant 0.000000e+00 : bf16
    %16 = vector.broadcast %cst_16 : bf16 to vector<2x16x32xbf16>
    %c0_i32 = arith.constant 0 : i32
    %17 = arith.cmpi eq, %arg1, %c0_i32 : i32
    %18 = arith.extui %17 : i1 to i32
    %c0_i32_17 = arith.constant 0 : i32
    %19 = arith.cmpi ne, %18, %c0_i32_17 : i32
    scf.if %19 {
      %c0_95 = arith.constant 0 : index
      %c1_96 = arith.constant 1 : index
      %c0_97 = arith.constant 0 : index
      %73 = vector.load %arg10[%c0_95, %c1_96, %c0_97] : memref<12x18x32xbf16, #tpu.memory_space<vmem>>, vector<2x16x32xbf16>
      tpu.vector_store %arg10[%c0_95, %c1_96, %c0_97], %16 {strides = array<i32>} : memref<12x18x32xbf16, #tpu.memory_space<vmem>>, vector<2x16x32xbf16>,
    } else {
    }
    %c1_i32 = arith.constant 1 : i32
    %20 = arith.cmpi eq, %arg1, %c1_i32 : i32
    %21 = arith.extui %20 : i1 to i32
    %c0_i32_18 = arith.constant 0 : i32
    %22 = arith.cmpi ne, %21, %c0_i32_18 : i32
    scf.if %22 {
      %c10 = arith.constant 10 : index
      %c1_95 = arith.constant 1 : index
      %c0_96 = arith.constant 0 : index
      %73 = vector.load %arg10[%c10, %c1_95, %c0_96] : memref<12x18x32xbf16, #tpu.memory_space<vmem>>, vector<2x16x32xbf16>
      tpu.vector_store %arg10[%c10, %c1_95, %c0_96], %16 {strides = array<i32>} : memref<12x18x32xbf16, #tpu.memory_space<vmem>>, vector<2x16x32xbf16>,
    } else {
    }
    %c0_19 = arith.constant 0 : index
    %c0_20 = arith.constant 0 : index
    %c0_21 = arith.constant 0 : index
    %23 = vector.load %arg10[%c0_19, %c0_20, %c0_21] : memref<12x18x32xbf16, #tpu.memory_space<vmem>>, vector<10x16x32xbf16>
    %c0_22 = arith.constant 0 : index
    %c1_23 = arith.constant 1 : index
    %c0_24 = arith.constant 0 : index
    %24 = vector.load %arg10[%c0_22, %c1_23, %c0_24] : memref<12x18x32xbf16, #tpu.memory_space<vmem>>, vector<10x16x32xbf16>
    %c0_25 = arith.constant 0 : index
    %c2 = arith.constant 2 : index
    %c0_26 = arith.constant 0 : index
    %25 = vector.load %arg10[%c0_25, %c2, %c0_26] : memref<12x18x32xbf16, #tpu.memory_space<vmem>>, vector<10x16x32xbf16>
    %c1_27 = arith.constant 1 : index
    %c0_28 = arith.constant 0 : index
    %c0_29 = arith.constant 0 : index
    %26 = vector.load %arg10[%c1_27, %c0_28, %c0_29] : memref<12x18x32xbf16, #tpu.memory_space<vmem>>, vector<10x16x32xbf16>
    %c1_30 = arith.constant 1 : index
    %c1_31 = arith.constant 1 : index
    %c0_32 = arith.constant 0 : index
    %27 = vector.load %arg10[%c1_30, %c1_31, %c0_32] : memref<12x18x32xbf16, #tpu.memory_space<vmem>>, vector<10x16x32xbf16>
    %c1_33 = arith.constant 1 : index
    %c2_34 = arith.constant 2 : index
    %c0_35 = arith.constant 0 : index
    %28 = vector.load %arg10[%c1_33, %c2_34, %c0_35] : memref<12x18x32xbf16, #tpu.memory_space<vmem>>, vector<10x16x32xbf16>
    %c2_36 = arith.constant 2 : index
    %c0_37 = arith.constant 0 : index
    %c0_38 = arith.constant 0 : index
    %29 = vector.load %arg10[%c2_36, %c0_37, %c0_38] : memref<12x18x32xbf16, #tpu.memory_space<vmem>>, vector<10x16x32xbf16>
    %c2_39 = arith.constant 2 : index
    %c1_40 = arith.constant 1 : index
    %c0_41 = arith.constant 0 : index
    %30 = vector.load %arg10[%c2_39, %c1_40, %c0_41] : memref<12x18x32xbf16, #tpu.memory_space<vmem>>, vector<10x16x32xbf16>
    %c2_42 = arith.constant 2 : index
    %c2_43 = arith.constant 2 : index
    %c0_44 = arith.constant 0 : index
    %31 = vector.load %arg10[%c2_42, %c2_43, %c0_44] : memref<12x18x32xbf16, #tpu.memory_space<vmem>>, vector<10x16x32xbf16>
    %32 = tpu.concatenate %23, %24, %25, %26, %27, %28, %29, %30, %31 in 2 : vector<10x16x32xbf16>, vector<10x16x32xbf16>, vector<10x16x32xbf16>, vector<10x16x32xbf16>, vector<10x16x32xbf16>, vector<10x16x32xbf16>, vector<10x16x32xbf16>, vector<10x16x32xbf16>, vector<10x16x32xbf16> -> vector<10x16x288xbf16>
    %33 = vector.shape_cast %32 : vector<10x16x288xbf16> to vector<160x288xbf16>
    %c0_45 = arith.constant 0 : index
    %c0_46 = arith.constant 0 : index
    %34 = vector.load %arg5[%c0_45, %c0_46] : memref<288x32xbf16, #tpu.memory_space<vmem>>, vector<288x32xbf16>
    %cst_47 = arith.constant dense<0.000000e+00> : vector<160x32xf32>
    %35 = tpu.matmul %33, %34, %cst_47 {dimension_numbers = #tpu.dot_dimension_numbers<[1], [0], [0], [1], [0, 0, 1, 1], [], []>} : vector<160x288xbf16>, vector<288x32xbf16>, vector<160x32xf32> -> vector<160x32xf32>
    %c0_48 = arith.constant 0 : index
    %c0_49 = arith.constant 0 : index
    %36 = vector.load %arg6[%c0_48, %c0_49] : memref<1x32xf32, #tpu.memory_space<vmem>>, vector<1x32xf32>
    %37 = vector.broadcast %36 : vector<1x32xf32> to vector<160x32xf32>
    %38 = arith.addf %35, %37 : vector<160x32xf32>
    %cst_50 = arith.constant 0.000000e+00 : f32
    %39 = vector.broadcast %cst_50 : f32 to vector<160x32xf32>
    %40 = arith.maximumf %38, %39 : vector<160x32xf32>
    %41 = vector.shape_cast %40 : vector<160x32xf32> to vector<10x16x32xf32>
    %42 = arith.truncf %41 : vector<10x16x32xf32> to vector<10x16x32xbf16>
    %c0_51 = arith.constant 0 : index
    %c1_52 = arith.constant 1 : index
    %c0_53 = arith.constant 0 : index
    %43 = vector.load %arg10[%c0_51, %c1_52, %c0_53] : memref<12x18x32xbf16, #tpu.memory_space<vmem>>, vector<10x16x32xbf16>
    tpu.vector_store %arg10[%c0_51, %c1_52, %c0_53], %42 {strides = array<i32>} : memref<12x18x32xbf16, #tpu.memory_space<vmem>>, vector<10x16x32xbf16>,
    %cst_54 = arith.constant 0.000000e+00 : bf16
    %44 = vector.broadcast %cst_54 : bf16 to vector<1x16x32xbf16>
    %c0_i32_55 = arith.constant 0 : i32
    %45 = arith.cmpi eq, %arg1, %c0_i32_55 : i32
    %46 = arith.extui %45 : i1 to i32
    %c0_i32_56 = arith.constant 0 : i32
    %47 = arith.cmpi ne, %46, %c0_i32_56 : i32
    scf.if %47 {
      %c0_95 = arith.constant 0 : index
      %c1_96 = arith.constant 1 : index
      %c0_97 = arith.constant 0 : index
      %73 = vector.load %arg10[%c0_95, %c1_96, %c0_97] : memref<12x18x32xbf16, #tpu.memory_space<vmem>>, vector<1x16x32xbf16>
      tpu.vector_store %arg10[%c0_95, %c1_96, %c0_97], %44 {strides = array<i32>} : memref<12x18x32xbf16, #tpu.memory_space<vmem>>, vector<1x16x32xbf16>,
    } else {
    }
    %c1_i32_57 = arith.constant 1 : i32
    %48 = arith.cmpi eq, %arg1, %c1_i32_57 : i32
    %49 = arith.extui %48 : i1 to i32
    %c0_i32_58 = arith.constant 0 : i32
    %50 = arith.cmpi ne, %49, %c0_i32_58 : i32
    scf.if %50 {
      %c9 = arith.constant 9 : index
      %c1_95 = arith.constant 1 : index
      %c0_96 = arith.constant 0 : index
      %73 = vector.load %arg10[%c9, %c1_95, %c0_96] : memref<12x18x32xbf16, #tpu.memory_space<vmem>>, vector<1x16x32xbf16>
      tpu.vector_store %arg10[%c9, %c1_95, %c0_96], %44 {strides = array<i32>} : memref<12x18x32xbf16, #tpu.memory_space<vmem>>, vector<1x16x32xbf16>,
    } else {
    }
    %c0_59 = arith.constant 0 : index
    %c0_60 = arith.constant 0 : index
    %c0_61 = arith.constant 0 : index
    %51 = vector.load %arg10[%c0_59, %c0_60, %c0_61] : memref<12x18x32xbf16, #tpu.memory_space<vmem>>, vector<8x16x32xbf16>
    %c0_62 = arith.constant 0 : index
    %c1_63 = arith.constant 1 : index
    %c0_64 = arith.constant 0 : index
    %52 = vector.load %arg10[%c0_62, %c1_63, %c0_64] : memref<12x18x32xbf16, #tpu.memory_space<vmem>>, vector<8x16x32xbf16>
    %c0_65 = arith.constant 0 : index
    %c2_66 = arith.constant 2 : index
    %c0_67 = arith.constant 0 : index
    %53 = vector.load %arg10[%c0_65, %c2_66, %c0_67] : memref<12x18x32xbf16, #tpu.memory_space<vmem>>, vector<8x16x32xbf16>
    %c1_68 = arith.constant 1 : index
    %c0_69 = arith.constant 0 : index
    %c0_70 = arith.constant 0 : index
    %54 = vector.load %arg10[%c1_68, %c0_69, %c0_70] : memref<12x18x32xbf16, #tpu.memory_space<vmem>>, vector<8x16x32xbf16>
    %c1_71 = arith.constant 1 : index
    %c1_72 = arith.constant 1 : index
    %c0_73 = arith.constant 0 : index
    %55 = vector.load %arg10[%c1_71, %c1_72, %c0_73] : memref<12x18x32xbf16, #tpu.memory_space<vmem>>, vector<8x16x32xbf16>
    %c1_74 = arith.constant 1 : index
    %c2_75 = arith.constant 2 : index
    %c0_76 = arith.constant 0 : index
    %56 = vector.load %arg10[%c1_74, %c2_75, %c0_76] : memref<12x18x32xbf16, #tpu.memory_space<vmem>>, vector<8x16x32xbf16>
    %c2_77 = arith.constant 2 : index
    %c0_78 = arith.constant 0 : index
    %c0_79 = arith.constant 0 : index
    %57 = vector.load %arg10[%c2_77, %c0_78, %c0_79] : memref<12x18x32xbf16, #tpu.memory_space<vmem>>, vector<8x16x32xbf16>
    %c2_80 = arith.constant 2 : index
    %c1_81 = arith.constant 1 : index
    %c0_82 = arith.constant 0 : index
    %58 = vector.load %arg10[%c2_80, %c1_81, %c0_82] : memref<12x18x32xbf16, #tpu.memory_space<vmem>>, vector<8x16x32xbf16>
    %c2_83 = arith.constant 2 : index
    %c2_84 = arith.constant 2 : index
    %c0_85 = arith.constant 0 : index
    %59 = vector.load %arg10[%c2_83, %c2_84, %c0_85] : memref<12x18x32xbf16, #tpu.memory_space<vmem>>, vector<8x16x32xbf16>
    %60 = tpu.concatenate %51, %52, %53, %54, %55, %56, %57, %58, %59 in 2 : vector<8x16x32xbf16>, vector<8x16x32xbf16>, vector<8x16x32xbf16>, vector<8x16x32xbf16>, vector<8x16x32xbf16>, vector<8x16x32xbf16>, vector<8x16x32xbf16>, vector<8x16x32xbf16>, vector<8x16x32xbf16> -> vector<8x16x288xbf16>
    %61 = vector.shape_cast %60 : vector<8x16x288xbf16> to vector<128x288xbf16>
    %c0_86 = arith.constant 0 : index
    %c0_87 = arith.constant 0 : index
    %62 = vector.load %arg7[%c0_86, %c0_87] : memref<288x64xbf16, #tpu.memory_space<vmem>>, vector<288x64xbf16>
    %cst_88 = arith.constant dense<0.000000e+00> : vector<128x64xf32>
    %63 = tpu.matmul %61, %62, %cst_88 {dimension_numbers = #tpu.dot_dimension_numbers<[1], [0], [0], [1], [0, 0, 1, 1], [], []>} : vector<128x288xbf16>, vector<288x64xbf16>, vector<128x64xf32> -> vector<128x64xf32>
    %c0_89 = arith.constant 0 : index
    %c0_90 = arith.constant 0 : index
    %64 = vector.load %arg8[%c0_89, %c0_90] : memref<1x64xf32, #tpu.memory_space<vmem>>, vector<1x64xf32>
    %65 = vector.broadcast %64 : vector<1x64xf32> to vector<128x64xf32>
    %66 = arith.addf %63, %65 : vector<128x64xf32>
    %cst_91 = arith.constant 0.000000e+00 : f32
    %67 = vector.broadcast %cst_91 : f32 to vector<128x64xf32>
    %68 = arith.maximumf %66, %67 : vector<128x64xf32>
    %69 = tpu.transpose %68, [1, 0] : vector<128x64xf32> -> vector<64x128xf32>
    %c0_92 = arith.constant 0 : index
    %c0_93 = arith.constant 0 : index
    %c0_94 = arith.constant 0 : index
    %70 = vector.load %arg9[%c0_92, %c0_93, %c0_94] : memref<1x64x128xf32, #tpu.memory_space<vmem>>, vector<1x64x128xf32>
    %71 = vector.shape_cast %70 : vector<1x64x128xf32> to vector<64x128xf32>
    %72 = vector.shape_cast %69 : vector<64x128xf32> to vector<1x64x128xf32>
    tpu.vector_store %arg9[%c0_92, %c0_93, %c0_94], %72 {strides = array<i32>} : memref<1x64x128xf32, #tpu.memory_space<vmem>>, vector<1x64x128xf32>,
    return
  }
  func.func @transform_0(%arg0: i32, %arg1: i32) -> (i32, i32, i32, i32) {
    %c0_i32 = arith.constant 0 : i32
    %c0_i32_0 = arith.constant 0 : i32
    %c0_i32_1 = arith.constant 0 : i32
    return %arg0, %arg1, %c0_i32, %c0_i32_0 : i32, i32, i32, i32
  }
  func.func @transform_1(%arg0: i32, %arg1: i32) -> (i32, i32) {
    %c0_i32 = arith.constant 0 : i32
    %c0_i32_0 = arith.constant 0 : i32
    %c0_i32_1 = arith.constant 0 : i32
    return %c0_i32, %c0_i32_0 : i32, i32
  }
  func.func @transform_2(%arg0: i32, %arg1: i32) -> (i32, i32) {
    %c0_i32 = arith.constant 0 : i32
    %c0_i32_0 = arith.constant 0 : i32
    %c0_i32_1 = arith.constant 0 : i32
    return %c0_i32, %c0_i32_0 : i32, i32
  }
  func.func @transform_3(%arg0: i32, %arg1: i32) -> (i32, i32) {
    %c0_i32 = arith.constant 0 : i32
    %c0_i32_0 = arith.constant 0 : i32
    %c0_i32_1 = arith.constant 0 : i32
    return %c0_i32, %c0_i32_0 : i32, i32
  }
  func.func @transform_4(%arg0: i32, %arg1: i32) -> (i32, i32) {
    %c0_i32 = arith.constant 0 : i32
    %c0_i32_0 = arith.constant 0 : i32
    %c0_i32_1 = arith.constant 0 : i32
    return %c0_i32, %c0_i32_0 : i32, i32
  }
  func.func @transform_5(%arg0: i32, %arg1: i32) -> (i32, i32) {
    %c0_i32 = arith.constant 0 : i32
    %c0_i32_0 = arith.constant 0 : i32
    %c0_i32_1 = arith.constant 0 : i32
    return %c0_i32, %c0_i32_0 : i32, i32
  }
  func.func @transform_6(%arg0: i32, %arg1: i32) -> (i32, i32) {
    %c0_i32 = arith.constant 0 : i32
    %c0_i32_0 = arith.constant 0 : i32
    %c0_i32_1 = arith.constant 0 : i32
    return %c0_i32, %c0_i32_0 : i32, i32
  }
  func.func @transform_7(%arg0: i32, %arg1: i32) -> (i32, i32, i32) {
    %c0_i32 = arith.constant 0 : i32
    %c0_i32_0 = arith.constant 0 : i32
    return %arg0, %c0_i32, %arg1 : i32, i32, i32
  }
}

</mosaic_0001>

<llo_original>
// kernel: tpu_custom_call.1
$region0: #{tpu_custom_call.1}
  #allocation0 [shape = 'u32[]', space=smem, size = 0x4, offset = 0x4, fixed_abs, tag = 'smem constant byte address 0x4 - core index']
  #allocation1 [shape = 'u32[144,128]{1,0:T(1,128)}', space=vmem, size = 0x12000, scoped, tag = 'internal scratch']
  #allocation2 [shape = 'bf16[12,18,32]{2,1,0:T(8,128)(2,1)}', space=vmem, size = 0x12000, scoped, tag = 'scratch operand']
  %s0 = inlined_call_operand.hbm [shape: bf16[2,24,16,36], index: 0, kind: input, shape index: {}]
  %s1 = inlined_call_operand.hbm [shape: bf16[36,32], index: 1, kind: input, shape index: {}]
  %s2 = inlined_call_operand.hbm [shape: f32[1,32], index: 2, kind: input, shape index: {}]
  %s3 = inlined_call_operand.hbm [shape: bf16[288,32], index: 3, kind: input, shape index: {}]
  %s4 = inlined_call_operand.hbm [shape: f32[1,32], index: 4, kind: input, shape index: {}]
  %s5 = inlined_call_operand.hbm [shape: bf16[288,64], index: 5, kind: input, shape index: {}]
  %s6 = inlined_call_operand.hbm [shape: f32[1,64], index: 6, kind: input, shape index: {}]
  %s7 = inlined_call_operand.hbm [shape: f32[2,64,256], index: 7, kind: output, shape index: {}]
  %s8 = sld [smem:[#allocation0]]
  $region105: #{tpu_custom_call.1} parent=0
    _
  %s10 = ssub.s32 1, %s8
  %s11 = scalar_select 0, %s10, %s8
  $region1: #{tpu_custom_call.1} parent=0
    #allocation3 [shape = 'u8[98304]{0}', space=vmem, size = 0x18000, scoped, tag = 'input window, operand 0']
    #allocation4 [shape = 's32[2]{0}', space=sflag, size = 0x8, scoped, tag = 'scoped memory for tpu_custom_call.1']
    #allocation5 [shape = 's32[2]{0}', space=sflag, size = 0x8, scoped, tag = 'scoped memory for tpu_custom_call.1']
    #allocation6 [shape = 'u8[10240]{0}', space=vmem, size = 0x2800, scoped, tag = 'input window, operand 1, single buffered']
    #allocation7 [shape = 's32[1]{0}', space=sflag, size = 0x4, scoped, tag = 'scoped memory for tpu_custom_call.1']
    #allocation8 [shape = 'u8[512]{0}', space=vmem, size = 0x400, scoped, tag = 'input window, operand 2, single buffered']
    #allocation9 [shape = 'u8[73728]{0}', space=vmem, size = 0x12000, scoped, tag = 'input window, operand 3, single buffered']
    #allocation10 [shape = 's32[1]{0}', space=sflag, size = 0x4, scoped, tag = 'scoped memory for tpu_custom_call.1']
    #allocation11 [shape = 'u8[512]{0}', space=vmem, size = 0x400, scoped, tag = 'input window, operand 4, single buffered']
    #allocation12 [shape = 'u8[73728]{0}', space=vmem, size = 0x12000, scoped, tag = 'input window, operand 5, single buffered']
    #allocation13 [shape = 's32[1]{0}', space=sflag, size = 0x4, scoped, tag = 'scoped memory for tpu_custom_call.1']
    #allocation14 [shape = 'u8[512]{0}', space=vmem, size = 0x400, scoped, tag = 'input window, operand 6, single buffered']
    #allocation15 [shape = 'u8[65536]{0}', space=vmem, size = 0x10000, scoped, tag = 'output window, operand 0']
    %12 = vsyncpa [#allocation4], 0
    %s13 = scalar_lea.sflag [#allocation4], 1
    %14 = vsyncpa %s13, 0
    %15 = vsyncpa [#allocation7], 0
    %16 = vsyncpa [#allocation10], 0
    %17 = vsyncpa [#allocation13], 0
    %18 = vsyncpa [#allocation5], 0
    %s19 = scalar_lea.sflag [#allocation5], 1
    %20 = vsyncpa %s19, 0
    loop: start=0, step=1, limit=6
    $region2: #{tpu_custom_call.1} parent=1 // loop_pre_header
      _
    $region3: #{tpu_custom_call.1} parent=1 // loop_header
      %s22 = sphi 0, %s26
      %p23 = scmp.ge.s32.totalorder %s22, 6
      %s29 = sphi 0, %s41
      %s30 = sphi 0, %s37
      %s31 = sphi 0, %s29
      %s32 = sphi 0, %s30
      %s33 = sphi 0, %s31
      %s34 = sphi 0, %s32
      %s46 = sphi 0, %s48
      %s49 = sphi 0, %s46
      %s50 = sphi 0, %s49
      %s66 = sphi 0, %s50
      %s70 = sphi 0, %s70
      %s72 = sphi 0, %s70
      %s73 = sphi 0, %s72
      %s87 = sphi 0, %s73
      %s91 = sphi 0, %s91
      %s93 = sphi 0, %s91
      %s94 = sphi 0, %s93
      %s108 = sphi 0, %s94
      %s112 = sphi 0, %s112
      %s114 = sphi 0, %s112
      %s115 = sphi 0, %s114
      %s129 = sphi 0, %s115
      %s133 = sphi 0, %s133
      %s135 = sphi 0, %s133
      %s136 = sphi 0, %s135
      %s150 = sphi 0, %s136
      %s154 = sphi 0, %s154
      %s156 = sphi 0, %s154
      %s157 = sphi 0, %s156
      %s171 = sphi 0, %s157
      %s175 = sphi 0, %s175
      %s177 = sphi 0, %s175
      %s178 = sphi 0, %s177
      %s192 = sphi 0, %s178
      %s200 = sphi 0, %s202
      %s203 = sphi 0, %s200
      %s204 = sphi 0, %s203
      %s220 = sphi 0, %s204
    $region4: #{tpu_custom_call.1} parent=1 // loop_header_branch
      %25 = sbr.rel (%p23) target = $region8
    $region5: #{tpu_custom_call.1} parent=1 // loop_body
      %s27 = ssub.s32 %s22, 1
      %s28 = ssub.s32 %s22, 2
      %s35 = sadd.s32 1, %s30
      %p36 = scmp.ge.s32.totalorder %s35, 2
      %s37 = scalar_select %p36, 0, %s35
      %s38 = sadd.s32 1, %s29
      %s39 = scalar_select %p36, %s38, %s29
      %p40 = scmp.ge.s32.totalorder %s39, 2
      %s41 = scalar_select %p40, 0, %s39
      %s42 = ssub.s32 %s29, %s41
      %s43 = ssub.s32 %s30, %s37
      %s44 = sor.u32 %s42, %s43
      %p45 = scmp.eq.s32.totalorder %s44, 0
      %s47 = sadd.s32 %s46, 1
      %s48 = scalar_select %p45, %s46, %s47
      %p51 = pneg %p45
      %p52 = scmp.eq.s32.totalorder %s22, 3
      %p53 = por %p51, %p52
      %p54 = scmp.ne.s32.totalorder %s46, %s49
      %p55 = scmp.eq.s32.totalorder %s22, 0
      %p56 = por %p54, %p55
      %p57 = scmp.ne.s32.totalorder %s46, %s49
      %p58 = scmp.eq.s32.totalorder %s27, 3
      %p59 = por %p57, %p58
      %p60 = scmp.ne.s32.totalorder %s49, %s50
      %p61 = scmp.eq.s32.totalorder %s27, 0
      %p62 = por %p60, %p61
      %p63 = scmp.ne.s32.totalorder %s49, %s50
      %p64 = scmp.eq.s32.totalorder %s28, 3
      %p65 = por %p63, %p64
      %p67 = scmp.ne.s32.totalorder %s50, %s66
      %p68 = scmp.eq.s32.totalorder %s28, 0
      %p69 = por %p67, %p68
      %s71 = sadd.s32 %s70, 1
      %p74 = scmp.eq.s32.totalorder %s22, 3
      %p75 = scmp.ne.s32.totalorder %s70, %s72
      %p76 = scmp.eq.s32.totalorder %s22, 0
      %p77 = por %p75, %p76
      %p78 = scmp.ne.s32.totalorder %s70, %s72
      %p79 = scmp.eq.s32.totalorder %s27, 3
      %p80 = por %p78, %p79
      %p81 = scmp.ne.s32.totalorder %s72, %s73
      %p82 = scmp.eq.s32.totalorder %s27, 0
      %p83 = por %p81, %p82
      %p84 = scmp.ne.s32.totalorder %s72, %s73
      %p85 = scmp.eq.s32.totalorder %s28, 3
      %p86 = por %p84, %p85
      %p88 = scmp.ne.s32.totalorder %s73, %s87
      %p89 = scmp.eq.s32.totalorder %s28, 0
      %p90 = por %p88, %p89
      %s92 = sadd.s32 %s91, 1
      %p95 = scmp.eq.s32.totalorder %s22, 3
      %p96 = scmp.ne.s32.totalorder %s91, %s93
      %p97 = scmp.eq.s32.totalorder %s22, 0
      %p98 = por %p96, %p97
      %p99 = scmp.ne.s32.totalorder %s91, %s93
      %p100 = scmp.eq.s32.totalorder %s27, 3
      %p101 = por %p99, %p100
      %p102 = scmp.ne.s32.totalorder %s93, %s94
      %p103 = scmp.eq.s32.totalorder %s27, 0
      %p104 = por %p102, %p103
      %p105 = scmp.ne.s32.totalorder %s93, %s94
      %p106 = scmp.eq.s32.totalorder %s28, 3
      %p107 = por %p105, %p106
      %p109 = scmp.ne.s32.totalorder %s94, %s108
      %p110 = scmp.eq.s32.totalorder %s28, 0
      %p111 = por %p109, %p110
      %s113 = sadd.s32 %s112, 1
      %p116 = scmp.eq.s32.totalorder %s22, 3
      %p117 = scmp.ne.s32.totalorder %s112, %s114
      %p118 = scmp.eq.s32.totalorder %s22, 0
      %p119 = por %p117, %p118
      %p120 = scmp.ne.s32.totalorder %s112, %s114
      %p121 = scmp.eq.s32.totalorder %s27, 3
      %p122 = por %p120, %p121
      %p123 = scmp.ne.s32.totalorder %s114, %s115
      %p124 = scmp.eq.s32.totalorder %s27, 0
      %p125 = por %p123, %p124
      %p126 = scmp.ne.s32.totalorder %s114, %s115
      %p127 = scmp.eq.s32.totalorder %s28, 3
      %p128 = por %p126, %p127
      %p130 = scmp.ne.s32.totalorder %s115, %s129
      %p131 = scmp.eq.s32.totalorder %s28, 0
      %p132 = por %p130, %p131
      %s134 = sadd.s32 %s133, 1
      %p137 = scmp.eq.s32.totalorder %s22, 3
      %p138 = scmp.ne.s32.totalorder %s133, %s135
      %p139 = scmp.eq.s32.totalorder %s22, 0
      %p140 = por %p138, %p139
      %p141 = scmp.ne.s32.totalorder %s133, %s135
      %p142 = scmp.eq.s32.totalorder %s27, 3
      %p143 = por %p141, %p142
      %p144 = scmp.ne.s32.totalorder %s135, %s136
      %p145 = scmp.eq.s32.totalorder %s27, 0
      %p146 = por %p144, %p145
      %p147 = scmp.ne.s32.totalorder %s135, %s136
      %p148 = scmp.eq.s32.totalorder %s28, 3
      %p149 = por %p147, %p148
      %p151 = scmp.ne.s32.totalorder %s136, %s150
      %p152 = scmp.eq.s32.totalorder %s28, 0
      %p153 = por %p151, %p152
      %s155 = sadd.s32 %s154, 1
      %p158 = scmp.eq.s32.totalorder %s22, 3
      %p159 = scmp.ne.s32.totalorder %s154, %s156
      %p160 = scmp.eq.s32.totalorder %s22, 0
      %p161 = por %p159, %p160
      %p162 = scmp.ne.s32.totalorder %s154, %s156
      %p163 = scmp.eq.s32.totalorder %s27, 3
      %p164 = por %p162, %p163
      %p165 = scmp.ne.s32.totalorder %s156, %s157
      %p166 = scmp.eq.s32.totalorder %s27, 0
      %p167 = por %p165, %p166
      %p168 = scmp.ne.s32.totalorder %s156, %s157
      %p169 = scmp.eq.s32.totalorder %s28, 3
      %p170 = por %p168, %p169
      %p172 = scmp.ne.s32.totalorder %s157, %s171
      %p173 = scmp.eq.s32.totalorder %s28, 0
      %p174 = por %p172, %p173
      %s176 = sadd.s32 %s175, 1
      %p179 = scmp.eq.s32.totalorder %s22, 3
      %p180 = scmp.ne.s32.totalorder %s175, %s177
      %p181 = scmp.eq.s32.totalorder %s22, 0
      %p182 = por %p180, %p181
      %p183 = scmp.ne.s32.totalorder %s175, %s177
      %p184 = scmp.eq.s32.totalorder %s27, 3
      %p185 = por %p183, %p184
      %p186 = scmp.ne.s32.totalorder %s177, %s178
      %p187 = scmp.eq.s32.totalorder %s27, 0
      %p188 = por %p186, %p187
      %p189 = scmp.ne.s32.totalorder %s177, %s178
      %p190 = scmp.eq.s32.totalorder %s28, 3
      %p191 = por %p189, %p190
      %p193 = scmp.ne.s32.totalorder %s178, %s192
      %p194 = scmp.eq.s32.totalorder %s28, 0
      %p195 = por %p193, %p194
      %s196 = ssub.s32 %s29, %s41
      %s197 = ssub.s32 %s30, %s37
      %s198 = sor.u32 %s196, %s197
      %p199 = scmp.eq.s32.totalorder %s198, 0
      %s201 = sadd.s32 %s200, 1
      %s202 = scalar_select %p199, %s200, %s201
      %p205 = pneg %p199
      %p206 = scmp.eq.s32.totalorder %s22, 3
      %p207 = por %p205, %p206
      %p208 = scmp.ne.s32.totalorder %s200, %s203
      %p209 = scmp.eq.s32.totalorder %s22, 0
      %p210 = por %p208, %p209
      %p211 = scmp.ne.s32.totalorder %s200, %s203
      %p212 = scmp.eq.s32.totalorder %s27, 3
      %p213 = por %p211, %p212
      %p214 = scmp.ne.s32.totalorder %s203, %s204
      %p215 = scmp.eq.s32.totalorder %s27, 0
      %p216 = por %p214, %p215
      %p217 = scmp.ne.s32.totalorder %s203, %s204
      %p218 = scmp.eq.s32.totalorder %s28, 3
      %p219 = por %p217, %p218
      %p221 = scmp.ne.s32.totalorder %s204, %s220
      %p222 = scmp.eq.s32.totalorder %s28, 0
      %p223 = por %p221, %p222
      %p224 = scmp.le.s32.totalorder 1, %s22
      %p225 = scmp.lt.s32.totalorder %s22, 5
      %p226 = pnand %p224, %p225
      %p227 = pneg %p226
      // Predicated region
      $region9: #{tpu_custom_call.1} parent=5 // pred_check
        _
      $region10: #{tpu_custom_call.1} parent=5 // pred_check_branch
        %229 = sbr.rel (%p226) target = $region12
      $region11: #{tpu_custom_call.1} parent=5 // pred_region
        %s230 = ssub.s32 %s22, 1
        // Predicated region
        $region13: #{tpu_custom_call.1} parent=11 // pred_check
          %p231 = pneg %p83
        $region14: #{tpu_custom_call.1} parent=11 // pred_check_branch
          %233 = sbr.rel (%p231) target = $region16
        $region15: #{tpu_custom_call.1} parent=11 // pred_region
          %s235 = ssub.s32 320, 320
          %236 = vsyncadd [#allocation7], %s235
          %s237 = sshll.u32 [#allocation6], 4
          %s238 = int_to_ptr.vmem [resolvable:$true] %s237
          %243 = dma.hbm_to_vmem [thread:$0]  %s1, 320, %s238, [#allocation7], 64, 64, 4
        $region16: #{tpu_custom_call.1} parent=11 // pred_fallthru
          _
        // Predicated region
        $region17: #{tpu_custom_call.1} parent=11 // pred_check
          %p244 = pneg %p104
        $region18: #{tpu_custom_call.1} parent=11 // pred_check_branch
          %246 = sbr.rel (%p244) target = $region20
        $region19: #{tpu_custom_call.1} parent=11 // pred_region
          %s248 = ssub.s32 16, 16
          %249 = vsyncadd [#allocation7], %s248
          %s251 = sshll.u32 [#allocation8], 4
          %s252 = int_to_ptr.vmem [resolvable:$true] %s251
          %254 = dma.hbm_to_vmem [thread:$0]  %s2, 16, %s252, [#allocation7]
        $region20: #{tpu_custom_call.1} parent=11 // pred_fallthru
          _
        // Predicated region
        $region21: #{tpu_custom_call.1} parent=11 // pred_check
          %p255 = pneg %p125
        $region22: #{tpu_custom_call.1} parent=11 // pred_check_branch
          %257 = sbr.rel (%p255) target = $region24
        $region23: #{tpu_custom_call.1} parent=11 // pred_region
          %s259 = ssub.s32 2304, 2304
          %260 = vsyncadd [#allocation10], %s259
          %s261 = sshll.u32 [#allocation9], 4
          %s262 = int_to_ptr.vmem [resolvable:$true] %s261
          %267 = dma.hbm_to_vmem [thread:$0]  %s3, 2304, %s262, [#allocation10], 64, 64, 4
        $region24: #{tpu_custom_call.1} parent=11 // pred_fallthru
          _
        // Predicated region
        $region25: #{tpu_custom_call.1} parent=11 // pred_check
          %p268 = pneg %p146
        $region26: #{tpu_custom_call.1} parent=11 // pred_check_branch
          %270 = sbr.rel (%p268) target = $region28
        $region27: #{tpu_custom_call.1} parent=11 // pred_region
          %s272 = ssub.s32 16, 16
          %273 = vsyncadd [#allocation10], %s272
          %s275 = sshll.u32 [#allocation11], 4
          %s276 = int_to_ptr.vmem [resolvable:$true] %s275
          %278 = dma.hbm_to_vmem [thread:$0]  %s4, 16, %s276, [#allocation10]
        $region28: #{tpu_custom_call.1} parent=11 // pred_fallthru
          _
        // Predicated region
        $region29: #{tpu_custom_call.1} parent=11 // pred_check
          %p279 = pneg %p167
        $region30: #{tpu_custom_call.1} parent=11 // pred_check_branch
          %281 = sbr.rel (%p279) target = $region32
        $region31: #{tpu_custom_call.1} parent=11 // pred_region
          %s283 = ssub.s32 2304, 2304
          %284 = vsyncadd [#allocation13], %s283
          %s285 = sshll.u32 [#allocation12], 4
          %s286 = int_to_ptr.vmem [resolvable:$true] %s285
          %291 = dma.hbm_to_vmem [thread:$0]  %s5, 2304, %s286, [#allocation13], 64, 64, 4
        $region32: #{tpu_custom_call.1} parent=11 // pred_fallthru
          _
        // Predicated region
        $region33: #{tpu_custom_call.1} parent=11 // pred_check
          %p292 = pneg %p188
        $region34: #{tpu_custom_call.1} parent=11 // pred_check_branch
          %294 = sbr.rel (%p292) target = $region36
        $region35: #{tpu_custom_call.1} parent=11 // pred_region
          %s296 = ssub.s32 16, 16
          %297 = vsyncadd [#allocation13], %s296
          %s299 = sshll.u32 [#allocation14], 4
          %s300 = int_to_ptr.vmem [resolvable:$true] %s299
          %302 = dma.hbm_to_vmem [thread:$0]  %s6, 16, %s300, [#allocation13]
        $region36: #{tpu_custom_call.1} parent=11 // pred_fallthru
          _
      $region12: #{tpu_custom_call.1} parent=5 // pred_fallthru
        _
      %p303 = scmp.lt.s32.totalorder %s22, 4
      // Predicated region
      $region37: #{tpu_custom_call.1} parent=5 // pred_check
        %p304 = pneg %p303
      $region38: #{tpu_custom_call.1} parent=5 // pred_check_branch
        %306 = sbr.rel (%p304) target = $region40
      $region39: #{tpu_custom_call.1} parent=5 // pred_region
        // Predicated region
        $region41: #{tpu_custom_call.1} parent=39 // pred_check
          %p307 = pneg %p56
        $region42: #{tpu_custom_call.1} parent=39 // pred_check_branch
          %309 = sbr.rel (%p307) target = $region44
        $region43: #{tpu_custom_call.1} parent=39 // pred_region
          %s310 = sand.u32 %s46, 1
          %s311 = scalar_lea.sflag [#allocation4], %s310
          %s312 = sand.u32 %s46, 1
          %s313 = smul.addr %s312, 96
          %s314 = scalar_lea.vmem [#allocation3], %s313
          %s315 = smul.u32 12, %s30
          %s317 = ssub.s32 1536, 1536
          %318 = vsyncadd %s311, %s317
          %s319 = smul.addr %s315, 2
          %s320 = smul.addr %s29, 48
          %s321 = sadd.s32 %s319, %s320
          %s322 = smul.addr %s321, 64
          %s323 = scalar_lea.hbm %s0, %s322
          %s324 = sshll.u32 %s314, 4
          %s325 = int_to_ptr.vmem [resolvable:$true] %s324
          %330 = dma.hbm_to_vmem [thread:$0]  %s323, 1536, %s325, %s311, 64, 64, 4
        $region44: #{tpu_custom_call.1} parent=39 // pred_fallthru
          _
      $region40: #{tpu_custom_call.1} parent=5 // pred_fallthru
        _
      %p331 = scmp.le.s32.totalorder 1, %s22
      %p332 = scmp.lt.s32.totalorder %s22, 5
      %p333 = pnand %p331, %p332
      %p334 = pneg %p333
      // Predicated region
      $region45: #{tpu_custom_call.1} parent=5 // pred_check
        _
      $region46: #{tpu_custom_call.1} parent=5 // pred_check_branch
        %336 = sbr.rel (%p333) target = $region48
      $region47: #{tpu_custom_call.1} parent=5 // pred_region
        %s337 = ssub.s32 %s22, 1
        %s338 = sand.u32 %s49, 1
        %s339 = scalar_lea.sflag [#allocation4], %s338
        %s340 = sand.u32 %s49, 1
        %s341 = smul.addr %s340, 96
        %s342 = scalar_lea.vmem [#allocation3], %s341
        // Predicated region
        $region49: #{tpu_custom_call.1} parent=47 // pred_check
          %p343 = pneg %p62
        $region50: #{tpu_custom_call.1} parent=47 // pred_check_branch
          %345 = sbr.rel (%p343) target = $region52
        $region51: #{tpu_custom_call.1} parent=47 // pred_region
          %346 = dma.done %s339, 1536
        $region52: #{tpu_custom_call.1} parent=47 // pred_fallthru
          _
        // Predicated region
        $region53: #{tpu_custom_call.1} parent=47 // pred_check
          %p347 = pneg %p83
        $region54: #{tpu_custom_call.1} parent=47 // pred_check_branch
          %349 = sbr.rel (%p347) target = $region56
        $region55: #{tpu_custom_call.1} parent=47 // pred_region
          %350 = dma.done [#allocation7], 320
        $region56: #{tpu_custom_call.1} parent=47 // pred_fallthru
          _
        // Predicated region
        $region57: #{tpu_custom_call.1} parent=47 // pred_check
          %p351 = pneg %p104
        $region58: #{tpu_custom_call.1} parent=47 // pred_check_branch
          %353 = sbr.rel (%p351) target = $region60
        $region59: #{tpu_custom_call.1} parent=47 // pred_region
          %354 = dma.done [#allocation7], 16
        $region60: #{tpu_custom_call.1} parent=47 // pred_fallthru
          _
        // Predicated region
        $region61: #{tpu_custom_call.1} parent=47 // pred_check
          %p355 = pneg %p125
        $region62: #{tpu_custom_call.1} parent=47 // pred_check_branch
          %357 = sbr.rel (%p355) target = $region64
        $region63: #{tpu_custom_call.1} parent=47 // pred_region
          %358 = dma.done [#allocation10], 2304
        $region64: #{tpu_custom_call.1} parent=47 // pred_fallthru
          _
        // Predicated region
        $region65: #{tpu_custom_call.1} parent=47 // pred_check
          %p359 = pneg %p146
        $region66: #{tpu_custom_call.1} parent=47 // pred_check_branch
          %361 = sbr.rel (%p359) target = $region68
        $region67: #{tpu_custom_call.1} parent=47 // pred_region
          %362 = dma.done [#allocation10], 16
        $region68: #{tpu_custom_call.1} parent=47 // pred_fallthru
          _
        // Predicated region
        $region69: #{tpu_custom_call.1} parent=47 // pred_check
          %p363 = pneg %p167
        $region70: #{tpu_custom_call.1} parent=47 // pred_check_branch
          %365 = sbr.rel (%p363) target = $region72
        $region71: #{tpu_custom_call.1} parent=47 // pred_region
          %366 = dma.done [#allocation13], 2304
        $region72: #{tpu_custom_call.1} parent=47 // pred_fallthru
          _
        // Predicated region
        $region73: #{tpu_custom_call.1} parent=47 // pred_check
          %p367 = pneg %p188
        $region74: #{tpu_custom_call.1} parent=47 // pred_check_branch
          %369 = sbr.rel (%p367) target = $region76
        $region75: #{tpu_custom_call.1} parent=47 // pred_region
          %370 = dma.done [#allocation13], 16
        $region76: #{tpu_custom_call.1} parent=47 // pred_fallthru
          _
        %s371 = sand.u32 %s49, 1
        %s372 = scalar_lea.sflag [#allocation4], %s371
        %s373 = sand.u32 %s49, 1
        %s374 = smul.addr %s373, 96
        %s375 = scalar_lea.vmem [#allocation3], %s374
        %p376 = pneg %p62
        %p377 = pneg %p59
        %p378 = pneg %p83
        %p379 = pneg %p80
        %p380 = pneg %p104
        %p381 = pneg %p101
        %p382 = pneg %p125
        %p383 = pneg %p122
        %p384 = pneg %p146
        %p385 = pneg %p143
        %p386 = pneg %p167
        %p387 = pneg %p164
        %p388 = pneg %p188
        %p389 = pneg %p185
        %p390 = pneg %p216
        %p391 = pneg %p213
        %s392 = sand.u32 %s203, 1
        %s393 = scalar_lea.sflag [#allocation5], %s392
        %s394 = sand.u32 %s203, 1
        %s395 = smul.addr %s394, 64
        %s396 = scalar_lea.vmem [#allocation15], %s395
        %s397 = smul.u32 12, %s32
        %vm399 = vcmask 253952
        %vm400 = vsmask.f32 256
        %vm401 = vmand %vm399, %vm400
        %v402 = vld [vmem:[#allocation2] sm:$0x1]
        %v403 = vsel %vm401, 0, %v402
        %404 = vst [vmem:[#allocation2] sm:$0x1] %v403
        %v405 = vld [vmem:[#allocation2 + $0xc] sm:$0x1]
        %v406 = vsel %vm401, 0, %v405
        %407 = vst [vmem:[#allocation2 + $0xc] sm:$0x1] %v406
        %v408 = vld [vmem:[#allocation2 + $0x18] sm:$0x1]
        %v409 = vsel %vm401, 0, %v408
        %410 = vst [vmem:[#allocation2 + $0x18] sm:$0x1] %v409
        %v411 = vld [vmem:[#allocation2 + $0x24] sm:$0x1]
        %v412 = vsel %vm401, 0, %v411
        %413 = vst [vmem:[#allocation2 + $0x24] sm:$0x1] %v412
        %v414 = vld [vmem:[#allocation2 + $0x30] sm:$0x1]
        %v415 = vsel %vm401, 0, %v414
        %416 = vst [vmem:[#allocation2 + $0x30] sm:$0x1] %v415
        %v417 = vld [vmem:[#allocation2 + $0x3c] sm:$0x1]
        %v418 = vsel %vm401, 0, %v417
        %419 = vst [vmem:[#allocation2 + $0x3c] sm:$0x1] %v418
        %v420 = vld [vmem:[#allocation2 + $0x48] sm:$0x1]
        %v421 = vsel %vm401, 0, %v420
        %422 = vst [vmem:[#allocation2 + $0x48] sm:$0x1] %v421
        %v423 = vld [vmem:[#allocation2 + $0x54] sm:$0x1]
        %v424 = vsel %vm401, 0, %v423
        %425 = vst [vmem:[#allocation2 + $0x54] sm:$0x1] %v424
        %v426 = vld [vmem:[#allocation2 + $0x60] sm:$0x1]
        %v427 = vsel %vm401, 0, %v426
        %428 = vst [vmem:[#allocation2 + $0x60] sm:$0x1] %v427
        %v429 = vld [vmem:[#allocation2 + $0x6c] sm:$0x1]
        %v430 = vsel %vm401, 0, %v429
        %431 = vst [vmem:[#allocation2 + $0x6c] sm:$0x1] %v430
        %v432 = vld [vmem:[#allocation2 + $0x78] sm:$0x1]
        %v433 = vsel %vm401, 0, %v432
        %434 = vst [vmem:[#allocation2 + $0x78] sm:$0x1] %v433
        %v435 = vld [vmem:[#allocation2 + $0x84] sm:$0x1]
        %v436 = vsel %vm401, 0, %v435
        %437 = vst [vmem:[#allocation2 + $0x84] sm:$0x1] %v436
        %vm438 = vsmask.f32 7938
        %vm439 = vmand %vm399, %vm438
        %v440 = vld [vmem:[#allocation2 + $0x8] sm:$0x1]
        %v441 = vsel %vm439, 0, %v440
        %442 = vst [vmem:[#allocation2 + $0x8] sm:$0x1] %v441
        %v443 = vld [vmem:[#allocation2 + $0x14] sm:$0x1]
        %v444 = vsel %vm439, 0, %v443
        %445 = vst [vmem:[#allocation2 + $0x14] sm:$0x1] %v444
        %v446 = vld [vmem:[#allocation2 + $0x20] sm:$0x1]
        %v447 = vsel %vm439, 0, %v446
        %448 = vst [vmem:[#allocation2 + $0x20] sm:$0x1] %v447
        %v449 = vld [vmem:[#allocation2 + $0x2c] sm:$0x1]
        %v450 = vsel %vm439, 0, %v449
        %451 = vst [vmem:[#allocation2 + $0x2c] sm:$0x1] %v450
        %v452 = vld [vmem:[#allocation2 + $0x38] sm:$0x1]
        %v453 = vsel %vm439, 0, %v452
        %454 = vst [vmem:[#allocation2 + $0x38] sm:$0x1] %v453
        %v455 = vld [vmem:[#allocation2 + $0x44] sm:$0x1]
        %v456 = vsel %vm439, 0, %v455
        %457 = vst [vmem:[#allocation2 + $0x44] sm:$0x1] %v456
        %v458 = vld [vmem:[#allocation2 + $0x50] sm:$0x1]
        %v459 = vsel %vm439, 0, %v458
        %460 = vst [vmem:[#allocation2 + $0x50] sm:$0x1] %v459
        %v461 = vld [vmem:[#allocation2 + $0x5c] sm:$0x1]
        %v462 = vsel %vm439, 0, %v461
        %463 = vst [vmem:[#allocation2 + $0x5c] sm:$0x1] %v462
        %v464 = vld [vmem:[#allocation2 + $0x68] sm:$0x1]
        %v465 = vsel %vm439, 0, %v464
        %466 = vst [vmem:[#allocation2 + $0x68] sm:$0x1] %v465
        %v467 = vld [vmem:[#allocation2 + $0x74] sm:$0x1]
        %v468 = vsel %vm439, 0, %v467
        %469 = vst [vmem:[#allocation2 + $0x74] sm:$0x1] %v468
        %v470 = vld [vmem:[#allocation2 + $0x80] sm:$0x1]
        %v471 = vsel %vm439, 0, %v470
        %472 = vst [vmem:[#allocation2 + $0x80] sm:$0x1] %v471
        %v473 = vld [vmem:[#allocation2 + $0x8c] sm:$0x1]
        %v474 = vsel %vm439, 0, %v473
        %475 = vst [vmem:[#allocation2 + $0x8c] sm:$0x1] %v474
        %v476 = vld [vmem:[%s342] sm:$0xf]
        %v477 = vld [vmem:[%s342 + $0x4] sm:$0xf]
        %v478 = vld [vmem:[%s342 + $0x8] sm:$0xf]
        %v479 = vld [vmem:[%s342 + $0xc] sm:$0xf]
        %v480 = vld [vmem:[%s342 + $0x10] sm:$0xf]
        %v481 = vld [vmem:[%s342 + $0x14] sm:$0xf]
        %v482 = vld [vmem:[%s342 + $0x18] sm:$0xf]
        %v483 = vld [vmem:[%s342 + $0x1c] sm:$0xf]
        %v484 = vld [vmem:[%s342 + $0x20] sm:$0xf]
        %v485 = vld [vmem:[%s342 + $0x24] sm:$0xf]
        %v486 = vld [vmem:[%s342 + $0x28] sm:$0xf]
        %v487 = vld [vmem:[%s342 + $0x2c] sm:$0xf]
        %v488 = vld [vmem:[%s342 + $0x30] sm:$0xf]
        %v489 = vld [vmem:[%s342 + $0x34] sm:$0xf]
        %v490 = vld [vmem:[%s342 + $0x38] sm:$0xf]
        %v491 = vld [vmem:[%s342 + $0x3c] sm:$0xf]
        %v492 = vld [vmem:[%s342 + $0x40] sm:$0xf]
        %v493 = vld [vmem:[%s342 + $0x44] sm:$0xf]
        %v494 = vld [vmem:[%s342 + $0x48] sm:$0xf]
        %v495 = vld [vmem:[%s342 + $0x4c] sm:$0xf]
        %v496 = vld [vmem:[%s342 + $0x50] sm:$0xf]
        %v497 = vld [vmem:[%s342 + $0x54] sm:$0xf]
        %v498 = vld [vmem:[%s342 + $0x58] sm:$0xf]
        %v499 = vld [vmem:[%s342 + $0x5c] sm:$0xf]
        %v500 = vld [vmem:[#allocation6] sm:$0xf]
        %v501 = vld [vmem:[#allocation6 + $0x4] sm:$0xf]
        %v502 = vld [vmem:[#allocation6 + $0x8] sm:$0xf]
        %v503 = vld [vmem:[#allocation6 + $0xc] sm:$0xf]
        %v504 = vld [vmem:[#allocation6 + $0x10] sm:$0x3]
        %v505 = vld [vmem:[#allocation8] sm:$0x1]
        %v507 = vlaneseq
        %v508 = vshrl.u32 %v507, 7
        %v509 = vsub.s32 0, %v508
        %v510 = vrot.slane %v505, %v509
        %v536 = vunpack.c.l.b16 %v476
        %v537 = vunpack.c.l.b16 %v477
        %v538 = vunpack.c.l.b16 %v478
        %v539 = vunpack.c.l.b16 %v479
        %v540 = vunpack.c.l.b16 %v480
        %v541 = vunpack.c.l.b16 %v481
        %v542 = vunpack.c.l.b16 %v482
        %v543 = vunpack.c.l.b16 %v483
        %v544 = vunpack.c.l.b16 %v484
        %v545 = vunpack.c.l.b16 %v485
        %v546 = vunpack.c.l.b16 %v486
        %v547 = vunpack.c.l.b16 %v487
        %v548 = vunpack.c.l.b16 %v488
        %v549 = vunpack.c.l.b16 %v489
        %v550 = vunpack.c.l.b16 %v490
        %v551 = vunpack.c.l.b16 %v491
        %v552 = vunpack.c.l.b16 %v492
        %v553 = vunpack.c.l.b16 %v493
        %v554 = vunpack.c.l.b16 %v494
        %v555 = vunpack.c.l.b16 %v495
        %v556 = vunpack.c.l.b16 %v496
        %v557 = vunpack.c.l.b16 %v497
        %v558 = vunpack.c.l.b16 %v498
        %v559 = vunpack.c.l.b16 %v499
        %v560 = vpack.c.b16 %v537, %v536
        %v561 = vpack.c.b16 %v539, %v538
        %v562 = vpack.c.b16 %v541, %v540
        %v563 = vpack.c.b16 %v543, %v542
        %v564 = vpack.c.b16 %v545, %v544
        %v565 = vpack.c.b16 %v547, %v546
        %v566 = vpack.c.b16 %v549, %v548
        %v567 = vpack.c.b16 %v551, %v550
        %v568 = vpack.c.b16 %v553, %v552
        %v569 = vpack.c.b16 %v555, %v554
        %v570 = vpack.c.b16 %v557, %v556
        %v571 = vpack.c.b16 %v559, %v558
        %v577 = vunpack.c.l.b16 %v500
        %v578 = vunpack.c.l.b16 %v501
        %v579 = vunpack.c.l.b16 %v502
        %v580 = vunpack.c.l.b16 %v503
        %v581 = vunpack.c.l.b16 %v504
        %v582 = vpack.c.b16 %v578, %v577
        %v583 = vpack.c.b16 %v580, %v579
        %v584 = vpack.c.b16 %v581, %v581
        %vm587 = vcmask 293888
        %v589 = vsel %vm587, %v560, 0
        %v592 = vsel %vm587, %v561, 0
        %v595 = vsel %vm587, %v562, 0
        %v598 = vsel %vm587, %v563, 0
        %v601 = vsel %vm587, %v564, 0
        %v604 = vsel %vm587, %v565, 0
        %v607 = vsel %vm587, %v566, 0
        %v610 = vsel %vm587, %v567, 0
        %v613 = vsel %vm587, %v568, 0
        %v616 = vsel %vm587, %v569, 0
        %v619 = vsel %vm587, %v570, 0
        %v622 = vsel %vm587, %v571, 0
        %vm624 = vcmask 1041408
        %v626 = vsel %vm624, %v584, 0
        %628 = vmatprep.subr.bf16.mxu0 0
        %629 = vmatpush1.bf16.msra.mxu0 %v582
        %630 = vmatprep.subr.bf16.mxu0 0
        %631 = vmatpush1.bf16.msra.mxu0 %v583
        %632 = vmatprep.subr.bf16.mxu0 0
        %633 = vmatpush1.bf16.msra.mxu0 %v626
        %634 = vmatprep.subr.bf16.mxu0 0
        %635 = vmatpush1.bf16.msra.mxu0 0
        %636 = vmatprep.subr.bf16.mxu0 0
        %637 = vmatpush1.bf16.msra.mxu0 0
        %638 = vmatprep.subr.bf16.mxu0 0
        %639 = vmatpush1.bf16.msra.mxu0 0
        %640 = vmatprep.subr.bf16.mxu0 0
        %641 = vmatpush1.bf16.msra.mxu0 0
        %642 = vmatprep.subr.bf16.mxu0 0
        %643 = vmatpush1.bf16.msra.mxu0 0
        %644 = vmatprep.subr.bf16.mxu0 0
        %645 = vmatpush1.bf16.msra.mxu0 0
        %646 = vmatprep.subr.bf16.mxu0 0
        %647 = vmatpush1.bf16.msra.mxu0 0
        %648 = vmatprep.subr.bf16.mxu0 0
        %649 = vmatpush1.bf16.msra.mxu0 0
        %650 = vmatprep.subr.bf16.mxu0 0
        %651 = vmatpush1.bf16.msra.mxu0 0
        %652 = vmatprep.subr.bf16.mxu0 0
        %653 = vmatpush1.bf16.msra.mxu0 0
        %654 = vmatprep.subr.bf16.mxu0 0
        %655 = vmatpush1.bf16.msra.mxu0 0
        %656 = vmatprep.subr.bf16.mxu0 0
        %657 = vmatpush1.bf16.msra.mxu0 0
        %658 = vmatprep.subr.bf16.mxu0 0
        %659 = vmatpush1.bf16.msra.mxu0 0
        %660 = vmatprep.mubr.bf16.mxu0 0
        %661 = vmatmul.mubr.bf16.gmra.mrb[0].mxu0 %v589
        %v662 = vpop.f32.mrb[0].mxu0
        %v663 = vadd.f32 %v510, %v662
        %v664 = vpop.f32.mrb[0].mxu0
        %v665 = vpop.f32.mrb[0].mxu0
        %v666 = vadd.f32 %v510, %v665
        %v667 = vpop.f32.mrb[0].mxu0
        %668 = vmatprep.mubr.bf16.mxu0 0
        %669 = vmatmul.mubr.bf16.gmra.mrb[0].mxu0 %v592
        %v670 = vpop.f32.mrb[0].mxu0
        %v671 = vadd.f32 %v510, %v670
        %v672 = vpop.f32.mrb[0].mxu0
        %v673 = vpop.f32.mrb[0].mxu0
        %v674 = vadd.f32 %v510, %v673
        %v675 = vpop.f32.mrb[0].mxu0
        %676 = vmatprep.mubr.bf16.mxu0 0
        %677 = vmatmul.mubr.bf16.gmra.mrb[0].mxu0 %v595
        %v678 = vpop.f32.mrb[0].mxu0
        %v679 = vadd.f32 %v510, %v678
        %v680 = vpop.f32.mrb[0].mxu0
        %v681 = vpop.f32.mrb[0].mxu0
        %v682 = vadd.f32 %v510, %v681
        %v683 = vpop.f32.mrb[0].mxu0
        %684 = vmatprep.mubr.bf16.mxu0 0
        %685 = vmatmul.mubr.bf16.gmra.mrb[0].mxu0 %v598
        %v686 = vpop.f32.mrb[0].mxu0
        %v687 = vadd.f32 %v510, %v686
        %v688 = vpop.f32.mrb[0].mxu0
        %v689 = vpop.f32.mrb[0].mxu0
        %v690 = vadd.f32 %v510, %v689
        %v691 = vpop.f32.mrb[0].mxu0
        %692 = vmatprep.mubr.bf16.mxu0 0
        %693 = vmatmul.mubr.bf16.gmra.mrb[0].mxu0 %v601
        %v694 = vpop.f32.mrb[0].mxu0
        %v695 = vadd.f32 %v510, %v694
        %v696 = vpop.f32.mrb[0].mxu0
        %v697 = vpop.f32.mrb[0].mxu0
        %v698 = vadd.f32 %v510, %v697
        %v699 = vpop.f32.mrb[0].mxu0
        %700 = vmatprep.mubr.bf16.mxu0 0
        %701 = vmatmul.mubr.bf16.gmra.mrb[0].mxu0 %v604
        %v702 = vpop.f32.mrb[0].mxu0
        %v703 = vadd.f32 %v510, %v702
        %v704 = vpop.f32.mrb[0].mxu0
        %v705 = vpop.f32.mrb[0].mxu0
        %v706 = vadd.f32 %v510, %v705
        %v707 = vpop.f32.mrb[0].mxu0
        %708 = vmatprep.mubr.bf16.mxu0 0
        %709 = vmatmul.mubr.bf16.gmra.mrb[0].mxu0 %v607
        %v710 = vpop.f32.mrb[0].mxu0
        %v711 = vadd.f32 %v510, %v710
        %v712 = vpop.f32.mrb[0].mxu0
        %v713 = vpop.f32.mrb[0].mxu0
        %v714 = vadd.f32 %v510, %v713
        %v715 = vpop.f32.mrb[0].mxu0
        %716 = vmatprep.mubr.bf16.mxu0 0
        %717 = vmatmul.mubr.bf16.gmra.mrb[0].mxu0 %v610
        %v718 = vpop.f32.mrb[0].mxu0
        %v719 = vadd.f32 %v510, %v718
        %v720 = vpop.f32.mrb[0].mxu0
        %v721 = vpop.f32.mrb[0].mxu0
        %v722 = vadd.f32 %v510, %v721
        %v723 = vpop.f32.mrb[0].mxu0
        %724 = vmatprep.mubr.bf16.mxu0 0
        %725 = vmatmul.mubr.bf16.gmra.mrb[0].mxu0 %v613
        %v726 = vpop.f32.mrb[0].mxu0
        %v727 = vadd.f32 %v510, %v726
        %v728 = vpop.f32.mrb[0].mxu0
        %v729 = vpop.f32.mrb[0].mxu0
        %v730 = vadd.f32 %v510, %v729
        %v731 = vpop.f32.mrb[0].mxu0
        %732 = vmatprep.mubr.bf16.mxu0 0
        %733 = vmatmul.mubr.bf16.gmra.mrb[0].mxu0 %v616
        %v734 = vpop.f32.mrb[0].mxu0
        %v735 = vadd.f32 %v510, %v734
        %v736 = vpop.f32.mrb[0].mxu0
        %v737 = vpop.f32.mrb[0].mxu0
        %v738 = vadd.f32 %v510, %v737
        %v739 = vpop.f32.mrb[0].mxu0
        %740 = vmatprep.mubr.bf16.mxu0 0
        %741 = vmatmul.mubr.bf16.gmra.mrb[0].mxu0 %v619
        %v742 = vpop.f32.mrb[0].mxu0
        %v743 = vadd.f32 %v510, %v742
        %v744 = vpop.f32.mrb[0].mxu0
        %v745 = vpop.f32.mrb[0].mxu0
        %v746 = vadd.f32 %v510, %v745
        %v747 = vpop.f32.mrb[0].mxu0
        %748 = vmatprep.mubr.bf16.mxu0 0
        %749 = vmatmul.mubr.bf16.gmra.mrb[0].mxu0 %v622
        %v750 = vpop.f32.mrb[0].mxu0
        %v751 = vadd.f32 %v510, %v750
        %v752 = vpop.f32.mrb[0].mxu0
        %v753 = vpop.f32.mrb[0].mxu0
        %v754 = vadd.f32 %v510, %v753
        %v755 = vpop.f32.mrb[0].mxu0
        %756 = vdwg.mxu0
        %v757 = vmax.f32 %v663, 0.0
        %v758 = vmax.f32 %v666, 0.0
        %v759 = vmax.f32 %v671, 0.0
        %v760 = vmax.f32 %v674, 0.0
        %v761 = vmax.f32 %v679, 0.0
        %v762 = vmax.f32 %v682, 0.0
        %v763 = vmax.f32 %v687, 0.0
        %v764 = vmax.f32 %v690, 0.0
        %v765 = vmax.f32 %v695, 0.0
        %v766 = vmax.f32 %v698, 0.0
        %v767 = vmax.f32 %v703, 0.0
        %v768 = vmax.f32 %v706, 0.0
        %v769 = vmax.f32 %v711, 0.0
        %v770 = vmax.f32 %v714, 0.0
        %v771 = vmax.f32 %v719, 0.0
        %v772 = vmax.f32 %v722, 0.0
        %v773 = vmax.f32 %v727, 0.0
        %v774 = vmax.f32 %v730, 0.0
        %v775 = vmax.f32 %v735, 0.0
        %v776 = vmax.f32 %v738, 0.0
        %v777 = vmax.f32 %v743, 0.0
        %v778 = vmax.f32 %v746, 0.0
        %v779 = vmax.f32 %v751, 0.0
        %v780 = vmax.f32 %v754, 0.0
        %v781 = vpack.c.bf16 %v758, %v757
        %v782 = vpack.c.bf16 %v760, %v759
        %v783 = vpack.c.bf16 %v762, %v761
        %v784 = vpack.c.bf16 %v764, %v763
        %v785 = vpack.c.bf16 %v766, %v765
        %v786 = vpack.c.bf16 %v768, %v767
        %v787 = vpack.c.bf16 %v770, %v769
        %v788 = vpack.c.bf16 %v772, %v771
        %v789 = vpack.c.bf16 %v774, %v773
        %v790 = vpack.c.bf16 %v776, %v775
        %v791 = vpack.c.bf16 %v778, %v777
        %v792 = vpack.c.bf16 %v780, %v779
        %v805 = vunpack.c.l.b16 %v781
        %v806 = vunpack.c.h.b16 %v781
        %v807 = vunpack.c.l.b16 %v782
        %v808 = vunpack.c.h.b16 %v782
        %v809 = vunpack.c.l.b16 %v783
        %v810 = vunpack.c.h.b16 %v783
        %v811 = vunpack.c.l.b16 %v784
        %v812 = vunpack.c.h.b16 %v784
        %v813 = vunpack.c.l.b16 %v785
        %v814 = vunpack.c.h.b16 %v785
        %v815 = vunpack.c.l.b16 %v786
        %v816 = vunpack.c.h.b16 %v786
        %v817 = vunpack.c.l.b16 %v787
        %v818 = vunpack.c.h.b16 %v787
        %v819 = vunpack.c.l.b16 %v788
        %v820 = vunpack.c.h.b16 %v788
        %v821 = vunpack.c.l.b16 %v789
        %v822 = vunpack.c.h.b16 %v789
        %v823 = vunpack.c.l.b16 %v790
        %v824 = vunpack.c.h.b16 %v790
        %v825 = vunpack.c.l.b16 %v791
        %v826 = vunpack.c.h.b16 %v791
        %v827 = vunpack.c.l.b16 %v792
        %v828 = vunpack.c.h.b16 %v792
        %v829 = vpack.c.b16 %v805, %v805
        %v830 = vpack.c.b16 %v806, %v806
        %v831 = vpack.c.b16 %v807, %v807
        %v832 = vpack.c.b16 %v808, %v808
        %v833 = vpack.c.b16 %v809, %v809
        %v834 = vpack.c.b16 %v810, %v810
        %v835 = vpack.c.b16 %v811, %v811
        %v836 = vpack.c.b16 %v812, %v812
        %v837 = vpack.c.b16 %v813, %v813
        %v838 = vpack.c.b16 %v814, %v814
        %v839 = vpack.c.b16 %v815, %v815
        %v840 = vpack.c.b16 %v816, %v816
        %v841 = vpack.c.b16 %v817, %v817
        %v842 = vpack.c.b16 %v818, %v818
        %v843 = vpack.c.b16 %v819, %v819
        %v844 = vpack.c.b16 %v820, %v820
        %v845 = vpack.c.b16 %v821, %v821
        %v846 = vpack.c.b16 %v822, %v822
        %v847 = vpack.c.b16 %v823, %v823
        %v848 = vpack.c.b16 %v824, %v824
        %v849 = vpack.c.b16 %v825, %v825
        %v850 = vpack.c.b16 %v826, %v826
        %v851 = vpack.c.b16 %v827, %v827
        %v852 = vpack.c.b16 %v828, %v828
        %vm853 = vsmask.f32 4368
        %vm854 = vmor %vm400, %vm853
        %v856 = vshrl.u32 %v829, 16
        %v858 = vrot.slane %v856, 7
        %v859 = vshll.u32 %v829, 16
        %v861 = vor.u32 %v858, %v859
        %v862 = vrot.slane %v858, 4
        %v864 = vshrl.u32 %v830, 16
        %v866 = vrot.slane %v864, 7
        %v867 = vshll.u32 %v830, 16
        %v869 = vor.u32 %v866, %v867
        %v870 = vsel %vm854, %v862, %v869
        %v871 = vrot.slane %v866, 4
        %v873 = vshrl.u32 %v831, 16
        %v875 = vrot.slane %v873, 7
        %v876 = vshll.u32 %v831, 16
        %v878 = vor.u32 %v875, %v876
        %v879 = vrot.slane %v875, 4
        %v881 = vshrl.u32 %v832, 16
        %v883 = vrot.slane %v881, 7
        %v884 = vshll.u32 %v832, 16
        %v886 = vor.u32 %v883, %v884
        %v887 = vsel %vm854, %v879, %v886
        %v888 = vrot.slane %v883, 4
        %v890 = vshrl.u32 %v833, 16
        %v892 = vrot.slane %v890, 7
        %v893 = vshll.u32 %v833, 16
        %v895 = vor.u32 %v892, %v893
        %v896 = vrot.slane %v892, 4
        %v898 = vshrl.u32 %v834, 16
        %v900 = vrot.slane %v898, 7
        %v901 = vshll.u32 %v834, 16
        %v903 = vor.u32 %v900, %v901
        %v904 = vsel %vm854, %v896, %v903
        %v905 = vrot.slane %v900, 4
        %v907 = vshrl.u32 %v835, 16
        %v909 = vrot.slane %v907, 7
        %v910 = vshll.u32 %v835, 16
        %v912 = vor.u32 %v909, %v910
        %v913 = vrot.slane %v909, 4
        %v915 = vshrl.u32 %v836, 16
        %v917 = vrot.slane %v915, 7
        %v918 = vshll.u32 %v836, 16
        %v920 = vor.u32 %v917, %v918
        %v921 = vsel %vm854, %v913, %v920
        %v922 = vrot.slane %v917, 4
        %v924 = vshrl.u32 %v837, 16
        %v926 = vrot.slane %v924, 7
        %v927 = vshll.u32 %v837, 16
        %v929 = vor.u32 %v926, %v927
        %v930 = vrot.slane %v926, 4
        %v932 = vshrl.u32 %v838, 16
        %v934 = vrot.slane %v932, 7
        %v935 = vshll.u32 %v838, 16
        %v937 = vor.u32 %v934, %v935
        %v938 = vsel %vm854, %v930, %v937
        %v939 = vrot.slane %v934, 4
        %v941 = vshrl.u32 %v839, 16
        %v943 = vrot.slane %v941, 7
        %v944 = vshll.u32 %v839, 16
        %v946 = vor.u32 %v943, %v944
        %v947 = vrot.slane %v943, 4
        %v949 = vshrl.u32 %v840, 16
        %v951 = vrot.slane %v949, 7
        %v952 = vshll.u32 %v840, 16
        %v954 = vor.u32 %v951, %v952
        %v955 = vsel %vm854, %v947, %v954
        %v956 = vrot.slane %v951, 4
        %v958 = vshrl.u32 %v841, 16
        %v960 = vrot.slane %v958, 7
        %v961 = vshll.u32 %v841, 16
        %v963 = vor.u32 %v960, %v961
        %v964 = vrot.slane %v960, 4
        %v966 = vshrl.u32 %v842, 16
        %v968 = vrot.slane %v966, 7
        %v969 = vshll.u32 %v842, 16
        %v971 = vor.u32 %v968, %v969
        %v972 = vsel %vm854, %v964, %v971
        %v973 = vrot.slane %v968, 4
        %v975 = vshrl.u32 %v843, 16
        %v977 = vrot.slane %v975, 7
        %v978 = vshll.u32 %v843, 16
        %v980 = vor.u32 %v977, %v978
        %v981 = vrot.slane %v977, 4
        %v983 = vshrl.u32 %v844, 16
        %v985 = vrot.slane %v983, 7
        %v986 = vshll.u32 %v844, 16
        %v988 = vor.u32 %v985, %v986
        %v989 = vsel %vm854, %v981, %v988
        %v990 = vrot.slane %v985, 4
        %v992 = vshrl.u32 %v845, 16
        %v994 = vrot.slane %v992, 7
        %v995 = vshll.u32 %v845, 16
        %v997 = vor.u32 %v994, %v995
        %v998 = vrot.slane %v994, 4
        %v1000 = vshrl.u32 %v846, 16
        %v1002 = vrot.slane %v1000, 7
        %v1003 = vshll.u32 %v846, 16
        %v1005 = vor.u32 %v1002, %v1003
        %v1006 = vsel %vm854, %v998, %v1005
        %v1007 = vrot.slane %v1002, 4
        %v1009 = vshrl.u32 %v847, 16
        %v1011 = vrot.slane %v1009, 7
        %v1012 = vshll.u32 %v847, 16
        %v1014 = vor.u32 %v1011, %v1012
        %v1015 = vrot.slane %v1011, 4
        %v1017 = vshrl.u32 %v848, 16
        %v1019 = vrot.slane %v1017, 7
        %v1020 = vshll.u32 %v848, 16
        %v1022 = vor.u32 %v1019, %v1020
        %v1023 = vsel %vm854, %v1015, %v1022
        %v1024 = vrot.slane %v1019, 4
        %v1026 = vshrl.u32 %v849, 16
        %v1028 = vrot.slane %v1026, 7
        %v1029 = vshll.u32 %v849, 16
        %v1031 = vor.u32 %v1028, %v1029
        %v1032 = vrot.slane %v1028, 4
        %v1034 = vshrl.u32 %v850, 16
        %v1036 = vrot.slane %v1034, 7
        %v1037 = vshll.u32 %v850, 16
        %v1039 = vor.u32 %v1036, %v1037
        %v1040 = vsel %vm854, %v1032, %v1039
        %v1041 = vrot.slane %v1036, 4
        %v1043 = vshrl.u32 %v851, 16
        %v1045 = vrot.slane %v1043, 7
        %v1046 = vshll.u32 %v851, 16
        %v1048 = vor.u32 %v1045, %v1046
        %v1049 = vrot.slane %v1045, 4
        %v1051 = vshrl.u32 %v852, 16
        %v1053 = vrot.slane %v1051, 7
        %v1054 = vshll.u32 %v852, 16
        %v1056 = vor.u32 %v1053, %v1054
        %v1057 = vsel %vm854, %v1049, %v1056
        %v1058 = vrot.slane %v1053, 4
        %vm1095 = vcmask 257024
        %vm1096 = vmand %vm1095, %vm438
        %v1097 = vld [vmem:[#allocation2] sm:$0xf]
        %v1098 = vsel %vm1096, %v861, %v1097
        %1099 = vst [vmem:[#allocation2] sm:$0xf] %v1098
        %vm1100 = vcmask 257024
        %1101 = vst.msk [vmem:[#allocation2 + $0x4] sm:$0xf] %vm1100, %v870
        %v1102 = vld [vmem:[#allocation2 + $0x8] sm:$0x1]
        %v1103 = vsel %vm401, %v871, %v1102
        %1104 = vst [vmem:[#allocation2 + $0x8] sm:$0x1] %v1103
        %v1105 = vld [vmem:[#allocation2 + $0xc] sm:$0xf]
        %v1106 = vsel %vm1096, %v878, %v1105
        %1107 = vst [vmem:[#allocation2 + $0xc] sm:$0xf] %v1106
        %1108 = vst.msk [vmem:[#allocation2 + $0x10] sm:$0xf] %vm1100, %v887
        %v1109 = vld [vmem:[#allocation2 + $0x14] sm:$0x1]
        %v1110 = vsel %vm401, %v888, %v1109
        %1111 = vst [vmem:[#allocation2 + $0x14] sm:$0x1] %v1110
        %v1112 = vld [vmem:[#allocation2 + $0x18] sm:$0xf]
        %v1113 = vsel %vm1096, %v895, %v1112
        %1114 = vst [vmem:[#allocation2 + $0x18] sm:$0xf] %v1113
        %1115 = vst.msk [vmem:[#allocation2 + $0x1c] sm:$0xf] %vm1100, %v904
        %v1116 = vld [vmem:[#allocation2 + $0x20] sm:$0x1]
        %v1117 = vsel %vm401, %v905, %v1116
        %1118 = vst [vmem:[#allocation2 + $0x20] sm:$0x1] %v1117
        %v1119 = vld [vmem:[#allocation2 + $0x24] sm:$0xf]
        %v1120 = vsel %vm1096, %v912, %v1119
        %1121 = vst [vmem:[#allocation2 + $0x24] sm:$0xf] %v1120
        %1122 = vst.msk [vmem:[#allocation2 + $0x28] sm:$0xf] %vm1100, %v921
        %v1123 = vld [vmem:[#allocation2 + $0x2c] sm:$0x1]
        %v1124 = vsel %vm401, %v922, %v1123
        %1125 = vst [vmem:[#allocation2 + $0x2c] sm:$0x1] %v1124
        %v1126 = vld [vmem:[#allocation2 + $0x30] sm:$0xf]
        %v1127 = vsel %vm1096, %v929, %v1126
        %1128 = vst [vmem:[#allocation2 + $0x30] sm:$0xf] %v1127
        %1129 = vst.msk [vmem:[#allocation2 + $0x34] sm:$0xf] %vm1100, %v938
        %v1130 = vld [vmem:[#allocation2 + $0x38] sm:$0x1]
        %v1131 = vsel %vm401, %v939, %v1130
        %1132 = vst [vmem:[#allocation2 + $0x38] sm:$0x1] %v1131
        %v1133 = vld [vmem:[#allocation2 + $0x3c] sm:$0xf]
        %v1134 = vsel %vm1096, %v946, %v1133
        %1135 = vst [vmem:[#allocation2 + $0x3c] sm:$0xf] %v1134
        %1136 = vst.msk [vmem:[#allocation2 + $0x40] sm:$0xf] %vm1100, %v955
        %v1137 = vld [vmem:[#allocation2 + $0x44] sm:$0x1]
        %v1138 = vsel %vm401, %v956, %v1137
        %1139 = vst [vmem:[#allocation2 + $0x44] sm:$0x1] %v1138
        %v1140 = vld [vmem:[#allocation2 + $0x48] sm:$0xf]
        %v1141 = vsel %vm1096, %v963, %v1140
        %1142 = vst [vmem:[#allocation2 + $0x48] sm:$0xf] %v1141
        %1143 = vst.msk [vmem:[#allocation2 + $0x4c] sm:$0xf] %vm1100, %v972
        %v1144 = vld [vmem:[#allocation2 + $0x50] sm:$0x1]
        %v1145 = vsel %vm401, %v973, %v1144
        %1146 = vst [vmem:[#allocation2 + $0x50] sm:$0x1] %v1145
        %v1147 = vld [vmem:[#allocation2 + $0x54] sm:$0xf]
        %v1148 = vsel %vm1096, %v980, %v1147
        %1149 = vst [vmem:[#allocation2 + $0x54] sm:$0xf] %v1148
        %1150 = vst.msk [vmem:[#allocation2 + $0x58] sm:$0xf] %vm1100, %v989
        %v1151 = vld [vmem:[#allocation2 + $0x5c] sm:$0x1]
        %v1152 = vsel %vm401, %v990, %v1151
        %1153 = vst [vmem:[#allocation2 + $0x5c] sm:$0x1] %v1152
        %v1154 = vld [vmem:[#allocation2 + $0x60] sm:$0xf]
        %v1155 = vsel %vm1096, %v997, %v1154
        %1156 = vst [vmem:[#allocation2 + $0x60] sm:$0xf] %v1155
        %1157 = vst.msk [vmem:[#allocation2 + $0x64] sm:$0xf] %vm1100, %v1006
        %v1158 = vld [vmem:[#allocation2 + $0x68] sm:$0x1]
        %v1159 = vsel %vm401, %v1007, %v1158
        %1160 = vst [vmem:[#allocation2 + $0x68] sm:$0x1] %v1159
        %v1161 = vld [vmem:[#allocation2 + $0x6c] sm:$0xf]
        %v1162 = vsel %vm1096, %v1014, %v1161
        %1163 = vst [vmem:[#allocation2 + $0x6c] sm:$0xf] %v1162
        %1164 = vst.msk [vmem:[#allocation2 + $0x70] sm:$0xf] %vm1100, %v1023
        %v1165 = vld [vmem:[#allocation2 + $0x74] sm:$0x1]
        %v1166 = vsel %vm401, %v1024, %v1165
        %1167 = vst [vmem:[#allocation2 + $0x74] sm:$0x1] %v1166
        %v1168 = vld [vmem:[#allocation2 + $0x78] sm:$0xf]
        %v1169 = vsel %vm1096, %v1031, %v1168
        %1170 = vst [vmem:[#allocation2 + $0x78] sm:$0xf] %v1169
        %1171 = vst.msk [vmem:[#allocation2 + $0x7c] sm:$0xf] %vm1100, %v1040
        %v1172 = vld [vmem:[#allocation2 + $0x80] sm:$0x1]
        %v1173 = vsel %vm401, %v1041, %v1172
        %1174 = vst [vmem:[#allocation2 + $0x80] sm:$0x1] %v1173
        %v1175 = vld [vmem:[#allocation2 + $0x84] sm:$0xf]
        %v1176 = vsel %vm1096, %v1048, %v1175
        %1177 = vst [vmem:[#allocation2 + $0x84] sm:$0xf] %v1176
        %1178 = vst.msk [vmem:[#allocation2 + $0x88] sm:$0xf] %vm1100, %v1057
        %v1179 = vld [vmem:[#allocation2 + $0x8c] sm:$0x1]
        %v1180 = vsel %vm401, %v1058, %v1179
        %1181 = vst [vmem:[#allocation2 + $0x8c] sm:$0x1] %v1180
        %p1182 = scmp.eq.s32.totalorder %s32, 0
        // Predicated region
        $region77: #{tpu_custom_call.1} parent=47 // pred_check
          %p1183 = pneg %p1182
        $region78: #{tpu_custom_call.1} parent=47 // pred_check_branch
          %1185 = sbr.rel (%p1183) target = $region80
        $region79: #{tpu_custom_call.1} parent=47 // pred_region
          %v1186 = vld [vmem:[#allocation2] sm:$0xf]
          %v1187 = vsel %vm1096, 0, %v1186
          %1188 = vst [vmem:[#allocation2] sm:$0xf] %v1187
          %1189 = vst.msk [vmem:[#allocation2 + $0x4] sm:$0xf] %vm1100, 0
          %v1190 = vld [vmem:[#allocation2 + $0x8] sm:$0x1]
          %v1191 = vsel %vm401, 0, %v1190
          %1192 = vst [vmem:[#allocation2 + $0x8] sm:$0x1] %v1191
          %v1193 = vld [vmem:[#allocation2 + $0xc] sm:$0xf]
          %v1194 = vsel %vm1096, 0, %v1193
          %1195 = vst [vmem:[#allocation2 + $0xc] sm:$0xf] %v1194
          %1196 = vst.msk [vmem:[#allocation2 + $0x10] sm:$0xf] %vm1100, 0
          %v1197 = vld [vmem:[#allocation2 + $0x14] sm:$0x1]
          %v1198 = vsel %vm401, 0, %v1197
          %1199 = vst [vmem:[#allocation2 + $0x14] sm:$0x1] %v1198
        $region80: #{tpu_custom_call.1} parent=47 // pred_fallthru
          _
        %p1200 = scmp.eq.s32.totalorder %s32, 1
        // Predicated region
        $region81: #{tpu_custom_call.1} parent=47 // pred_check
          %p1201 = pneg %p1200
        $region82: #{tpu_custom_call.1} parent=47 // pred_check_branch
          %1203 = sbr.rel (%p1201) target = $region84
        $region83: #{tpu_custom_call.1} parent=47 // pred_region
          %s1204 = scalar_lea.vmem [#allocation2], 120
          %v1205 = vld [vmem:[%s1204] sm:$0xf]
          %v1206 = vsel %vm1096, 0, %v1205
          %1207 = vst [vmem:[%s1204] sm:$0xf] %v1206
          %1208 = vst.msk [vmem:[%s1204 + $0x4] sm:$0xf] %vm1100, 0
          %v1209 = vld [vmem:[%s1204 + $0x8] sm:$0x1]
          %v1210 = vsel %vm401, 0, %v1209
          %1211 = vst [vmem:[%s1204 + $0x8] sm:$0x1] %v1210
          %v1212 = vld [vmem:[%s1204 + $0xc] sm:$0xf]
          %v1213 = vsel %vm1096, 0, %v1212
          %1214 = vst [vmem:[%s1204 + $0xc] sm:$0xf] %v1213
          %1215 = vst.msk [vmem:[%s1204 + $0x10] sm:$0xf] %vm1100, 0
          %v1216 = vld [vmem:[%s1204 + $0x14] sm:$0x1]
          %v1217 = vsel %vm401, 0, %v1216
          %1218 = vst [vmem:[%s1204 + $0x14] sm:$0x1] %v1217
        $region84: #{tpu_custom_call.1} parent=47 // pred_fallthru
          _
        %v1219 = vld [vmem:[#allocation2] sm:$0xf]
        %v1220 = vld [vmem:[#allocation2 + $0x4] sm:$0xf]
        %v1221 = vld [vmem:[#allocation2 + $0xc] sm:$0xf]
        %v1222 = vld [vmem:[#allocation2 + $0x10] sm:$0xf]
        %v1223 = vld [vmem:[#allocation2 + $0x18] sm:$0xf]
        %v1224 = vld [vmem:[#allocation2 + $0x1c] sm:$0xf]
        %v1225 = vld [vmem:[#allocation2 + $0x24] sm:$0xf]
        %v1226 = vld [vmem:[#allocation2 + $0x28] sm:$0xf]
        %v1227 = vld [vmem:[#allocation2 + $0x30] sm:$0xf]
        %v1228 = vld [vmem:[#allocation2 + $0x34] sm:$0xf]
        %v1229 = vld [vmem:[#allocation2 + $0x3c] sm:$0xf]
        %v1230 = vld [vmem:[#allocation2 + $0x40] sm:$0xf]
        %v1231 = vld [vmem:[#allocation2 + $0x48] sm:$0xf]
        %v1232 = vld [vmem:[#allocation2 + $0x4c] sm:$0xf]
        %v1233 = vld [vmem:[#allocation2 + $0x54] sm:$0xf]
        %v1234 = vld [vmem:[#allocation2 + $0x58] sm:$0xf]
        %v1235 = vld [vmem:[#allocation2 + $0x60] sm:$0xf]
        %v1236 = vld [vmem:[#allocation2 + $0x64] sm:$0xf]
        %v1237 = vld [vmem:[#allocation2 + $0x6c] sm:$0xf]
        %v1238 = vld [vmem:[#allocation2 + $0x70] sm:$0xf]
        %v1239 = vld [vmem:[#allocation2 + $0x8] sm:$0x1]
        %v1240 = vld [vmem:[#allocation2 + $0x14] sm:$0x1]
        %v1241 = vld [vmem:[#allocation2 + $0x20] sm:$0x1]
        %v1242 = vld [vmem:[#allocation2 + $0x2c] sm:$0x1]
        %v1243 = vld [vmem:[#allocation2 + $0x38] sm:$0x1]
        %v1244 = vld [vmem:[#allocation2 + $0x44] sm:$0x1]
        %v1245 = vld [vmem:[#allocation2 + $0x50] sm:$0x1]
        %v1246 = vld [vmem:[#allocation2 + $0x5c] sm:$0x1]
        %v1247 = vld [vmem:[#allocation2 + $0x68] sm:$0x1]
        %v1248 = vld [vmem:[#allocation2 + $0x74] sm:$0x1]
        %v1249 = vld [vmem:[#allocation2] sm:$0xe]
        %v1250 = vld [vmem:[#allocation2 + $0xc] sm:$0xe]
        %v1251 = vld [vmem:[#allocation2 + $0x18] sm:$0xe]
        %v1252 = vld [vmem:[#allocation2 + $0x24] sm:$0xe]
        %v1253 = vld [vmem:[#allocation2 + $0x30] sm:$0xe]
        %v1254 = vld [vmem:[#allocation2 + $0x3c] sm:$0xe]
        %v1255 = vld [vmem:[#allocation2 + $0x48] sm:$0xe]
        %v1256 = vld [vmem:[#allocation2 + $0x54] sm:$0xe]
        %v1257 = vld [vmem:[#allocation2 + $0x60] sm:$0xe]
        %v1258 = vld [vmem:[#allocation2 + $0x6c] sm:$0xe]
        %s1259 = scalar_lea.vmem [#allocation2], 12
        %v1260 = vld [vmem:[%s1259] sm:$0xf]
        %v1261 = vld [vmem:[%s1259 + $0x4] sm:$0xf]
        %v1262 = vld [vmem:[%s1259 + $0xc] sm:$0xf]
        %v1263 = vld [vmem:[%s1259 + $0x10] sm:$0xf]
        %v1264 = vld [vmem:[%s1259 + $0x18] sm:$0xf]
        %v1265 = vld [vmem:[%s1259 + $0x1c] sm:$0xf]
        %v1266 = vld [vmem:[%s1259 + $0x24] sm:$0xf]
        %v1267 = vld [vmem:[%s1259 + $0x28] sm:$0xf]
        %v1268 = vld [vmem:[%s1259 + $0x30] sm:$0xf]
        %v1269 = vld [vmem:[%s1259 + $0x34] sm:$0xf]
        %v1270 = vld [vmem:[%s1259 + $0x3c] sm:$0xf]
        %v1271 = vld [vmem:[%s1259 + $0x40] sm:$0xf]
        %v1272 = vld [vmem:[%s1259 + $0x48] sm:$0xf]
        %v1273 = vld [vmem:[%s1259 + $0x4c] sm:$0xf]
        %v1274 = vld [vmem:[%s1259 + $0x54] sm:$0xf]
        %v1275 = vld [vmem:[%s1259 + $0x58] sm:$0xf]
        %v1276 = vld [vmem:[%s1259 + $0x60] sm:$0xf]
        %v1277 = vld [vmem:[%s1259 + $0x64] sm:$0xf]
        %v1278 = vld [vmem:[%s1259 + $0x6c] sm:$0xf]
        %v1279 = vld [vmem:[%s1259 + $0x70] sm:$0xf]
        %v1280 = vld [vmem:[%s1259 + $0x8] sm:$0x1]
        %v1281 = vld [vmem:[%s1259 + $0x14] sm:$0x1]
        %v1282 = vld [vmem:[%s1259 + $0x20] sm:$0x1]
        %v1283 = vld [vmem:[%s1259 + $0x2c] sm:$0x1]
        %v1284 = vld [vmem:[%s1259 + $0x38] sm:$0x1]
        %v1285 = vld [vmem:[%s1259 + $0x44] sm:$0x1]
        %v1286 = vld [vmem:[%s1259 + $0x50] sm:$0x1]
        %v1287 = vld [vmem:[%s1259 + $0x5c] sm:$0x1]
        %v1288 = vld [vmem:[%s1259 + $0x68] sm:$0x1]
        %v1289 = vld [vmem:[%s1259 + $0x74] sm:$0x1]
        %v1290 = vld [vmem:[%s1259] sm:$0xe]
        %v1291 = vld [vmem:[%s1259 + $0xc] sm:$0xe]
        %v1292 = vld [vmem:[%s1259 + $0x18] sm:$0xe]
        %v1293 = vld [vmem:[%s1259 + $0x24] sm:$0xe]
        %v1294 = vld [vmem:[%s1259 + $0x30] sm:$0xe]
        %v1295 = vld [vmem:[%s1259 + $0x3c] sm:$0xe]
        %v1296 = vld [vmem:[%s1259 + $0x48] sm:$0xe]
        %v1297 = vld [vmem:[%s1259 + $0x54] sm:$0xe]
        %v1298 = vld [vmem:[%s1259 + $0x60] sm:$0xe]
        %v1299 = vld [vmem:[%s1259 + $0x6c] sm:$0xe]
        %s1300 = scalar_lea.vmem [#allocation2], 24
        %v1301 = vld [vmem:[%s1300] sm:$0xf]
        %v1302 = vld [vmem:[%s1300 + $0x4] sm:$0xf]
        %v1303 = vld [vmem:[%s1300 + $0xc] sm:$0xf]
        %v1304 = vld [vmem:[%s1300 + $0x10] sm:$0xf]
        %v1305 = vld [vmem:[%s1300 + $0x18] sm:$0xf]
        %v1306 = vld [vmem:[%s1300 + $0x1c] sm:$0xf]
        %v1307 = vld [vmem:[%s1300 + $0x24] sm:$0xf]
        %v1308 = vld [vmem:[%s1300 + $0x28] sm:$0xf]
        %v1309 = vld [vmem:[%s1300 + $0x30] sm:$0xf]
        %v1310 = vld [vmem:[%s1300 + $0x34] sm:$0xf]
        %v1311 = vld [vmem:[%s1300 + $0x3c] sm:$0xf]
        %v1312 = vld [vmem:[%s1300 + $0x40] sm:$0xf]
        %v1313 = vld [vmem:[%s1300 + $0x48] sm:$0xf]
        %v1314 = vld [vmem:[%s1300 + $0x4c] sm:$0xf]
        %v1315 = vld [vmem:[%s1300 + $0x54] sm:$0xf]
        %v1316 = vld [vmem:[%s1300 + $0x58] sm:$0xf]
        %v1317 = vld [vmem:[%s1300 + $0x60] sm:$0xf]
        %v1318 = vld [vmem:[%s1300 + $0x64] sm:$0xf]
        %v1319 = vld [vmem:[%s1300 + $0x6c] sm:$0xf]
        %v1320 = vld [vmem:[%s1300 + $0x70] sm:$0xf]
        %v1321 = vld [vmem:[%s1300 + $0x8] sm:$0x1]
        %v1322 = vld [vmem:[%s1300 + $0x14] sm:$0x1]
        %v1323 = vld [vmem:[%s1300 + $0x20] sm:$0x1]
        %v1324 = vld [vmem:[%s1300 + $0x2c] sm:$0x1]
        %v1325 = vld [vmem:[%s1300 + $0x38] sm:$0x1]
        %v1326 = vld [vmem:[%s1300 + $0x44] sm:$0x1]
        %v1327 = vld [vmem:[%s1300 + $0x50] sm:$0x1]
        %v1328 = vld [vmem:[%s1300 + $0x5c] sm:$0x1]
        %v1329 = vld [vmem:[%s1300 + $0x68] sm:$0x1]
        %v1330 = vld [vmem:[%s1300 + $0x74] sm:$0x1]
        %v1331 = vld [vmem:[%s1300] sm:$0xe]
        %v1332 = vld [vmem:[%s1300 + $0xc] sm:$0xe]
        %v1333 = vld [vmem:[%s1300 + $0x18] sm:$0xe]
        %v1334 = vld [vmem:[%s1300 + $0x24] sm:$0xe]
        %v1335 = vld [vmem:[%s1300 + $0x30] sm:$0xe]
        %v1336 = vld [vmem:[%s1300 + $0x3c] sm:$0xe]
        %v1337 = vld [vmem:[%s1300 + $0x48] sm:$0xe]
        %v1338 = vld [vmem:[%s1300 + $0x54] sm:$0xe]
        %v1339 = vld [vmem:[%s1300 + $0x60] sm:$0xe]
        %v1340 = vld [vmem:[%s1300 + $0x6c] sm:$0xe]
        %v1361 = vunpack.c.l.b16 %v1219
        %v1362 = vunpack.c.l.b16 %v1220
        %v1363 = vunpack.c.l.b16 %v1221
        %v1364 = vunpack.c.l.b16 %v1222
        %v1365 = vunpack.c.l.b16 %v1223
        %v1366 = vunpack.c.l.b16 %v1224
        %v1367 = vunpack.c.l.b16 %v1225
        %v1368 = vunpack.c.l.b16 %v1226
        %v1369 = vunpack.c.l.b16 %v1227
        %v1370 = vunpack.c.l.b16 %v1228
        %v1371 = vunpack.c.l.b16 %v1229
        %v1372 = vunpack.c.l.b16 %v1230
        %v1373 = vunpack.c.l.b16 %v1231
        %v1374 = vunpack.c.l.b16 %v1232
        %v1375 = vunpack.c.l.b16 %v1233
        %v1376 = vunpack.c.l.b16 %v1234
        %v1377 = vunpack.c.l.b16 %v1235
        %v1378 = vunpack.c.l.b16 %v1236
        %v1379 = vunpack.c.l.b16 %v1237
        %v1380 = vunpack.c.l.b16 %v1238
        %v1381 = vpack.c.b16 %v1362, %v1361
        %v1382 = vpack.c.b16 %v1364, %v1363
        %v1383 = vpack.c.b16 %v1366, %v1365
        %v1384 = vpack.c.b16 %v1368, %v1367
        %v1385 = vpack.c.b16 %v1370, %v1369
        %v1386 = vpack.c.b16 %v1372, %v1371
        %v1387 = vpack.c.b16 %v1374, %v1373
        %v1388 = vpack.c.b16 %v1376, %v1375
        %v1389 = vpack.c.b16 %v1378, %v1377
        %v1390 = vpack.c.b16 %v1380, %v1379
        %v1401 = vunpack.c.l.b16 %v1239
        %v1402 = vunpack.c.l.b16 %v1240
        %v1403 = vunpack.c.l.b16 %v1241
        %v1404 = vunpack.c.l.b16 %v1242
        %v1405 = vunpack.c.l.b16 %v1243
        %v1406 = vunpack.c.l.b16 %v1244
        %v1407 = vunpack.c.l.b16 %v1245
        %v1408 = vunpack.c.l.b16 %v1246
        %v1409 = vunpack.c.l.b16 %v1247
        %v1410 = vunpack.c.l.b16 %v1248
        %v1411 = vpack.c.b16 %v1401, %v1401
        %v1412 = vpack.c.b16 %v1402, %v1402
        %v1413 = vpack.c.b16 %v1403, %v1403
        %v1414 = vpack.c.b16 %v1404, %v1404
        %v1415 = vpack.c.b16 %v1405, %v1405
        %v1416 = vpack.c.b16 %v1406, %v1406
        %v1417 = vpack.c.b16 %v1407, %v1407
        %v1418 = vpack.c.b16 %v1408, %v1408
        %v1419 = vpack.c.b16 %v1409, %v1409
        %v1420 = vpack.c.b16 %v1410, %v1410
        %vm1421 = vsmask.f32 7424
        %v1423 = vshrl.u32 %v1381, 16
        %v1425 = vshll.u32 %v1381, 16
        %v1427 = vrot.slane %v1425, 1
        %v1428 = vor.u32 %v1423, %v1427
        %v1430 = vshll.u32 %v1411, 16
        %v1432 = vrot.slane %v1430, 1
        %v1433 = vsel %vm1421, %v1428, %v1432
        %v1435 = vshrl.u32 %v1382, 16
        %v1437 = vshll.u32 %v1382, 16
        %v1439 = vrot.slane %v1437, 1
        %v1440 = vor.u32 %v1435, %v1439
        %v1442 = vshll.u32 %v1412, 16
        %v1444 = vrot.slane %v1442, 1
        %v1445 = vsel %vm1421, %v1440, %v1444
        %v1447 = vshrl.u32 %v1383, 16
        %v1449 = vshll.u32 %v1383, 16
        %v1451 = vrot.slane %v1449, 1
        %v1452 = vor.u32 %v1447, %v1451
        %v1454 = vshll.u32 %v1413, 16
        %v1456 = vrot.slane %v1454, 1
        %v1457 = vsel %vm1421, %v1452, %v1456
        %v1459 = vshrl.u32 %v1384, 16
        %v1461 = vshll.u32 %v1384, 16
        %v1463 = vrot.slane %v1461, 1
        %v1464 = vor.u32 %v1459, %v1463
        %v1466 = vshll.u32 %v1414, 16
        %v1468 = vrot.slane %v1466, 1
        %v1469 = vsel %vm1421, %v1464, %v1468
        %v1471 = vshrl.u32 %v1385, 16
        %v1473 = vshll.u32 %v1385, 16
        %v1475 = vrot.slane %v1473, 1
        %v1476 = vor.u32 %v1471, %v1475
        %v1478 = vshll.u32 %v1415, 16
        %v1480 = vrot.slane %v1478, 1
        %v1481 = vsel %vm1421, %v1476, %v1480
        %v1483 = vshrl.u32 %v1386, 16
        %v1485 = vshll.u32 %v1386, 16
        %v1487 = vrot.slane %v1485, 1
        %v1488 = vor.u32 %v1483, %v1487
        %v1490 = vshll.u32 %v1416, 16
        %v1492 = vrot.slane %v1490, 1
        %v1493 = vsel %vm1421, %v1488, %v1492
        %v1495 = vshrl.u32 %v1387, 16
        %v1497 = vshll.u32 %v1387, 16
        %v1499 = vrot.slane %v1497, 1
        %v1500 = vor.u32 %v1495, %v1499
        %v1502 = vshll.u32 %v1417, 16
        %v1504 = vrot.slane %v1502, 1
        %v1505 = vsel %vm1421, %v1500, %v1504
        %v1507 = vshrl.u32 %v1388, 16
        %v1509 = vshll.u32 %v1388, 16
        %v1511 = vrot.slane %v1509, 1
        %v1512 = vor.u32 %v1507, %v1511
        %v1514 = vshll.u32 %v1418, 16
        %v1516 = vrot.slane %v1514, 1
        %v1517 = vsel %vm1421, %v1512, %v1516
        %v1519 = vshrl.u32 %v1389, 16
        %v1521 = vshll.u32 %v1389, 16
        %v1523 = vrot.slane %v1521, 1
        %v1524 = vor.u32 %v1519, %v1523
        %v1526 = vshll.u32 %v1419, 16
        %v1528 = vrot.slane %v1526, 1
        %v1529 = vsel %vm1421, %v1524, %v1528
        %v1531 = vshrl.u32 %v1390, 16
        %v1533 = vshll.u32 %v1390, 16
        %v1535 = vrot.slane %v1533, 1
        %v1536 = vor.u32 %v1531, %v1535
        %v1538 = vshll.u32 %v1420, 16
        %v1540 = vrot.slane %v1538, 1
        %v1541 = vsel %vm1421, %v1536, %v1540
        %1542 = vrot.lane.b32.xlu0 %v1433, 32
        %v1543 = vpop.permute.xlu0 %1542
        %1544 = vrot.lane.b32.xlu0 %v1445, 32
        %v1545 = vpop.permute.xlu0 %1544
        %1546 = vrot.lane.b32.xlu0 %v1457, 32
        %v1547 = vpop.permute.xlu0 %1546
        %1548 = vrot.lane.b32.xlu0 %v1469, 32
        %v1549 = vpop.permute.xlu0 %1548
        %1550 = vrot.lane.b32.xlu0 %v1481, 32
        %v1551 = vpop.permute.xlu0 %1550
        %1552 = vrot.lane.b32.xlu0 %v1493, 32
        %v1553 = vpop.permute.xlu0 %1552
        %1554 = vrot.lane.b32.xlu0 %v1505, 32
        %v1555 = vpop.permute.xlu0 %1554
        %1556 = vrot.lane.b32.xlu0 %v1517, 32
        %v1557 = vpop.permute.xlu0 %1556
        %1558 = vrot.lane.b32.xlu0 %v1529, 32
        %v1559 = vpop.permute.xlu0 %1558
        %1560 = vrot.lane.b32.xlu0 %v1541, 32
        %v1561 = vpop.permute.xlu0 %1560
        %v1572 = vunpack.c.l.b16 %v1249
        %v1573 = vunpack.c.l.b16 %v1250
        %v1574 = vunpack.c.l.b16 %v1251
        %v1575 = vunpack.c.l.b16 %v1252
        %v1576 = vunpack.c.l.b16 %v1253
        %v1577 = vunpack.c.l.b16 %v1254
        %v1578 = vunpack.c.l.b16 %v1255
        %v1579 = vunpack.c.l.b16 %v1256
        %v1580 = vunpack.c.l.b16 %v1257
        %v1581 = vunpack.c.l.b16 %v1258
        %v1582 = vpack.c.b16 %v1362, %v1572
        %v1583 = vpack.c.b16 %v1364, %v1573
        %v1584 = vpack.c.b16 %v1366, %v1574
        %v1585 = vpack.c.b16 %v1368, %v1575
        %v1586 = vpack.c.b16 %v1370, %v1576
        %v1587 = vpack.c.b16 %v1372, %v1577
        %v1588 = vpack.c.b16 %v1374, %v1578
        %v1589 = vpack.c.b16 %v1376, %v1579
        %v1590 = vpack.c.b16 %v1378, %v1580
        %v1591 = vpack.c.b16 %v1380, %v1581
        %vm1592 = vcmask 1046528
        %v1593 = vrot.slane %v1582, 1
        %v1594 = vrot.slane %v1411, 1
        %v1595 = vsel %vm1592, %v1593, %v1594
        %v1596 = vrot.slane %v1583, 1
        %v1597 = vrot.slane %v1412, 1
        %v1598 = vsel %vm1592, %v1596, %v1597
        %v1599 = vrot.slane %v1584, 1
        %v1600 = vrot.slane %v1413, 1
        %v1601 = vsel %vm1592, %v1599, %v1600
        %v1602 = vrot.slane %v1585, 1
        %v1603 = vrot.slane %v1414, 1
        %v1604 = vsel %vm1592, %v1602, %v1603
        %v1605 = vrot.slane %v1586, 1
        %v1606 = vrot.slane %v1415, 1
        %v1607 = vsel %vm1592, %v1605, %v1606
        %v1608 = vrot.slane %v1587, 1
        %v1609 = vrot.slane %v1416, 1
        %v1610 = vsel %vm1592, %v1608, %v1609
        %v1611 = vrot.slane %v1588, 1
        %v1612 = vrot.slane %v1417, 1
        %v1613 = vsel %vm1592, %v1611, %v1612
        %v1614 = vrot.slane %v1589, 1
        %v1615 = vrot.slane %v1418, 1
        %v1616 = vsel %vm1592, %v1614, %v1615
        %v1617 = vrot.slane %v1590, 1
        %v1618 = vrot.slane %v1419, 1
        %v1619 = vsel %vm1592, %v1617, %v1618
        %v1620 = vrot.slane %v1591, 1
        %v1621 = vrot.slane %v1420, 1
        %v1622 = vsel %vm1592, %v1620, %v1621
        %1623 = vrot.lane.b32.xlu0 %v1595, 64
        %v1624 = vpop.permute.xlu0 %1623
        %1625 = vrot.lane.b32.xlu0 %v1598, 64
        %v1626 = vpop.permute.xlu0 %1625
        %1627 = vrot.lane.b32.xlu0 %v1601, 64
        %v1628 = vpop.permute.xlu0 %1627
        %1629 = vrot.lane.b32.xlu0 %v1604, 64
        %v1630 = vpop.permute.xlu0 %1629
        %1631 = vrot.lane.b32.xlu0 %v1607, 64
        %v1632 = vpop.permute.xlu0 %1631
        %1633 = vrot.lane.b32.xlu0 %v1610, 64
        %v1634 = vpop.permute.xlu0 %1633
        %1635 = vrot.lane.b32.xlu0 %v1613, 64
        %v1636 = vpop.permute.xlu0 %1635
        %1637 = vrot.lane.b32.xlu0 %v1616, 64
        %v1638 = vpop.permute.xlu0 %1637
        %1639 = vrot.lane.b32.xlu0 %v1619, 64
        %v1640 = vpop.permute.xlu0 %1639
        %1641 = vrot.lane.b32.xlu0 %v1622, 64
        %v1642 = vpop.permute.xlu0 %1641
        %v1663 = vunpack.c.l.b16 %v1260
        %v1664 = vunpack.c.l.b16 %v1261
        %v1665 = vunpack.c.l.b16 %v1262
        %v1666 = vunpack.c.l.b16 %v1263
        %v1667 = vunpack.c.l.b16 %v1264
        %v1668 = vunpack.c.l.b16 %v1265
        %v1669 = vunpack.c.l.b16 %v1266
        %v1670 = vunpack.c.l.b16 %v1267
        %v1671 = vunpack.c.l.b16 %v1268
        %v1672 = vunpack.c.l.b16 %v1269
        %v1673 = vunpack.c.l.b16 %v1270
        %v1674 = vunpack.c.l.b16 %v1271
        %v1675 = vunpack.c.l.b16 %v1272
        %v1676 = vunpack.c.l.b16 %v1273
        %v1677 = vunpack.c.l.b16 %v1274
        %v1678 = vunpack.c.l.b16 %v1275
        %v1679 = vunpack.c.l.b16 %v1276
        %v1680 = vunpack.c.l.b16 %v1277
        %v1681 = vunpack.c.l.b16 %v1278
        %v1682 = vunpack.c.l.b16 %v1279
        %v1683 = vpack.c.b16 %v1664, %v1663
        %v1684 = vpack.c.b16 %v1666, %v1665
        %v1685 = vpack.c.b16 %v1668, %v1667
        %v1686 = vpack.c.b16 %v1670, %v1669
        %v1687 = vpack.c.b16 %v1672, %v1671
        %v1688 = vpack.c.b16 %v1674, %v1673
        %v1689 = vpack.c.b16 %v1676, %v1675
        %v1690 = vpack.c.b16 %v1678, %v1677
        %v1691 = vpack.c.b16 %v1680, %v1679
        %v1692 = vpack.c.b16 %v1682, %v1681
        %1693 = vrot.lane.b32.xlu0 %v1683, 96
        %v1694 = vpop.permute.xlu0 %1693
        %1695 = vrot.lane.b32.xlu0 %v1684, 96
        %v1696 = vpop.permute.xlu0 %1695
        %1697 = vrot.lane.b32.xlu0 %v1685, 96
        %v1698 = vpop.permute.xlu0 %1697
        %1699 = vrot.lane.b32.xlu0 %v1686, 96
        %v1700 = vpop.permute.xlu0 %1699
        %1701 = vrot.lane.b32.xlu0 %v1687, 96
        %v1702 = vpop.permute.xlu0 %1701
        %1703 = vrot.lane.b32.xlu0 %v1688, 96
        %v1704 = vpop.permute.xlu0 %1703
        %1705 = vrot.lane.b32.xlu0 %v1689, 96
        %v1706 = vpop.permute.xlu0 %1705
        %1707 = vrot.lane.b32.xlu0 %v1690, 96
        %v1708 = vpop.permute.xlu0 %1707
        %1709 = vrot.lane.b32.xlu0 %v1691, 96
        %v1710 = vpop.permute.xlu0 %1709
        %1711 = vrot.lane.b32.xlu0 %v1692, 96
        %v1712 = vpop.permute.xlu0 %1711
        %v1723 = vunpack.c.l.b16 %v1280
        %v1724 = vunpack.c.l.b16 %v1281
        %v1725 = vunpack.c.l.b16 %v1282
        %v1726 = vunpack.c.l.b16 %v1283
        %v1727 = vunpack.c.l.b16 %v1284
        %v1728 = vunpack.c.l.b16 %v1285
        %v1729 = vunpack.c.l.b16 %v1286
        %v1730 = vunpack.c.l.b16 %v1287
        %v1731 = vunpack.c.l.b16 %v1288
        %v1732 = vunpack.c.l.b16 %v1289
        %v1733 = vpack.c.b16 %v1723, %v1723
        %v1734 = vpack.c.b16 %v1724, %v1724
        %v1735 = vpack.c.b16 %v1725, %v1725
        %v1736 = vpack.c.b16 %v1726, %v1726
        %v1737 = vpack.c.b16 %v1727, %v1727
        %v1738 = vpack.c.b16 %v1728, %v1728
        %v1739 = vpack.c.b16 %v1729, %v1729
        %v1740 = vpack.c.b16 %v1730, %v1730
        %v1741 = vpack.c.b16 %v1731, %v1731
        %v1742 = vpack.c.b16 %v1732, %v1732
        %v1744 = vshrl.u32 %v1683, 16
        %v1746 = vshll.u32 %v1683, 16
        %v1748 = vrot.slane %v1746, 1
        %v1749 = vor.u32 %v1744, %v1748
        %v1751 = vshll.u32 %v1733, 16
        %v1753 = vrot.slane %v1751, 1
        %v1754 = vsel %vm1421, %v1749, %v1753
        %v1756 = vshrl.u32 %v1684, 16
        %v1758 = vshll.u32 %v1684, 16
        %v1760 = vrot.slane %v1758, 1
        %v1761 = vor.u32 %v1756, %v1760
        %v1763 = vshll.u32 %v1734, 16
        %v1765 = vrot.slane %v1763, 1
        %v1766 = vsel %vm1421, %v1761, %v1765
        %v1768 = vshrl.u32 %v1685, 16
        %v1770 = vshll.u32 %v1685, 16
        %v1772 = vrot.slane %v1770, 1
        %v1773 = vor.u32 %v1768, %v1772
        %v1775 = vshll.u32 %v1735, 16
        %v1777 = vrot.slane %v1775, 1
        %v1778 = vsel %vm1421, %v1773, %v1777
        %v1780 = vshrl.u32 %v1686, 16
        %v1782 = vshll.u32 %v1686, 16
        %v1784 = vrot.slane %v1782, 1
        %v1785 = vor.u32 %v1780, %v1784
        %v1787 = vshll.u32 %v1736, 16
        %v1789 = vrot.slane %v1787, 1
        %v1790 = vsel %vm1421, %v1785, %v1789
        %v1792 = vshrl.u32 %v1687, 16
        %v1794 = vshll.u32 %v1687, 16
        %v1796 = vrot.slane %v1794, 1
        %v1797 = vor.u32 %v1792, %v1796
        %v1799 = vshll.u32 %v1737, 16
        %v1801 = vrot.slane %v1799, 1
        %v1802 = vsel %vm1421, %v1797, %v1801
        %v1804 = vshrl.u32 %v1688, 16
        %v1806 = vshll.u32 %v1688, 16
        %v1808 = vrot.slane %v1806, 1
        %v1809 = vor.u32 %v1804, %v1808
        %v1811 = vshll.u32 %v1738, 16
        %v1813 = vrot.slane %v1811, 1
        %v1814 = vsel %vm1421, %v1809, %v1813
        %v1816 = vshrl.u32 %v1689, 16
        %v1818 = vshll.u32 %v1689, 16
        %v1820 = vrot.slane %v1818, 1
        %v1821 = vor.u32 %v1816, %v1820
        %v1823 = vshll.u32 %v1739, 16
        %v1825 = vrot.slane %v1823, 1
        %v1826 = vsel %vm1421, %v1821, %v1825
        %v1828 = vshrl.u32 %v1690, 16
        %v1830 = vshll.u32 %v1690, 16
        %v1832 = vrot.slane %v1830, 1
        %v1833 = vor.u32 %v1828, %v1832
        %v1835 = vshll.u32 %v1740, 16
        %v1837 = vrot.slane %v1835, 1
        %v1838 = vsel %vm1421, %v1833, %v1837
        %v1840 = vshrl.u32 %v1691, 16
        %v1842 = vshll.u32 %v1691, 16
        %v1844 = vrot.slane %v1842, 1
        %v1845 = vor.u32 %v1840, %v1844
        %v1847 = vshll.u32 %v1741, 16
        %v1849 = vrot.slane %v1847, 1
        %v1850 = vsel %vm1421, %v1845, %v1849
        %v1852 = vshrl.u32 %v1692, 16
        %v1854 = vshll.u32 %v1692, 16
        %v1856 = vrot.slane %v1854, 1
        %v1857 = vor.u32 %v1852, %v1856
        %v1859 = vshll.u32 %v1742, 16
        %v1861 = vrot.slane %v1859, 1
        %v1862 = vsel %vm1421, %v1857, %v1861
        %v1873 = vunpack.c.l.b16 %v1290
        %v1874 = vunpack.c.l.b16 %v1291
        %v1875 = vunpack.c.l.b16 %v1292
        %v1876 = vunpack.c.l.b16 %v1293
        %v1877 = vunpack.c.l.b16 %v1294
        %v1878 = vunpack.c.l.b16 %v1295
        %v1879 = vunpack.c.l.b16 %v1296
        %v1880 = vunpack.c.l.b16 %v1297
        %v1881 = vunpack.c.l.b16 %v1298
        %v1882 = vunpack.c.l.b16 %v1299
        %v1883 = vpack.c.b16 %v1664, %v1873
        %v1884 = vpack.c.b16 %v1666, %v1874
        %v1885 = vpack.c.b16 %v1668, %v1875
        %v1886 = vpack.c.b16 %v1670, %v1876
        %v1887 = vpack.c.b16 %v1672, %v1877
        %v1888 = vpack.c.b16 %v1674, %v1878
        %v1889 = vpack.c.b16 %v1676, %v1879
        %v1890 = vpack.c.b16 %v1678, %v1880
        %v1891 = vpack.c.b16 %v1680, %v1881
        %v1892 = vpack.c.b16 %v1682, %v1882
        %v1893 = vrot.slane %v1883, 1
        %v1894 = vrot.slane %v1733, 1
        %v1895 = vsel %vm1592, %v1893, %v1894
        %v1896 = vrot.slane %v1884, 1
        %v1897 = vrot.slane %v1734, 1
        %v1898 = vsel %vm1592, %v1896, %v1897
        %v1899 = vrot.slane %v1885, 1
        %v1900 = vrot.slane %v1735, 1
        %v1901 = vsel %vm1592, %v1899, %v1900
        %v1902 = vrot.slane %v1886, 1
        %v1903 = vrot.slane %v1736, 1
        %v1904 = vsel %vm1592, %v1902, %v1903
        %v1905 = vrot.slane %v1887, 1
        %v1906 = vrot.slane %v1737, 1
        %v1907 = vsel %vm1592, %v1905, %v1906
        %v1908 = vrot.slane %v1888, 1
        %v1909 = vrot.slane %v1738, 1
        %v1910 = vsel %vm1592, %v1908, %v1909
        %v1911 = vrot.slane %v1889, 1
        %v1912 = vrot.slane %v1739, 1
        %v1913 = vsel %vm1592, %v1911, %v1912
        %v1914 = vrot.slane %v1890, 1
        %v1915 = vrot.slane %v1740, 1
        %v1916 = vsel %vm1592, %v1914, %v1915
        %v1917 = vrot.slane %v1891, 1
        %v1918 = vrot.slane %v1741, 1
        %v1919 = vsel %vm1592, %v1917, %v1918
        %v1920 = vrot.slane %v1892, 1
        %v1921 = vrot.slane %v1742, 1
        %v1922 = vsel %vm1592, %v1920, %v1921
        %1923 = vrot.lane.b32.xlu0 %v1895, 32
        %v1924 = vpop.permute.xlu0 %1923
        %1925 = vrot.lane.b32.xlu0 %v1898, 32
        %v1926 = vpop.permute.xlu0 %1925
        %1927 = vrot.lane.b32.xlu0 %v1901, 32
        %v1928 = vpop.permute.xlu0 %1927
        %1929 = vrot.lane.b32.xlu0 %v1904, 32
        %v1930 = vpop.permute.xlu0 %1929
        %1931 = vrot.lane.b32.xlu0 %v1907, 32
        %v1932 = vpop.permute.xlu0 %1931
        %1933 = vrot.lane.b32.xlu0 %v1910, 32
        %v1934 = vpop.permute.xlu0 %1933
        %1935 = vrot.lane.b32.xlu0 %v1913, 32
        %v1936 = vpop.permute.xlu0 %1935
        %1937 = vrot.lane.b32.xlu0 %v1916, 32
        %v1938 = vpop.permute.xlu0 %1937
        %1939 = vrot.lane.b32.xlu0 %v1919, 32
        %v1940 = vpop.permute.xlu0 %1939
        %1941 = vrot.lane.b32.xlu0 %v1922, 32
        %v1942 = vpop.permute.xlu0 %1941
        %v1963 = vunpack.c.l.b16 %v1301
        %v1964 = vunpack.c.l.b16 %v1302
        %v1965 = vunpack.c.l.b16 %v1303
        %v1966 = vunpack.c.l.b16 %v1304
        %v1967 = vunpack.c.l.b16 %v1305
        %v1968 = vunpack.c.l.b16 %v1306
        %v1969 = vunpack.c.l.b16 %v1307
        %v1970 = vunpack.c.l.b16 %v1308
        %v1971 = vunpack.c.l.b16 %v1309
        %v1972 = vunpack.c.l.b16 %v1310
        %v1973 = vunpack.c.l.b16 %v1311
        %v1974 = vunpack.c.l.b16 %v1312
        %v1975 = vunpack.c.l.b16 %v1313
        %v1976 = vunpack.c.l.b16 %v1314
        %v1977 = vunpack.c.l.b16 %v1315
        %v1978 = vunpack.c.l.b16 %v1316
        %v1979 = vunpack.c.l.b16 %v1317
        %v1980 = vunpack.c.l.b16 %v1318
        %v1981 = vunpack.c.l.b16 %v1319
        %v1982 = vunpack.c.l.b16 %v1320
        %v1983 = vpack.c.b16 %v1964, %v1963
        %v1984 = vpack.c.b16 %v1966, %v1965
        %v1985 = vpack.c.b16 %v1968, %v1967
        %v1986 = vpack.c.b16 %v1970, %v1969
        %v1987 = vpack.c.b16 %v1972, %v1971
        %v1988 = vpack.c.b16 %v1974, %v1973
        %v1989 = vpack.c.b16 %v1976, %v1975
        %v1990 = vpack.c.b16 %v1978, %v1977
        %v1991 = vpack.c.b16 %v1980, %v1979
        %v1992 = vpack.c.b16 %v1982, %v1981
        %1993 = vrot.lane.b32.xlu0 %v1983, 64
        %v1994 = vpop.permute.xlu0 %1993
        %1995 = vrot.lane.b32.xlu0 %v1984, 64
        %v1996 = vpop.permute.xlu0 %1995
        %1997 = vrot.lane.b32.xlu0 %v1985, 64
        %v1998 = vpop.permute.xlu0 %1997
        %1999 = vrot.lane.b32.xlu0 %v1986, 64
        %v2000 = vpop.permute.xlu0 %1999
        %2001 = vrot.lane.b32.xlu0 %v1987, 64
        %v2002 = vpop.permute.xlu0 %2001
        %2003 = vrot.lane.b32.xlu0 %v1988, 64
        %v2004 = vpop.permute.xlu0 %2003
        %2005 = vrot.lane.b32.xlu0 %v1989, 64
        %v2006 = vpop.permute.xlu0 %2005
        %2007 = vrot.lane.b32.xlu0 %v1990, 64
        %v2008 = vpop.permute.xlu0 %2007
        %2009 = vrot.lane.b32.xlu0 %v1991, 64
        %v2010 = vpop.permute.xlu0 %2009
        %2011 = vrot.lane.b32.xlu0 %v1992, 64
        %v2012 = vpop.permute.xlu0 %2011
        %v2023 = vunpack.c.l.b16 %v1321
        %v2024 = vunpack.c.l.b16 %v1322
        %v2025 = vunpack.c.l.b16 %v1323
        %v2026 = vunpack.c.l.b16 %v1324
        %v2027 = vunpack.c.l.b16 %v1325
        %v2028 = vunpack.c.l.b16 %v1326
        %v2029 = vunpack.c.l.b16 %v1327
        %v2030 = vunpack.c.l.b16 %v1328
        %v2031 = vunpack.c.l.b16 %v1329
        %v2032 = vunpack.c.l.b16 %v1330
        %v2033 = vpack.c.b16 %v2023, %v2023
        %v2034 = vpack.c.b16 %v2024, %v2024
        %v2035 = vpack.c.b16 %v2025, %v2025
        %v2036 = vpack.c.b16 %v2026, %v2026
        %v2037 = vpack.c.b16 %v2027, %v2027
        %v2038 = vpack.c.b16 %v2028, %v2028
        %v2039 = vpack.c.b16 %v2029, %v2029
        %v2040 = vpack.c.b16 %v2030, %v2030
        %v2041 = vpack.c.b16 %v2031, %v2031
        %v2042 = vpack.c.b16 %v2032, %v2032
        %v2044 = vshrl.u32 %v1983, 16
        %v2046 = vshll.u32 %v1983, 16
        %v2048 = vrot.slane %v2046, 1
        %v2049 = vor.u32 %v2044, %v2048
        %v2051 = vshll.u32 %v2033, 16
        %v2053 = vrot.slane %v2051, 1
        %v2054 = vsel %vm1421, %v2049, %v2053
        %v2056 = vshrl.u32 %v1984, 16
        %v2058 = vshll.u32 %v1984, 16
        %v2060 = vrot.slane %v2058, 1
        %v2061 = vor.u32 %v2056, %v2060
        %v2063 = vshll.u32 %v2034, 16
        %v2065 = vrot.slane %v2063, 1
        %v2066 = vsel %vm1421, %v2061, %v2065
        %v2068 = vshrl.u32 %v1985, 16
        %v2070 = vshll.u32 %v1985, 16
        %v2072 = vrot.slane %v2070, 1
        %v2073 = vor.u32 %v2068, %v2072
        %v2075 = vshll.u32 %v2035, 16
        %v2077 = vrot.slane %v2075, 1
        %v2078 = vsel %vm1421, %v2073, %v2077
        %v2080 = vshrl.u32 %v1986, 16
        %v2082 = vshll.u32 %v1986, 16
        %v2084 = vrot.slane %v2082, 1
        %v2085 = vor.u32 %v2080, %v2084
        %v2087 = vshll.u32 %v2036, 16
        %v2089 = vrot.slane %v2087, 1
        %v2090 = vsel %vm1421, %v2085, %v2089
        %v2092 = vshrl.u32 %v1987, 16
        %v2094 = vshll.u32 %v1987, 16
        %v2096 = vrot.slane %v2094, 1
        %v2097 = vor.u32 %v2092, %v2096
        %v2099 = vshll.u32 %v2037, 16
        %v2101 = vrot.slane %v2099, 1
        %v2102 = vsel %vm1421, %v2097, %v2101
        %v2104 = vshrl.u32 %v1988, 16
        %v2106 = vshll.u32 %v1988, 16
        %v2108 = vrot.slane %v2106, 1
        %v2109 = vor.u32 %v2104, %v2108
        %v2111 = vshll.u32 %v2038, 16
        %v2113 = vrot.slane %v2111, 1
        %v2114 = vsel %vm1421, %v2109, %v2113
        %v2116 = vshrl.u32 %v1989, 16
        %v2118 = vshll.u32 %v1989, 16
        %v2120 = vrot.slane %v2118, 1
        %v2121 = vor.u32 %v2116, %v2120
        %v2123 = vshll.u32 %v2039, 16
        %v2125 = vrot.slane %v2123, 1
        %v2126 = vsel %vm1421, %v2121, %v2125
        %v2128 = vshrl.u32 %v1990, 16
        %v2130 = vshll.u32 %v1990, 16
        %v2132 = vrot.slane %v2130, 1
        %v2133 = vor.u32 %v2128, %v2132
        %v2135 = vshll.u32 %v2040, 16
        %v2137 = vrot.slane %v2135, 1
        %v2138 = vsel %vm1421, %v2133, %v2137
        %v2140 = vshrl.u32 %v1991, 16
        %v2142 = vshll.u32 %v1991, 16
        %v2144 = vrot.slane %v2142, 1
        %v2145 = vor.u32 %v2140, %v2144
        %v2147 = vshll.u32 %v2041, 16
        %v2149 = vrot.slane %v2147, 1
        %v2150 = vsel %vm1421, %v2145, %v2149
        %v2152 = vshrl.u32 %v1992, 16
        %v2154 = vshll.u32 %v1992, 16
        %v2156 = vrot.slane %v2154, 1
        %v2157 = vor.u32 %v2152, %v2156
        %v2159 = vshll.u32 %v2042, 16
        %v2161 = vrot.slane %v2159, 1
        %v2162 = vsel %vm1421, %v2157, %v2161
        %2163 = vrot.lane.b32.xlu0 %v2054, 96
        %v2164 = vpop.permute.xlu0 %2163
        %2165 = vrot.lane.b32.xlu0 %v2066, 96
        %v2166 = vpop.permute.xlu0 %2165
        %2167 = vrot.lane.b32.xlu0 %v2078, 96
        %v2168 = vpop.permute.xlu0 %2167
        %2169 = vrot.lane.b32.xlu0 %v2090, 96
        %v2170 = vpop.permute.xlu0 %2169
        %2171 = vrot.lane.b32.xlu0 %v2102, 96
        %v2172 = vpop.permute.xlu0 %2171
        %2173 = vrot.lane.b32.xlu0 %v2114, 96
        %v2174 = vpop.permute.xlu0 %2173
        %2175 = vrot.lane.b32.xlu0 %v2126, 96
        %v2176 = vpop.permute.xlu0 %2175
        %2177 = vrot.lane.b32.xlu0 %v2138, 96
        %v2178 = vpop.permute.xlu0 %2177
        %2179 = vrot.lane.b32.xlu0 %v2150, 96
        %v2180 = vpop.permute.xlu0 %2179
        %2181 = vrot.lane.b32.xlu0 %v2162, 96
        %v2182 = vpop.permute.xlu0 %2181
        %v2193 = vunpack.c.l.b16 %v1331
        %v2194 = vunpack.c.l.b16 %v1332
        %v2195 = vunpack.c.l.b16 %v1333
        %v2196 = vunpack.c.l.b16 %v1334
        %v2197 = vunpack.c.l.b16 %v1335
        %v2198 = vunpack.c.l.b16 %v1336
        %v2199 = vunpack.c.l.b16 %v1337
        %v2200 = vunpack.c.l.b16 %v1338
        %v2201 = vunpack.c.l.b16 %v1339
        %v2202 = vunpack.c.l.b16 %v1340
        %v2203 = vpack.c.b16 %v1964, %v2193
        %v2204 = vpack.c.b16 %v1966, %v2194
        %v2205 = vpack.c.b16 %v1968, %v2195
        %v2206 = vpack.c.b16 %v1970, %v2196
        %v2207 = vpack.c.b16 %v1972, %v2197
        %v2208 = vpack.c.b16 %v1974, %v2198
        %v2209 = vpack.c.b16 %v1976, %v2199
        %v2210 = vpack.c.b16 %v1978, %v2200
        %v2211 = vpack.c.b16 %v1980, %v2201
        %v2212 = vpack.c.b16 %v1982, %v2202
        %v2213 = vrot.slane %v2203, 1
        %v2214 = vrot.slane %v2033, 1
        %v2215 = vsel %vm1592, %v2213, %v2214
        %v2216 = vrot.slane %v2204, 1
        %v2217 = vrot.slane %v2034, 1
        %v2218 = vsel %vm1592, %v2216, %v2217
        %v2219 = vrot.slane %v2205, 1
        %v2220 = vrot.slane %v2035, 1
        %v2221 = vsel %vm1592, %v2219, %v2220
        %v2222 = vrot.slane %v2206, 1
        %v2223 = vrot.slane %v2036, 1
        %v2224 = vsel %vm1592, %v2222, %v2223
        %v2225 = vrot.slane %v2207, 1
        %v2226 = vrot.slane %v2037, 1
        %v2227 = vsel %vm1592, %v2225, %v2226
        %v2228 = vrot.slane %v2208, 1
        %v2229 = vrot.slane %v2038, 1
        %v2230 = vsel %vm1592, %v2228, %v2229
        %v2231 = vrot.slane %v2209, 1
        %v2232 = vrot.slane %v2039, 1
        %v2233 = vsel %vm1592, %v2231, %v2232
        %v2234 = vrot.slane %v2210, 1
        %v2235 = vrot.slane %v2040, 1
        %v2236 = vsel %vm1592, %v2234, %v2235
        %v2237 = vrot.slane %v2211, 1
        %v2238 = vrot.slane %v2041, 1
        %v2239 = vsel %vm1592, %v2237, %v2238
        %v2240 = vrot.slane %v2212, 1
        %v2241 = vrot.slane %v2042, 1
        %v2242 = vsel %vm1592, %v2240, %v2241
        %vm2243 = vcmask 261120
        %v2245 = vsel %vm2243, %v1381, %v1543
        %v2247 = vsel %vm2243, %v1382, %v1545
        %v2249 = vsel %vm2243, %v1383, %v1547
        %v2251 = vsel %vm2243, %v1384, %v1549
        %v2253 = vsel %vm2243, %v1385, %v1551
        %v2255 = vsel %vm2243, %v1386, %v1553
        %v2257 = vsel %vm2243, %v1387, %v1555
        %v2259 = vsel %vm2243, %v1388, %v1557
        %v2261 = vsel %vm2243, %v1389, %v1559
        %v2263 = vsel %vm2243, %v1390, %v1561
        %vm2264 = vcmask 523264
        %v2266 = vsel %vm2264, %v2245, %v1624
        %v2268 = vsel %vm2264, %v2247, %v1626
        %v2270 = vsel %vm2264, %v2249, %v1628
        %v2272 = vsel %vm2264, %v2251, %v1630
        %v2274 = vsel %vm2264, %v2253, %v1632
        %v2276 = vsel %vm2264, %v2255, %v1634
        %v2278 = vsel %vm2264, %v2257, %v1636
        %v2280 = vsel %vm2264, %v2259, %v1638
        %v2282 = vsel %vm2264, %v2261, %v1640
        %v2284 = vsel %vm2264, %v2263, %v1642
        %vm2285 = vcmask 785408
        %v2287 = vsel %vm2285, %v2266, %v1694
        %v2290 = vsel %vm2285, %v2268, %v1696
        %v2293 = vsel %vm2285, %v2270, %v1698
        %v2296 = vsel %vm2285, %v2272, %v1700
        %v2299 = vsel %vm2285, %v2274, %v1702
        %v2302 = vsel %vm2285, %v2276, %v1704
        %v2305 = vsel %vm2285, %v2278, %v1706
        %v2308 = vsel %vm2285, %v2280, %v1708
        %v2311 = vsel %vm2285, %v2282, %v1710
        %v2314 = vsel %vm2285, %v2284, %v1712
        %v2318 = vsel %vm2243, %v1754, %v1924
        %v2321 = vsel %vm2243, %v1766, %v1926
        %v2324 = vsel %vm2243, %v1778, %v1928
        %v2327 = vsel %vm2243, %v1790, %v1930
        %v2330 = vsel %vm2243, %v1802, %v1932
        %v2333 = vsel %vm2243, %v1814, %v1934
        %v2336 = vsel %vm2243, %v1826, %v1936
        %v2339 = vsel %vm2243, %v1838, %v1938
        %v2342 = vsel %vm2243, %v1850, %v1940
        %v2345 = vsel %vm2243, %v1862, %v1942
        %v2347 = vsel %vm2264, %v2318, %v1994
        %v2349 = vsel %vm2264, %v2321, %v1996
        %v2351 = vsel %vm2264, %v2324, %v1998
        %v2353 = vsel %vm2264, %v2327, %v2000
        %v2355 = vsel %vm2264, %v2330, %v2002
        %v2357 = vsel %vm2264, %v2333, %v2004
        %v2359 = vsel %vm2264, %v2336, %v2006
        %v2361 = vsel %vm2264, %v2339, %v2008
        %v2363 = vsel %vm2264, %v2342, %v2010
        %v2365 = vsel %vm2264, %v2345, %v2012
        %v2367 = vsel %vm2285, %v2347, %v2164
        %v2370 = vsel %vm2285, %v2349, %v2166
        %v2373 = vsel %vm2285, %v2351, %v2168
        %v2376 = vsel %vm2285, %v2353, %v2170
        %v2379 = vsel %vm2285, %v2355, %v2172
        %v2382 = vsel %vm2285, %v2357, %v2174
        %v2385 = vsel %vm2285, %v2359, %v2176
        %v2388 = vsel %vm2285, %v2361, %v2178
        %v2391 = vsel %vm2285, %v2363, %v2180
        %v2394 = vsel %vm2285, %v2365, %v2182
        %v2396 = vld [vmem:[#allocation9] sm:$0xf]
        %v2397 = vld [vmem:[#allocation9 + $0x4] sm:$0xf]
        %v2398 = vld [vmem:[#allocation9 + $0x8] sm:$0xf]
        %v2399 = vld [vmem:[#allocation9 + $0xc] sm:$0xf]
        %v2400 = vld [vmem:[#allocation9 + $0x10] sm:$0xf]
        %v2401 = vld [vmem:[#allocation9 + $0x14] sm:$0xf]
        %v2402 = vld [vmem:[#allocation9 + $0x18] sm:$0xf]
        %v2403 = vld [vmem:[#allocation9 + $0x1c] sm:$0xf]
        %v2404 = vld [vmem:[#allocation9 + $0x20] sm:$0xf]
        %v2405 = vld [vmem:[#allocation9 + $0x24] sm:$0xf]
        %v2406 = vld [vmem:[#allocation9 + $0x28] sm:$0xf]
        %v2407 = vld [vmem:[#allocation9 + $0x2c] sm:$0xf]
        %v2408 = vld [vmem:[#allocation9 + $0x30] sm:$0xf]
        %v2409 = vld [vmem:[#allocation9 + $0x34] sm:$0xf]
        %v2410 = vld [vmem:[#allocation9 + $0x38] sm:$0xf]
        %v2411 = vld [vmem:[#allocation9 + $0x3c] sm:$0xf]
        %v2412 = vld [vmem:[#allocation9 + $0x40] sm:$0xf]
        %v2413 = vld [vmem:[#allocation9 + $0x44] sm:$0xf]
        %v2414 = vld [vmem:[#allocation9 + $0x48] sm:$0xf]
        %v2415 = vld [vmem:[#allocation9 + $0x4c] sm:$0xf]
        %v2416 = vld [vmem:[#allocation9 + $0x50] sm:$0xf]
        %v2417 = vld [vmem:[#allocation9 + $0x54] sm:$0xf]
        %v2418 = vld [vmem:[#allocation9 + $0x58] sm:$0xf]
        %v2419 = vld [vmem:[#allocation9 + $0x5c] sm:$0xf]
        %v2420 = vld [vmem:[#allocation9 + $0x60] sm:$0xf]
        %v2421 = vld [vmem:[#allocation9 + $0x64] sm:$0xf]
        %v2422 = vld [vmem:[#allocation9 + $0x68] sm:$0xf]
        %v2423 = vld [vmem:[#allocation9 + $0x6c] sm:$0xf]
        %v2424 = vld [vmem:[#allocation9 + $0x70] sm:$0xf]
        %v2425 = vld [vmem:[#allocation9 + $0x74] sm:$0xf]
        %v2426 = vld [vmem:[#allocation9 + $0x78] sm:$0xf]
        %v2427 = vld [vmem:[#allocation9 + $0x7c] sm:$0xf]
        %v2428 = vld [vmem:[#allocation9 + $0x80] sm:$0xf]
        %v2429 = vld [vmem:[#allocation9 + $0x84] sm:$0xf]
        %v2430 = vld [vmem:[#allocation9 + $0x88] sm:$0xf]
        %v2431 = vld [vmem:[#allocation9 + $0x8c] sm:$0xf]
        %v2432 = vld [vmem:[#allocation11] sm:$0x1]
        %v2434 = vlaneseq
        %v2435 = vshrl.u32 %v2434, 7
        %v2436 = vsub.s32 0, %v2435
        %v2437 = vrot.slane %v2432, %v2436
        %v2475 = vunpack.c.l.b16 %v2396
        %v2476 = vunpack.c.l.b16 %v2397
        %v2477 = vunpack.c.l.b16 %v2398
        %v2478 = vunpack.c.l.b16 %v2399
        %v2479 = vunpack.c.l.b16 %v2400
        %v2480 = vunpack.c.l.b16 %v2401
        %v2481 = vunpack.c.l.b16 %v2402
        %v2482 = vunpack.c.l.b16 %v2403
        %v2483 = vunpack.c.l.b16 %v2404
        %v2484 = vunpack.c.l.b16 %v2405
        %v2485 = vunpack.c.l.b16 %v2406
        %v2486 = vunpack.c.l.b16 %v2407
        %v2487 = vunpack.c.l.b16 %v2408
        %v2488 = vunpack.c.l.b16 %v2409
        %v2489 = vunpack.c.l.b16 %v2410
        %v2490 = vunpack.c.l.b16 %v2411
        %v2491 = vunpack.c.l.b16 %v2412
        %v2492 = vunpack.c.l.b16 %v2413
        %v2493 = vunpack.c.l.b16 %v2414
        %v2494 = vunpack.c.l.b16 %v2415
        %v2495 = vunpack.c.l.b16 %v2416
        %v2496 = vunpack.c.l.b16 %v2417
        %v2497 = vunpack.c.l.b16 %v2418
        %v2498 = vunpack.c.l.b16 %v2419
        %v2499 = vunpack.c.l.b16 %v2420
        %v2500 = vunpack.c.l.b16 %v2421
        %v2501 = vunpack.c.l.b16 %v2422
        %v2502 = vunpack.c.l.b16 %v2423
        %v2503 = vunpack.c.l.b16 %v2424
        %v2504 = vunpack.c.l.b16 %v2425
        %v2505 = vunpack.c.l.b16 %v2426
        %v2506 = vunpack.c.l.b16 %v2427
        %v2507 = vunpack.c.l.b16 %v2428
        %v2508 = vunpack.c.l.b16 %v2429
        %v2509 = vunpack.c.l.b16 %v2430
        %v2510 = vunpack.c.l.b16 %v2431
        %v2511 = vpack.c.b16 %v2476, %v2475
        %v2512 = vpack.c.b16 %v2478, %v2477
        %v2513 = vpack.c.b16 %v2480, %v2479
        %v2514 = vpack.c.b16 %v2482, %v2481
        %v2515 = vpack.c.b16 %v2484, %v2483
        %v2516 = vpack.c.b16 %v2486, %v2485
        %v2517 = vpack.c.b16 %v2488, %v2487
        %v2518 = vpack.c.b16 %v2490, %v2489
        %v2519 = vpack.c.b16 %v2492, %v2491
        %v2520 = vpack.c.b16 %v2494, %v2493
        %v2521 = vpack.c.b16 %v2496, %v2495
        %v2522 = vpack.c.b16 %v2498, %v2497
        %v2523 = vpack.c.b16 %v2500, %v2499
        %v2524 = vpack.c.b16 %v2502, %v2501
        %v2525 = vpack.c.b16 %v2504, %v2503
        %v2526 = vpack.c.b16 %v2506, %v2505
        %v2527 = vpack.c.b16 %v2508, %v2507
        %v2528 = vpack.c.b16 %v2510, %v2509
        %v2548 = vsel %vm2243, %v2215, 0
        %v2551 = vsel %vm2243, %v2218, 0
        %v2554 = vsel %vm2243, %v2221, 0
        %v2557 = vsel %vm2243, %v2224, 0
        %v2560 = vsel %vm2243, %v2227, 0
        %v2563 = vsel %vm2243, %v2230, 0
        %v2566 = vsel %vm2243, %v2233, 0
        %v2569 = vsel %vm2243, %v2236, 0
        %v2572 = vsel %vm2243, %v2239, 0
        %v2575 = vsel %vm2243, %v2242, 0
        %2577 = vmatprep.subr.bf16.mxu0 0
        %2578 = vmatpush1.bf16.msra.mxu0 %v2511
        %2579 = vmatprep.subr.bf16.mxu0 0
        %2580 = vmatpush1.bf16.msra.mxu0 %v2512
        %2581 = vmatprep.subr.bf16.mxu0 0
        %2582 = vmatpush1.bf16.msra.mxu0 %v2513
        %2583 = vmatprep.subr.bf16.mxu0 0
        %2584 = vmatpush1.bf16.msra.mxu0 %v2514
        %2585 = vmatprep.subr.bf16.mxu0 0
        %2586 = vmatpush1.bf16.msra.mxu0 %v2515
        %2587 = vmatprep.subr.bf16.mxu0 0
        %2588 = vmatpush1.bf16.msra.mxu0 %v2516
        %2589 = vmatprep.subr.bf16.mxu0 0
        %2590 = vmatpush1.bf16.msra.mxu0 %v2517
        %2591 = vmatprep.subr.bf16.mxu0 0
        %2592 = vmatpush1.bf16.msra.mxu0 %v2518
        %2593 = vmatprep.subr.bf16.mxu0 0
        %2594 = vmatpush1.bf16.msra.mxu0 %v2519
        %2595 = vmatprep.subr.bf16.mxu0 0
        %2596 = vmatpush1.bf16.msra.mxu0 %v2520
        %2597 = vmatprep.subr.bf16.mxu0 0
        %2598 = vmatpush1.bf16.msra.mxu0 %v2521
        %2599 = vmatprep.subr.bf16.mxu0 0
        %2600 = vmatpush1.bf16.msra.mxu0 %v2522
        %2601 = vmatprep.subr.bf16.mxu0 0
        %2602 = vmatpush1.bf16.msra.mxu0 %v2523
        %2603 = vmatprep.subr.bf16.mxu0 0
        %2604 = vmatpush1.bf16.msra.mxu0 %v2524
        %2605 = vmatprep.subr.bf16.mxu0 0
        %2606 = vmatpush1.bf16.msra.mxu0 %v2525
        %2607 = vmatprep.subr.bf16.mxu0 0
        %2608 = vmatpush1.bf16.msra.mxu0 %v2526
        %2609 = vmatprep.mubr.bf16.mxu0 %v2367
        %2610 = vmatmul.mubr.bf16.gmra.mrb[0].mxu0 %v2287
        %v2611 = vpop.f32.mrb[0].mxu0
        %v2612 = vadd.f32 %v2437, %v2611
        %v2613 = vpop.f32.mrb[0].mxu0
        %v2614 = vpop.f32.mrb[0].mxu0
        %v2615 = vadd.f32 %v2437, %v2614
        %v2616 = vpop.f32.mrb[0].mxu0
        %2617 = vmatprep.mubr.bf16.mxu0 %v2370
        %2618 = vmatmul.mubr.bf16.gmra.mrb[0].mxu0 %v2290
        %v2619 = vpop.f32.mrb[0].mxu0
        %v2620 = vadd.f32 %v2437, %v2619
        %v2621 = vpop.f32.mrb[0].mxu0
        %v2622 = vpop.f32.mrb[0].mxu0
        %v2623 = vadd.f32 %v2437, %v2622
        %v2624 = vpop.f32.mrb[0].mxu0
        %2625 = vmatprep.mubr.bf16.mxu0 %v2373
        %2626 = vmatmul.mubr.bf16.gmra.mrb[0].mxu0 %v2293
        %v2627 = vpop.f32.mrb[0].mxu0
        %v2628 = vadd.f32 %v2437, %v2627
        %v2629 = vpop.f32.mrb[0].mxu0
        %v2630 = vpop.f32.mrb[0].mxu0
        %v2631 = vadd.f32 %v2437, %v2630
        %v2632 = vpop.f32.mrb[0].mxu0
        %2633 = vmatprep.mubr.bf16.mxu0 %v2376
        %2634 = vmatmul.mubr.bf16.gmra.mrb[0].mxu0 %v2296
        %v2635 = vpop.f32.mrb[0].mxu0
        %v2636 = vadd.f32 %v2437, %v2635
        %v2637 = vpop.f32.mrb[0].mxu0
        %v2638 = vpop.f32.mrb[0].mxu0
        %v2639 = vadd.f32 %v2437, %v2638
        %v2640 = vpop.f32.mrb[0].mxu0
        %2641 = vmatprep.mubr.bf16.mxu0 %v2379
        %2642 = vmatmul.mubr.bf16.gmra.mrb[0].mxu0 %v2299
        %v2643 = vpop.f32.mrb[0].mxu0
        %v2644 = vadd.f32 %v2437, %v2643
        %v2645 = vpop.f32.mrb[0].mxu0
        %v2646 = vpop.f32.mrb[0].mxu0
        %v2647 = vadd.f32 %v2437, %v2646
        %v2648 = vpop.f32.mrb[0].mxu0
        %2649 = vmatprep.mubr.bf16.mxu0 %v2382
        %2650 = vmatmul.mubr.bf16.gmra.mrb[0].mxu0 %v2302
        %v2651 = vpop.f32.mrb[0].mxu0
        %v2652 = vadd.f32 %v2437, %v2651
        %v2653 = vpop.f32.mrb[0].mxu0
        %v2654 = vpop.f32.mrb[0].mxu0
        %v2655 = vadd.f32 %v2437, %v2654
        %v2656 = vpop.f32.mrb[0].mxu0
        %2657 = vmatprep.mubr.bf16.mxu0 %v2385
        %2658 = vmatmul.mubr.bf16.gmra.mrb[0].mxu0 %v2305
        %v2659 = vpop.f32.mrb[0].mxu0
        %v2660 = vadd.f32 %v2437, %v2659
        %v2661 = vpop.f32.mrb[0].mxu0
        %v2662 = vpop.f32.mrb[0].mxu0
        %v2663 = vadd.f32 %v2437, %v2662
        %v2664 = vpop.f32.mrb[0].mxu0
        %2665 = vmatprep.mubr.bf16.mxu0 %v2388
        %2666 = vmatmul.mubr.bf16.gmra.mrb[0].mxu0 %v2308
        %v2667 = vpop.f32.mrb[0].mxu0
        %v2668 = vadd.f32 %v2437, %v2667
        %v2669 = vpop.f32.mrb[0].mxu0
        %v2670 = vpop.f32.mrb[0].mxu0
        %v2671 = vadd.f32 %v2437, %v2670
        %v2672 = vpop.f32.mrb[0].mxu0
        %2673 = vmatprep.mubr.bf16.mxu0 %v2391
        %2674 = vmatmul.mubr.bf16.gmra.mrb[0].mxu0 %v2311
        %v2675 = vpop.f32.mrb[0].mxu0
        %v2676 = vadd.f32 %v2437, %v2675
        %v2677 = vpop.f32.mrb[0].mxu0
        %v2678 = vpop.f32.mrb[0].mxu0
        %v2679 = vadd.f32 %v2437, %v2678
        %v2680 = vpop.f32.mrb[0].mxu0
        %2681 = vmatprep.mubr.bf16.mxu0 %v2394
        %2682 = vmatmul.mubr.bf16.gmra.mrb[0].mxu0 %v2314
        %v2683 = vpop.f32.mrb[0].mxu0
        %v2684 = vadd.f32 %v2437, %v2683
        %v2685 = vpop.f32.mrb[0].mxu0
        %v2686 = vpop.f32.mrb[0].mxu0
        %v2687 = vadd.f32 %v2437, %v2686
        %v2688 = vpop.f32.mrb[0].mxu0
        %2689 = vdwg.mxu0
        %2690 = vmatprep.subr.bf16.mxu0 0
        %2691 = vmatpush1.bf16.msra.mxu0 %v2527
        %2692 = vmatprep.subr.bf16.mxu0 0
        %2693 = vmatpush1.bf16.msra.mxu0 %v2528
        %2694 = vmatprep.subr.bf16.mxu0 0
        %2695 = vmatpush1.bf16.msra.mxu0 0
        %2696 = vmatprep.subr.bf16.mxu0 0
        %2697 = vmatpush1.bf16.msra.mxu0 0
        %2698 = vmatprep.subr.bf16.mxu0 0
        %2699 = vmatpush1.bf16.msra.mxu0 0
        %2700 = vmatprep.subr.bf16.mxu0 0
        %2701 = vmatpush1.bf16.msra.mxu0 0
        %2702 = vmatprep.subr.bf16.mxu0 0
        %2703 = vmatpush1.bf16.msra.mxu0 0
        %2704 = vmatprep.subr.bf16.mxu0 0
        %2705 = vmatpush1.bf16.msra.mxu0 0
        %2706 = vmatprep.subr.bf16.mxu0 0
        %2707 = vmatpush1.bf16.msra.mxu0 0
        %2708 = vmatprep.subr.bf16.mxu0 0
        %2709 = vmatpush1.bf16.msra.mxu0 0
        %2710 = vmatprep.subr.bf16.mxu0 0
        %2711 = vmatpush1.bf16.msra.mxu0 0
        %2712 = vmatprep.subr.bf16.mxu0 0
        %2713 = vmatpush1.bf16.msra.mxu0 0
        %2714 = vmatprep.subr.bf16.mxu0 0
        %2715 = vmatpush1.bf16.msra.mxu0 0
        %2716 = vmatprep.subr.bf16.mxu0 0
        %2717 = vmatpush1.bf16.msra.mxu0 0
        %2718 = vmatprep.subr.bf16.mxu0 0
        %2719 = vmatpush1.bf16.msra.mxu0 0
        %2720 = vmatprep.subr.bf16.mxu0 0
        %2721 = vmatpush1.bf16.msra.mxu0 0
        %2722 = vmatprep.mubr.bf16.mxu0 0
        %2723 = vmatmul.mubr.bf16.gmra.mrb[0].mxu0 %v2548
        %v2724 = vpop.f32.mrb[0].mxu0
        %v2725 = vadd.f32 %v2612, %v2724
        %v2726 = vpop.f32.mrb[0].mxu0
        %v2727 = vpop.f32.mrb[0].mxu0
        %v2728 = vadd.f32 %v2615, %v2727
        %v2729 = vpop.f32.mrb[0].mxu0
        %2730 = vmatprep.mubr.bf16.mxu0 0
        %2731 = vmatmul.mubr.bf16.gmra.mrb[0].mxu0 %v2551
        %v2732 = vpop.f32.mrb[0].mxu0
        %v2733 = vadd.f32 %v2620, %v2732
        %v2734 = vpop.f32.mrb[0].mxu0
        %v2735 = vpop.f32.mrb[0].mxu0
        %v2736 = vadd.f32 %v2623, %v2735
        %v2737 = vpop.f32.mrb[0].mxu0
        %2738 = vmatprep.mubr.bf16.mxu0 0
        %2739 = vmatmul.mubr.bf16.gmra.mrb[0].mxu0 %v2554
        %v2740 = vpop.f32.mrb[0].mxu0
        %v2741 = vadd.f32 %v2628, %v2740
        %v2742 = vpop.f32.mrb[0].mxu0
        %v2743 = vpop.f32.mrb[0].mxu0
        %v2744 = vadd.f32 %v2631, %v2743
        %v2745 = vpop.f32.mrb[0].mxu0
        %2746 = vmatprep.mubr.bf16.mxu0 0
        %2747 = vmatmul.mubr.bf16.gmra.mrb[0].mxu0 %v2557
        %v2748 = vpop.f32.mrb[0].mxu0
        %v2749 = vadd.f32 %v2636, %v2748
        %v2750 = vpop.f32.mrb[0].mxu0
        %v2751 = vpop.f32.mrb[0].mxu0
        %v2752 = vadd.f32 %v2639, %v2751
        %v2753 = vpop.f32.mrb[0].mxu0
        %2754 = vmatprep.mubr.bf16.mxu0 0
        %2755 = vmatmul.mubr.bf16.gmra.mrb[0].mxu0 %v2560
        %v2756 = vpop.f32.mrb[0].mxu0
        %v2757 = vadd.f32 %v2644, %v2756
        %v2758 = vpop.f32.mrb[0].mxu0
        %v2759 = vpop.f32.mrb[0].mxu0
        %v2760 = vadd.f32 %v2647, %v2759
        %v2761 = vpop.f32.mrb[0].mxu0
        %2762 = vmatprep.mubr.bf16.mxu0 0
        %2763 = vmatmul.mubr.bf16.gmra.mrb[0].mxu0 %v2563
        %v2764 = vpop.f32.mrb[0].mxu0
        %v2765 = vadd.f32 %v2652, %v2764
        %v2766 = vpop.f32.mrb[0].mxu0
        %v2767 = vpop.f32.mrb[0].mxu0
        %v2768 = vadd.f32 %v2655, %v2767
        %v2769 = vpop.f32.mrb[0].mxu0
        %2770 = vmatprep.mubr.bf16.mxu0 0
        %2771 = vmatmul.mubr.bf16.gmra.mrb[0].mxu0 %v2566
        %v2772 = vpop.f32.mrb[0].mxu0
        %v2773 = vadd.f32 %v2660, %v2772
        %v2774 = vpop.f32.mrb[0].mxu0
        %v2775 = vpop.f32.mrb[0].mxu0
        %v2776 = vadd.f32 %v2663, %v2775
        %v2777 = vpop.f32.mrb[0].mxu0
        %2778 = vmatprep.mubr.bf16.mxu0 0
        %2779 = vmatmul.mubr.bf16.gmra.mrb[0].mxu0 %v2569
        %v2780 = vpop.f32.mrb[0].mxu0
        %v2781 = vadd.f32 %v2668, %v2780
        %v2782 = vpop.f32.mrb[0].mxu0
        %v2783 = vpop.f32.mrb[0].mxu0
        %v2784 = vadd.f32 %v2671, %v2783
        %v2785 = vpop.f32.mrb[0].mxu0
        %2786 = vmatprep.mubr.bf16.mxu0 0
        %2787 = vmatmul.mubr.bf16.gmra.mrb[0].mxu0 %v2572
        %v2788 = vpop.f32.mrb[0].mxu0
        %v2789 = vadd.f32 %v2676, %v2788
        %v2790 = vpop.f32.mrb[0].mxu0
        %v2791 = vpop.f32.mrb[0].mxu0
        %v2792 = vadd.f32 %v2679, %v2791
        %v2793 = vpop.f32.mrb[0].mxu0
        %2794 = vmatprep.mubr.bf16.mxu0 0
        %2795 = vmatmul.mubr.bf16.gmra.mrb[0].mxu0 %v2575
        %v2796 = vpop.f32.mrb[0].mxu0
        %v2797 = vadd.f32 %v2684, %v2796
        %v2798 = vpop.f32.mrb[0].mxu0
        %v2799 = vpop.f32.mrb[0].mxu0
        %v2800 = vadd.f32 %v2687, %v2799
        %v2801 = vpop.f32.mrb[0].mxu0
        %2802 = vdwg.mxu0
        %v2803 = vmax.f32 %v2725, 0.0
        %v2804 = vmax.f32 %v2728, 0.0
        %v2805 = vmax.f32 %v2733, 0.0
        %v2806 = vmax.f32 %v2736, 0.0
        %v2807 = vmax.f32 %v2741, 0.0
        %v2808 = vmax.f32 %v2744, 0.0
        %v2809 = vmax.f32 %v2749, 0.0
        %v2810 = vmax.f32 %v2752, 0.0
        %v2811 = vmax.f32 %v2757, 0.0
        %v2812 = vmax.f32 %v2760, 0.0
        %v2813 = vmax.f32 %v2765, 0.0
        %v2814 = vmax.f32 %v2768, 0.0
        %v2815 = vmax.f32 %v2773, 0.0
        %v2816 = vmax.f32 %v2776, 0.0
        %v2817 = vmax.f32 %v2781, 0.0
        %v2818 = vmax.f32 %v2784, 0.0
        %v2819 = vmax.f32 %v2789, 0.0
        %v2820 = vmax.f32 %v2792, 0.0
        %v2821 = vmax.f32 %v2797, 0.0
        %v2822 = vmax.f32 %v2800, 0.0
        %v2823 = vpack.c.bf16 %v2804, %v2803
        %v2824 = vpack.c.bf16 %v2806, %v2805
        %v2825 = vpack.c.bf16 %v2808, %v2807
        %v2826 = vpack.c.bf16 %v2810, %v2809
        %v2827 = vpack.c.bf16 %v2812, %v2811
        %v2828 = vpack.c.bf16 %v2814, %v2813
        %v2829 = vpack.c.bf16 %v2816, %v2815
        %v2830 = vpack.c.bf16 %v2818, %v2817
        %v2831 = vpack.c.bf16 %v2820, %v2819
        %v2832 = vpack.c.bf16 %v2822, %v2821
        %v2843 = vunpack.c.l.b16 %v2823
        %v2844 = vunpack.c.h.b16 %v2823
        %v2845 = vunpack.c.l.b16 %v2824
        %v2846 = vunpack.c.h.b16 %v2824
        %v2847 = vunpack.c.l.b16 %v2825
        %v2848 = vunpack.c.h.b16 %v2825
        %v2849 = vunpack.c.l.b16 %v2826
        %v2850 = vunpack.c.h.b16 %v2826
        %v2851 = vunpack.c.l.b16 %v2827
        %v2852 = vunpack.c.h.b16 %v2827
        %v2853 = vunpack.c.l.b16 %v2828
        %v2854 = vunpack.c.h.b16 %v2828
        %v2855 = vunpack.c.l.b16 %v2829
        %v2856 = vunpack.c.h.b16 %v2829
        %v2857 = vunpack.c.l.b16 %v2830
        %v2858 = vunpack.c.h.b16 %v2830
        %v2859 = vunpack.c.l.b16 %v2831
        %v2860 = vunpack.c.h.b16 %v2831
        %v2861 = vunpack.c.l.b16 %v2832
        %v2862 = vunpack.c.h.b16 %v2832
        %v2863 = vpack.c.b16 %v2843, %v2843
        %v2864 = vpack.c.b16 %v2844, %v2844
        %v2865 = vpack.c.b16 %v2845, %v2845
        %v2866 = vpack.c.b16 %v2846, %v2846
        %v2867 = vpack.c.b16 %v2847, %v2847
        %v2868 = vpack.c.b16 %v2848, %v2848
        %v2869 = vpack.c.b16 %v2849, %v2849
        %v2870 = vpack.c.b16 %v2850, %v2850
        %v2871 = vpack.c.b16 %v2851, %v2851
        %v2872 = vpack.c.b16 %v2852, %v2852
        %v2873 = vpack.c.b16 %v2853, %v2853
        %v2874 = vpack.c.b16 %v2854, %v2854
        %v2875 = vpack.c.b16 %v2855, %v2855
        %v2876 = vpack.c.b16 %v2856, %v2856
        %v2877 = vpack.c.b16 %v2857, %v2857
        %v2878 = vpack.c.b16 %v2858, %v2858
        %v2879 = vpack.c.b16 %v2859, %v2859
        %v2880 = vpack.c.b16 %v2860, %v2860
        %v2881 = vpack.c.b16 %v2861, %v2861
        %v2882 = vpack.c.b16 %v2862, %v2862
        %v2884 = vshrl.u32 %v2863, 16
        %v2886 = vrot.slane %v2884, 7
        %v2887 = vshll.u32 %v2863, 16
        %v2889 = vor.u32 %v2886, %v2887
        %v2890 = vrot.slane %v2886, 4
        %v2892 = vshrl.u32 %v2864, 16
        %v2894 = vrot.slane %v2892, 7
        %v2895 = vshll.u32 %v2864, 16
        %v2897 = vor.u32 %v2894, %v2895
        %v2898 = vsel %vm854, %v2890, %v2897
        %v2899 = vrot.slane %v2894, 4
        %v2901 = vshrl.u32 %v2865, 16
        %v2903 = vrot.slane %v2901, 7
        %v2904 = vshll.u32 %v2865, 16
        %v2906 = vor.u32 %v2903, %v2904
        %v2907 = vrot.slane %v2903, 4
        %v2909 = vshrl.u32 %v2866, 16
        %v2911 = vrot.slane %v2909, 7
        %v2912 = vshll.u32 %v2866, 16
        %v2914 = vor.u32 %v2911, %v2912
        %v2915 = vsel %vm854, %v2907, %v2914
        %v2916 = vrot.slane %v2911, 4
        %v2918 = vshrl.u32 %v2867, 16
        %v2920 = vrot.slane %v2918, 7
        %v2921 = vshll.u32 %v2867, 16
        %v2923 = vor.u32 %v2920, %v2921
        %v2924 = vrot.slane %v2920, 4
        %v2926 = vshrl.u32 %v2868, 16
        %v2928 = vrot.slane %v2926, 7
        %v2929 = vshll.u32 %v2868, 16
        %v2931 = vor.u32 %v2928, %v2929
        %v2932 = vsel %vm854, %v2924, %v2931
        %v2933 = vrot.slane %v2928, 4
        %v2935 = vshrl.u32 %v2869, 16
        %v2937 = vrot.slane %v2935, 7
        %v2938 = vshll.u32 %v2869, 16
        %v2940 = vor.u32 %v2937, %v2938
        %v2941 = vrot.slane %v2937, 4
        %v2943 = vshrl.u32 %v2870, 16
        %v2945 = vrot.slane %v2943, 7
        %v2946 = vshll.u32 %v2870, 16
        %v2948 = vor.u32 %v2945, %v2946
        %v2949 = vsel %vm854, %v2941, %v2948
        %v2950 = vrot.slane %v2945, 4
        %v2952 = vshrl.u32 %v2871, 16
        %v2954 = vrot.slane %v2952, 7
        %v2955 = vshll.u32 %v2871, 16
        %v2957 = vor.u32 %v2954, %v2955
        %v2958 = vrot.slane %v2954, 4
        %v2960 = vshrl.u32 %v2872, 16
        %v2962 = vrot.slane %v2960, 7
        %v2963 = vshll.u32 %v2872, 16
        %v2965 = vor.u32 %v2962, %v2963
        %v2966 = vsel %vm854, %v2958, %v2965
        %v2967 = vrot.slane %v2962, 4
        %v2969 = vshrl.u32 %v2873, 16
        %v2971 = vrot.slane %v2969, 7
        %v2972 = vshll.u32 %v2873, 16
        %v2974 = vor.u32 %v2971, %v2972
        %v2975 = vrot.slane %v2971, 4
        %v2977 = vshrl.u32 %v2874, 16
        %v2979 = vrot.slane %v2977, 7
        %v2980 = vshll.u32 %v2874, 16
        %v2982 = vor.u32 %v2979, %v2980
        %v2983 = vsel %vm854, %v2975, %v2982
        %v2984 = vrot.slane %v2979, 4
        %v2986 = vshrl.u32 %v2875, 16
        %v2988 = vrot.slane %v2986, 7
        %v2989 = vshll.u32 %v2875, 16
        %v2991 = vor.u32 %v2988, %v2989
        %v2992 = vrot.slane %v2988, 4
        %v2994 = vshrl.u32 %v2876, 16
        %v2996 = vrot.slane %v2994, 7
        %v2997 = vshll.u32 %v2876, 16
        %v2999 = vor.u32 %v2996, %v2997
        %v3000 = vsel %vm854, %v2992, %v2999
        %v3001 = vrot.slane %v2996, 4
        %v3003 = vshrl.u32 %v2877, 16
        %v3005 = vrot.slane %v3003, 7
        %v3006 = vshll.u32 %v2877, 16
        %v3008 = vor.u32 %v3005, %v3006
        %v3009 = vrot.slane %v3005, 4
        %v3011 = vshrl.u32 %v2878, 16
        %v3013 = vrot.slane %v3011, 7
        %v3014 = vshll.u32 %v2878, 16
        %v3016 = vor.u32 %v3013, %v3014
        %v3017 = vsel %vm854, %v3009, %v3016
        %v3018 = vrot.slane %v3013, 4
        %v3020 = vshrl.u32 %v2879, 16
        %v3022 = vrot.slane %v3020, 7
        %v3023 = vshll.u32 %v2879, 16
        %v3025 = vor.u32 %v3022, %v3023
        %v3026 = vrot.slane %v3022, 4
        %v3028 = vshrl.u32 %v2880, 16
        %v3030 = vrot.slane %v3028, 7
        %v3031 = vshll.u32 %v2880, 16
        %v3033 = vor.u32 %v3030, %v3031
        %v3034 = vsel %vm854, %v3026, %v3033
        %v3035 = vrot.slane %v3030, 4
        %v3037 = vshrl.u32 %v2881, 16
        %v3039 = vrot.slane %v3037, 7
        %v3040 = vshll.u32 %v2881, 16
        %v3042 = vor.u32 %v3039, %v3040
        %v3043 = vrot.slane %v3039, 4
        %v3045 = vshrl.u32 %v2882, 16
        %v3047 = vrot.slane %v3045, 7
        %v3048 = vshll.u32 %v2882, 16
        %v3050 = vor.u32 %v3047, %v3048
        %v3051 = vsel %vm854, %v3043, %v3050
        %v3052 = vrot.slane %v3047, 4
        %v3083 = vsel %vm1096, %v2889, %v1219
        %3084 = vst [vmem:[#allocation2] sm:$0xf] %v3083
        %3085 = vst.msk [vmem:[#allocation2 + $0x4] sm:$0xf] %vm1100, %v2898
        %v3086 = vld [vmem:[#allocation2 + $0x8] sm:$0x1]
        %v3087 = vsel %vm401, %v2899, %v3086
        %3088 = vst [vmem:[#allocation2 + $0x8] sm:$0x1] %v3087
        %v3089 = vld [vmem:[#allocation2 + $0xc] sm:$0xf]
        %v3090 = vsel %vm1096, %v2906, %v3089
        %3091 = vst [vmem:[#allocation2 + $0xc] sm:$0xf] %v3090
        %3092 = vst.msk [vmem:[#allocation2 + $0x10] sm:$0xf] %vm1100, %v2915
        %v3093 = vld [vmem:[#allocation2 + $0x14] sm:$0x1]
        %v3094 = vsel %vm401, %v2916, %v3093
        %3095 = vst [vmem:[#allocation2 + $0x14] sm:$0x1] %v3094
        %v3096 = vld [vmem:[#allocation2 + $0x18] sm:$0xf]
        %v3097 = vsel %vm1096, %v2923, %v3096
        %3098 = vst [vmem:[#allocation2 + $0x18] sm:$0xf] %v3097
        %3099 = vst.msk [vmem:[#allocation2 + $0x1c] sm:$0xf] %vm1100, %v2932
        %v3100 = vld [vmem:[#allocation2 + $0x20] sm:$0x1]
        %v3101 = vsel %vm401, %v2933, %v3100
        %3102 = vst [vmem:[#allocation2 + $0x20] sm:$0x1] %v3101
        %v3103 = vld [vmem:[#allocation2 + $0x24] sm:$0xf]
        %v3104 = vsel %vm1096, %v2940, %v3103
        %3105 = vst [vmem:[#allocation2 + $0x24] sm:$0xf] %v3104
        %3106 = vst.msk [vmem:[#allocation2 + $0x28] sm:$0xf] %vm1100, %v2949
        %v3107 = vld [vmem:[#allocation2 + $0x2c] sm:$0x1]
        %v3108 = vsel %vm401, %v2950, %v3107
        %3109 = vst [vmem:[#allocation2 + $0x2c] sm:$0x1] %v3108
        %v3110 = vld [vmem:[#allocation2 + $0x30] sm:$0xf]
        %v3111 = vsel %vm1096, %v2957, %v3110
        %3112 = vst [vmem:[#allocation2 + $0x30] sm:$0xf] %v3111
        %3113 = vst.msk [vmem:[#allocation2 + $0x34] sm:$0xf] %vm1100, %v2966
        %v3114 = vld [vmem:[#allocation2 + $0x38] sm:$0x1]
        %v3115 = vsel %vm401, %v2967, %v3114
        %3116 = vst [vmem:[#allocation2 + $0x38] sm:$0x1] %v3115
        %v3117 = vld [vmem:[#allocation2 + $0x3c] sm:$0xf]
        %v3118 = vsel %vm1096, %v2974, %v3117
        %3119 = vst [vmem:[#allocation2 + $0x3c] sm:$0xf] %v3118
        %3120 = vst.msk [vmem:[#allocation2 + $0x40] sm:$0xf] %vm1100, %v2983
        %v3121 = vld [vmem:[#allocation2 + $0x44] sm:$0x1]
        %v3122 = vsel %vm401, %v2984, %v3121
        %3123 = vst [vmem:[#allocation2 + $0x44] sm:$0x1] %v3122
        %v3124 = vld [vmem:[#allocation2 + $0x48] sm:$0xf]
        %v3125 = vsel %vm1096, %v2991, %v3124
        %3126 = vst [vmem:[#allocation2 + $0x48] sm:$0xf] %v3125
        %3127 = vst.msk [vmem:[#allocation2 + $0x4c] sm:$0xf] %vm1100, %v3000
        %v3128 = vld [vmem:[#allocation2 + $0x50] sm:$0x1]
        %v3129 = vsel %vm401, %v3001, %v3128
        %3130 = vst [vmem:[#allocation2 + $0x50] sm:$0x1] %v3129
        %v3131 = vld [vmem:[#allocation2 + $0x54] sm:$0xf]
        %v3132 = vsel %vm1096, %v3008, %v3131
        %3133 = vst [vmem:[#allocation2 + $0x54] sm:$0xf] %v3132
        %3134 = vst.msk [vmem:[#allocation2 + $0x58] sm:$0xf] %vm1100, %v3017
        %v3135 = vld [vmem:[#allocation2 + $0x5c] sm:$0x1]
        %v3136 = vsel %vm401, %v3018, %v3135
        %3137 = vst [vmem:[#allocation2 + $0x5c] sm:$0x1] %v3136
        %v3138 = vld [vmem:[#allocation2 + $0x60] sm:$0xf]
        %v3139 = vsel %vm1096, %v3025, %v3138
        %3140 = vst [vmem:[#allocation2 + $0x60] sm:$0xf] %v3139
        %3141 = vst.msk [vmem:[#allocation2 + $0x64] sm:$0xf] %vm1100, %v3034
        %v3142 = vld [vmem:[#allocation2 + $0x68] sm:$0x1]
        %v3143 = vsel %vm401, %v3035, %v3142
        %3144 = vst [vmem:[#allocation2 + $0x68] sm:$0x1] %v3143
        %v3145 = vld [vmem:[#allocation2 + $0x6c] sm:$0xf]
        %v3146 = vsel %vm1096, %v3042, %v3145
        %3147 = vst [vmem:[#allocation2 + $0x6c] sm:$0xf] %v3146
        %3148 = vst.msk [vmem:[#allocation2 + $0x70] sm:$0xf] %vm1100, %v3051
        %v3149 = vld [vmem:[#allocation2 + $0x74] sm:$0x1]
        %v3150 = vsel %vm401, %v3052, %v3149
        %3151 = vst [vmem:[#allocation2 + $0x74] sm:$0x1] %v3150
        // Predicated region
        $region85: #{tpu_custom_call.1} parent=47 // pred_check
          %p3152 = pneg %p1182
        $region86: #{tpu_custom_call.1} parent=47 // pred_check_branch
          %3154 = sbr.rel (%p3152) target = $region88
        $region87: #{tpu_custom_call.1} parent=47 // pred_region
          %v3155 = vld [vmem:[#allocation2] sm:$0xf]
          %v3156 = vsel %vm1096, 0, %v3155
          %3157 = vst [vmem:[#allocation2] sm:$0xf] %v3156
          %3158 = vst.msk [vmem:[#allocation2 + $0x4] sm:$0xf] %vm1100, 0
          %v3159 = vld [vmem:[#allocation2 + $0x8] sm:$0x1]
          %v3160 = vsel %vm401, 0, %v3159
          %3161 = vst [vmem:[#allocation2 + $0x8] sm:$0x1] %v3160
        $region88: #{tpu_custom_call.1} parent=47 // pred_fallthru
          _
        // Predicated region
        $region89: #{tpu_custom_call.1} parent=47 // pred_check
          %p3162 = pneg %p1200
        $region90: #{tpu_custom_call.1} parent=47 // pred_check_branch
          %3164 = sbr.rel (%p3162) target = $region92
        $region91: #{tpu_custom_call.1} parent=47 // pred_region
          %s3165 = scalar_lea.vmem [#allocation2], 108
          %v3166 = vld [vmem:[%s3165] sm:$0xf]
          %v3167 = vsel %vm1096, 0, %v3166
          %3168 = vst [vmem:[%s3165] sm:$0xf] %v3167
          %3169 = vst.msk [vmem:[%s3165 + $0x4] sm:$0xf] %vm1100, 0
          %v3170 = vld [vmem:[%s3165 + $0x8] sm:$0x1]
          %v3171 = vsel %vm401, 0, %v3170
          %3172 = vst [vmem:[%s3165 + $0x8] sm:$0x1] %v3171
        $region92: #{tpu_custom_call.1} parent=47 // pred_fallthru
          _
        %v3173 = vld [vmem:[#allocation2] sm:$0xf]
        %v3174 = vld [vmem:[#allocation2 + $0x4] sm:$0xf]
        %v3175 = vld [vmem:[#allocation2 + $0xc] sm:$0xf]
        %v3176 = vld [vmem:[#allocation2 + $0x10] sm:$0xf]
        %v3177 = vld [vmem:[#allocation2 + $0x18] sm:$0xf]
        %v3178 = vld [vmem:[#allocation2 + $0x1c] sm:$0xf]
        %v3179 = vld [vmem:[#allocation2 + $0x24] sm:$0xf]
        %v3180 = vld [vmem:[#allocation2 + $0x28] sm:$0xf]
        %v3181 = vld [vmem:[#allocation2 + $0x30] sm:$0xf]
        %v3182 = vld [vmem:[#allocation2 + $0x34] sm:$0xf]
        %v3183 = vld [vmem:[#allocation2 + $0x3c] sm:$0xf]
        %v3184 = vld [vmem:[#allocation2 + $0x40] sm:$0xf]
        %v3185 = vld [vmem:[#allocation2 + $0x48] sm:$0xf]
        %v3186 = vld [vmem:[#allocation2 + $0x4c] sm:$0xf]
        %v3187 = vld [vmem:[#allocation2 + $0x54] sm:$0xf]
        %v3188 = vld [vmem:[#allocation2 + $0x58] sm:$0xf]
        %v3189 = vld [vmem:[#allocation2 + $0x8] sm:$0x1]
        %v3190 = vld [vmem:[#allocation2 + $0x14] sm:$0x1]
        %v3191 = vld [vmem:[#allocation2 + $0x20] sm:$0x1]
        %v3192 = vld [vmem:[#allocation2 + $0x2c] sm:$0x1]
        %v3193 = vld [vmem:[#allocation2 + $0x38] sm:$0x1]
        %v3194 = vld [vmem:[#allocation2 + $0x44] sm:$0x1]
        %v3195 = vld [vmem:[#allocation2 + $0x50] sm:$0x1]
        %v3196 = vld [vmem:[#allocation2 + $0x5c] sm:$0x1]
        %v3197 = vld [vmem:[#allocation2] sm:$0xe]
        %v3198 = vld [vmem:[#allocation2 + $0xc] sm:$0xe]
        %v3199 = vld [vmem:[#allocation2 + $0x18] sm:$0xe]
        %v3200 = vld [vmem:[#allocation2 + $0x24] sm:$0xe]
        %v3201 = vld [vmem:[#allocation2 + $0x30] sm:$0xe]
        %v3202 = vld [vmem:[#allocation2 + $0x3c] sm:$0xe]
        %v3203 = vld [vmem:[#allocation2 + $0x48] sm:$0xe]
        %v3204 = vld [vmem:[#allocation2 + $0x54] sm:$0xe]
        %v3205 = vld [vmem:[%s1259] sm:$0xf]
        %v3206 = vld [vmem:[%s1259 + $0x4] sm:$0xf]
        %v3207 = vld [vmem:[%s1259 + $0xc] sm:$0xf]
        %v3208 = vld [vmem:[%s1259 + $0x10] sm:$0xf]
        %v3209 = vld [vmem:[%s1259 + $0x18] sm:$0xf]
        %v3210 = vld [vmem:[%s1259 + $0x1c] sm:$0xf]
        %v3211 = vld [vmem:[%s1259 + $0x24] sm:$0xf]
        %v3212 = vld [vmem:[%s1259 + $0x28] sm:$0xf]
        %v3213 = vld [vmem:[%s1259 + $0x30] sm:$0xf]
        %v3214 = vld [vmem:[%s1259 + $0x34] sm:$0xf]
        %v3215 = vld [vmem:[%s1259 + $0x3c] sm:$0xf]
        %v3216 = vld [vmem:[%s1259 + $0x40] sm:$0xf]
        %v3217 = vld [vmem:[%s1259 + $0x48] sm:$0xf]
        %v3218 = vld [vmem:[%s1259 + $0x4c] sm:$0xf]
        %v3219 = vld [vmem:[%s1259 + $0x54] sm:$0xf]
        %v3220 = vld [vmem:[%s1259 + $0x58] sm:$0xf]
        %v3221 = vld [vmem:[%s1259 + $0x8] sm:$0x1]
        %v3222 = vld [vmem:[%s1259 + $0x14] sm:$0x1]
        %v3223 = vld [vmem:[%s1259 + $0x20] sm:$0x1]
        %v3224 = vld [vmem:[%s1259 + $0x2c] sm:$0x1]
        %v3225 = vld [vmem:[%s1259 + $0x38] sm:$0x1]
        %v3226 = vld [vmem:[%s1259 + $0x44] sm:$0x1]
        %v3227 = vld [vmem:[%s1259 + $0x50] sm:$0x1]
        %v3228 = vld [vmem:[%s1259 + $0x5c] sm:$0x1]
        %v3229 = vld [vmem:[%s1259] sm:$0xe]
        %v3230 = vld [vmem:[%s1259 + $0xc] sm:$0xe]
        %v3231 = vld [vmem:[%s1259 + $0x18] sm:$0xe]
        %v3232 = vld [vmem:[%s1259 + $0x24] sm:$0xe]
        %v3233 = vld [vmem:[%s1259 + $0x30] sm:$0xe]
        %v3234 = vld [vmem:[%s1259 + $0x3c] sm:$0xe]
        %v3235 = vld [vmem:[%s1259 + $0x48] sm:$0xe]
        %v3236 = vld [vmem:[%s1259 + $0x54] sm:$0xe]
        %v3237 = vld [vmem:[%s1300] sm:$0xf]
        %v3238 = vld [vmem:[%s1300 + $0x4] sm:$0xf]
        %v3239 = vld [vmem:[%s1300 + $0xc] sm:$0xf]
        %v3240 = vld [vmem:[%s1300 + $0x10] sm:$0xf]
        %v3241 = vld [vmem:[%s1300 + $0x18] sm:$0xf]
        %v3242 = vld [vmem:[%s1300 + $0x1c] sm:$0xf]
        %v3243 = vld [vmem:[%s1300 + $0x24] sm:$0xf]
        %v3244 = vld [vmem:[%s1300 + $0x28] sm:$0xf]
        %v3245 = vld [vmem:[%s1300 + $0x30] sm:$0xf]
        %v3246 = vld [vmem:[%s1300 + $0x34] sm:$0xf]
        %v3247 = vld [vmem:[%s1300 + $0x3c] sm:$0xf]
        %v3248 = vld [vmem:[%s1300 + $0x40] sm:$0xf]
        %v3249 = vld [vmem:[%s1300 + $0x48] sm:$0xf]
        %v3250 = vld [vmem:[%s1300 + $0x4c] sm:$0xf]
        %v3251 = vld [vmem:[%s1300 + $0x54] sm:$0xf]
        %v3252 = vld [vmem:[%s1300 + $0x58] sm:$0xf]
        %v3253 = vld [vmem:[%s1300 + $0x8] sm:$0x1]
        %v3254 = vld [vmem:[%s1300 + $0x14] sm:$0x1]
        %v3255 = vld [vmem:[%s1300 + $0x20] sm:$0x1]
        %v3256 = vld [vmem:[%s1300 + $0x2c] sm:$0x1]
        %v3257 = vld [vmem:[%s1300 + $0x38] sm:$0x1]
        %v3258 = vld [vmem:[%s1300 + $0x44] sm:$0x1]
        %v3259 = vld [vmem:[%s1300 + $0x50] sm:$0x1]
        %v3260 = vld [vmem:[%s1300 + $0x5c] sm:$0x1]
        %v3261 = vld [vmem:[%s1300] sm:$0xe]
        %v3262 = vld [vmem:[%s1300 + $0xc] sm:$0xe]
        %v3263 = vld [vmem:[%s1300 + $0x18] sm:$0xe]
        %v3264 = vld [vmem:[%s1300 + $0x24] sm:$0xe]
        %v3265 = vld [vmem:[%s1300 + $0x30] sm:$0xe]
        %v3266 = vld [vmem:[%s1300 + $0x3c] sm:$0xe]
        %v3267 = vld [vmem:[%s1300 + $0x48] sm:$0xe]
        %v3268 = vld [vmem:[%s1300 + $0x54] sm:$0xe]
        %v3285 = vunpack.c.l.b16 %v3173
        %v3286 = vunpack.c.l.b16 %v3174
        %v3287 = vunpack.c.l.b16 %v3175
        %v3288 = vunpack.c.l.b16 %v3176
        %v3289 = vunpack.c.l.b16 %v3177
        %v3290 = vunpack.c.l.b16 %v3178
        %v3291 = vunpack.c.l.b16 %v3179
        %v3292 = vunpack.c.l.b16 %v3180
        %v3293 = vunpack.c.l.b16 %v3181
        %v3294 = vunpack.c.l.b16 %v3182
        %v3295 = vunpack.c.l.b16 %v3183
        %v3296 = vunpack.c.l.b16 %v3184
        %v3297 = vunpack.c.l.b16 %v3185
        %v3298 = vunpack.c.l.b16 %v3186
        %v3299 = vunpack.c.l.b16 %v3187
        %v3300 = vunpack.c.l.b16 %v3188
        %v3301 = vpack.c.b16 %v3286, %v3285
        %v3302 = vpack.c.b16 %v3288, %v3287
        %v3303 = vpack.c.b16 %v3290, %v3289
        %v3304 = vpack.c.b16 %v3292, %v3291
        %v3305 = vpack.c.b16 %v3294, %v3293
        %v3306 = vpack.c.b16 %v3296, %v3295
        %v3307 = vpack.c.b16 %v3298, %v3297
        %v3308 = vpack.c.b16 %v3300, %v3299
        %v3317 = vunpack.c.l.b16 %v3189
        %v3318 = vunpack.c.l.b16 %v3190
        %v3319 = vunpack.c.l.b16 %v3191
        %v3320 = vunpack.c.l.b16 %v3192
        %v3321 = vunpack.c.l.b16 %v3193
        %v3322 = vunpack.c.l.b16 %v3194
        %v3323 = vunpack.c.l.b16 %v3195
        %v3324 = vunpack.c.l.b16 %v3196
        %v3325 = vpack.c.b16 %v3317, %v3317
        %v3326 = vpack.c.b16 %v3318, %v3318
        %v3327 = vpack.c.b16 %v3319, %v3319
        %v3328 = vpack.c.b16 %v3320, %v3320
        %v3329 = vpack.c.b16 %v3321, %v3321
        %v3330 = vpack.c.b16 %v3322, %v3322
        %v3331 = vpack.c.b16 %v3323, %v3323
        %v3332 = vpack.c.b16 %v3324, %v3324
        %v3334 = vshrl.u32 %v3301, 16
        %v3336 = vshll.u32 %v3301, 16
        %v3338 = vrot.slane %v3336, 1
        %v3339 = vor.u32 %v3334, %v3338
        %v3341 = vshll.u32 %v3325, 16
        %v3343 = vrot.slane %v3341, 1
        %v3344 = vsel %vm1421, %v3339, %v3343
        %v3346 = vshrl.u32 %v3302, 16
        %v3348 = vshll.u32 %v3302, 16
        %v3350 = vrot.slane %v3348, 1
        %v3351 = vor.u32 %v3346, %v3350
        %v3353 = vshll.u32 %v3326, 16
        %v3355 = vrot.slane %v3353, 1
        %v3356 = vsel %vm1421, %v3351, %v3355
        %v3358 = vshrl.u32 %v3303, 16
        %v3360 = vshll.u32 %v3303, 16
        %v3362 = vrot.slane %v3360, 1
        %v3363 = vor.u32 %v3358, %v3362
        %v3365 = vshll.u32 %v3327, 16
        %v3367 = vrot.slane %v3365, 1
        %v3368 = vsel %vm1421, %v3363, %v3367
        %v3370 = vshrl.u32 %v3304, 16
        %v3372 = vshll.u32 %v3304, 16
        %v3374 = vrot.slane %v3372, 1
        %v3375 = vor.u32 %v3370, %v3374
        %v3377 = vshll.u32 %v3328, 16
        %v3379 = vrot.slane %v3377, 1
        %v3380 = vsel %vm1421, %v3375, %v3379
        %v3382 = vshrl.u32 %v3305, 16
        %v3384 = vshll.u32 %v3305, 16
        %v3386 = vrot.slane %v3384, 1
        %v3387 = vor.u32 %v3382, %v3386
        %v3389 = vshll.u32 %v3329, 16
        %v3391 = vrot.slane %v3389, 1
        %v3392 = vsel %vm1421, %v3387, %v3391
        %v3394 = vshrl.u32 %v3306, 16
        %v3396 = vshll.u32 %v3306, 16
        %v3398 = vrot.slane %v3396, 1
        %v3399 = vor.u32 %v3394, %v3398
        %v3401 = vshll.u32 %v3330, 16
        %v3403 = vrot.slane %v3401, 1
        %v3404 = vsel %vm1421, %v3399, %v3403
        %v3406 = vshrl.u32 %v3307, 16
        %v3408 = vshll.u32 %v3307, 16
        %v3410 = vrot.slane %v3408, 1
        %v3411 = vor.u32 %v3406, %v3410
        %v3413 = vshll.u32 %v3331, 16
        %v3415 = vrot.slane %v3413, 1
        %v3416 = vsel %vm1421, %v3411, %v3415
        %v3418 = vshrl.u32 %v3308, 16
        %v3420 = vshll.u32 %v3308, 16
        %v3422 = vrot.slane %v3420, 1
        %v3423 = vor.u32 %v3418, %v3422
        %v3425 = vshll.u32 %v3332, 16
        %v3427 = vrot.slane %v3425, 1
        %v3428 = vsel %vm1421, %v3423, %v3427
        %3429 = vrot.lane.b32.xlu0 %v3344, 32
        %v3430 = vpop.permute.xlu0 %3429
        %3431 = vrot.lane.b32.xlu0 %v3356, 32
        %v3432 = vpop.permute.xlu0 %3431
        %3433 = vrot.lane.b32.xlu0 %v3368, 32
        %v3434 = vpop.permute.xlu0 %3433
        %3435 = vrot.lane.b32.xlu0 %v3380, 32
        %v3436 = vpop.permute.xlu0 %3435
        %3437 = vrot.lane.b32.xlu0 %v3392, 32
        %v3438 = vpop.permute.xlu0 %3437
        %3439 = vrot.lane.b32.xlu0 %v3404, 32
        %v3440 = vpop.permute.xlu0 %3439
        %3441 = vrot.lane.b32.xlu0 %v3416, 32
        %v3442 = vpop.permute.xlu0 %3441
        %3443 = vrot.lane.b32.xlu0 %v3428, 32
        %v3444 = vpop.permute.xlu0 %3443
        %v3453 = vunpack.c.l.b16 %v3197
        %v3454 = vunpack.c.l.b16 %v3198
        %v3455 = vunpack.c.l.b16 %v3199
        %v3456 = vunpack.c.l.b16 %v3200
        %v3457 = vunpack.c.l.b16 %v3201
        %v3458 = vunpack.c.l.b16 %v3202
        %v3459 = vunpack.c.l.b16 %v3203
        %v3460 = vunpack.c.l.b16 %v3204
        %v3461 = vpack.c.b16 %v3286, %v3453
        %v3462 = vpack.c.b16 %v3288, %v3454
        %v3463 = vpack.c.b16 %v3290, %v3455
        %v3464 = vpack.c.b16 %v3292, %v3456
        %v3465 = vpack.c.b16 %v3294, %v3457
        %v3466 = vpack.c.b16 %v3296, %v3458
        %v3467 = vpack.c.b16 %v3298, %v3459
        %v3468 = vpack.c.b16 %v3300, %v3460
        %v3469 = vrot.slane %v3461, 1
        %v3470 = vrot.slane %v3325, 1
        %v3471 = vsel %vm1592, %v3469, %v3470
        %v3472 = vrot.slane %v3462, 1
        %v3473 = vrot.slane %v3326, 1
        %v3474 = vsel %vm1592, %v3472, %v3473
        %v3475 = vrot.slane %v3463, 1
        %v3476 = vrot.slane %v3327, 1
        %v3477 = vsel %vm1592, %v3475, %v3476
        %v3478 = vrot.slane %v3464, 1
        %v3479 = vrot.slane %v3328, 1
        %v3480 = vsel %vm1592, %v3478, %v3479
        %v3481 = vrot.slane %v3465, 1
        %v3482 = vrot.slane %v3329, 1
        %v3483 = vsel %vm1592, %v3481, %v3482
        %v3484 = vrot.slane %v3466, 1
        %v3485 = vrot.slane %v3330, 1
        %v3486 = vsel %vm1592, %v3484, %v3485
        %v3487 = vrot.slane %v3467, 1
        %v3488 = vrot.slane %v3331, 1
        %v3489 = vsel %vm1592, %v3487, %v3488
        %v3490 = vrot.slane %v3468, 1
        %v3491 = vrot.slane %v3332, 1
        %v3492 = vsel %vm1592, %v3490, %v3491
        %3493 = vrot.lane.b32.xlu0 %v3471, 64
        %v3494 = vpop.permute.xlu0 %3493
        %3495 = vrot.lane.b32.xlu0 %v3474, 64
        %v3496 = vpop.permute.xlu0 %3495
        %3497 = vrot.lane.b32.xlu0 %v3477, 64
        %v3498 = vpop.permute.xlu0 %3497
        %3499 = vrot.lane.b32.xlu0 %v3480, 64
        %v3500 = vpop.permute.xlu0 %3499
        %3501 = vrot.lane.b32.xlu0 %v3483, 64
        %v3502 = vpop.permute.xlu0 %3501
        %3503 = vrot.lane.b32.xlu0 %v3486, 64
        %v3504 = vpop.permute.xlu0 %3503
        %3505 = vrot.lane.b32.xlu0 %v3489, 64
        %v3506 = vpop.permute.xlu0 %3505
        %3507 = vrot.lane.b32.xlu0 %v3492, 64
        %v3508 = vpop.permute.xlu0 %3507
        %v3525 = vunpack.c.l.b16 %v3205
        %v3526 = vunpack.c.l.b16 %v3206
        %v3527 = vunpack.c.l.b16 %v3207
        %v3528 = vunpack.c.l.b16 %v3208
        %v3529 = vunpack.c.l.b16 %v3209
        %v3530 = vunpack.c.l.b16 %v3210
        %v3531 = vunpack.c.l.b16 %v3211
        %v3532 = vunpack.c.l.b16 %v3212
        %v3533 = vunpack.c.l.b16 %v3213
        %v3534 = vunpack.c.l.b16 %v3214
        %v3535 = vunpack.c.l.b16 %v3215
        %v3536 = vunpack.c.l.b16 %v3216
        %v3537 = vunpack.c.l.b16 %v3217
        %v3538 = vunpack.c.l.b16 %v3218
        %v3539 = vunpack.c.l.b16 %v3219
        %v3540 = vunpack.c.l.b16 %v3220
        %v3541 = vpack.c.b16 %v3526, %v3525
        %v3542 = vpack.c.b16 %v3528, %v3527
        %v3543 = vpack.c.b16 %v3530, %v3529
        %v3544 = vpack.c.b16 %v3532, %v3531
        %v3545 = vpack.c.b16 %v3534, %v3533
        %v3546 = vpack.c.b16 %v3536, %v3535
        %v3547 = vpack.c.b16 %v3538, %v3537
        %v3548 = vpack.c.b16 %v3540, %v3539
        %3549 = vrot.lane.b32.xlu0 %v3541, 96
        %v3550 = vpop.permute.xlu0 %3549
        %3551 = vrot.lane.b32.xlu0 %v3542, 96
        %v3552 = vpop.permute.xlu0 %3551
        %3553 = vrot.lane.b32.xlu0 %v3543, 96
        %v3554 = vpop.permute.xlu0 %3553
        %3555 = vrot.lane.b32.xlu0 %v3544, 96
        %v3556 = vpop.permute.xlu0 %3555
        %3557 = vrot.lane.b32.xlu0 %v3545, 96
        %v3558 = vpop.permute.xlu0 %3557
        %3559 = vrot.lane.b32.xlu0 %v3546, 96
        %v3560 = vpop.permute.xlu0 %3559
        %3561 = vrot.lane.b32.xlu0 %v3547, 96
        %v3562 = vpop.permute.xlu0 %3561
        %3563 = vrot.lane.b32.xlu0 %v3548, 96
        %v3564 = vpop.permute.xlu0 %3563
        %v3573 = vunpack.c.l.b16 %v3221
        %v3574 = vunpack.c.l.b16 %v3222
        %v3575 = vunpack.c.l.b16 %v3223
        %v3576 = vunpack.c.l.b16 %v3224
        %v3577 = vunpack.c.l.b16 %v3225
        %v3578 = vunpack.c.l.b16 %v3226
        %v3579 = vunpack.c.l.b16 %v3227
        %v3580 = vunpack.c.l.b16 %v3228
        %v3581 = vpack.c.b16 %v3573, %v3573
        %v3582 = vpack.c.b16 %v3574, %v3574
        %v3583 = vpack.c.b16 %v3575, %v3575
        %v3584 = vpack.c.b16 %v3576, %v3576
        %v3585 = vpack.c.b16 %v3577, %v3577
        %v3586 = vpack.c.b16 %v3578, %v3578
        %v3587 = vpack.c.b16 %v3579, %v3579
        %v3588 = vpack.c.b16 %v3580, %v3580
        %v3590 = vshrl.u32 %v3541, 16
        %v3592 = vshll.u32 %v3541, 16
        %v3594 = vrot.slane %v3592, 1
        %v3595 = vor.u32 %v3590, %v3594
        %v3597 = vshll.u32 %v3581, 16
        %v3599 = vrot.slane %v3597, 1
        %v3600 = vsel %vm1421, %v3595, %v3599
        %v3602 = vshrl.u32 %v3542, 16
        %v3604 = vshll.u32 %v3542, 16
        %v3606 = vrot.slane %v3604, 1
        %v3607 = vor.u32 %v3602, %v3606
        %v3609 = vshll.u32 %v3582, 16
        %v3611 = vrot.slane %v3609, 1
        %v3612 = vsel %vm1421, %v3607, %v3611
        %v3614 = vshrl.u32 %v3543, 16
        %v3616 = vshll.u32 %v3543, 16
        %v3618 = vrot.slane %v3616, 1
        %v3619 = vor.u32 %v3614, %v3618
        %v3621 = vshll.u32 %v3583, 16
        %v3623 = vrot.slane %v3621, 1
        %v3624 = vsel %vm1421, %v3619, %v3623
        %v3626 = vshrl.u32 %v3544, 16
        %v3628 = vshll.u32 %v3544, 16
        %v3630 = vrot.slane %v3628, 1
        %v3631 = vor.u32 %v3626, %v3630
        %v3633 = vshll.u32 %v3584, 16
        %v3635 = vrot.slane %v3633, 1
        %v3636 = vsel %vm1421, %v3631, %v3635
        %v3638 = vshrl.u32 %v3545, 16
        %v3640 = vshll.u32 %v3545, 16
        %v3642 = vrot.slane %v3640, 1
        %v3643 = vor.u32 %v3638, %v3642
        %v3645 = vshll.u32 %v3585, 16
        %v3647 = vrot.slane %v3645, 1
        %v3648 = vsel %vm1421, %v3643, %v3647
        %v3650 = vshrl.u32 %v3546, 16
        %v3652 = vshll.u32 %v3546, 16
        %v3654 = vrot.slane %v3652, 1
        %v3655 = vor.u32 %v3650, %v3654
        %v3657 = vshll.u32 %v3586, 16
        %v3659 = vrot.slane %v3657, 1
        %v3660 = vsel %vm1421, %v3655, %v3659
        %v3662 = vshrl.u32 %v3547, 16
        %v3664 = vshll.u32 %v3547, 16
        %v3666 = vrot.slane %v3664, 1
        %v3667 = vor.u32 %v3662, %v3666
        %v3669 = vshll.u32 %v3587, 16
        %v3671 = vrot.slane %v3669, 1
        %v3672 = vsel %vm1421, %v3667, %v3671
        %v3674 = vshrl.u32 %v3548, 16
        %v3676 = vshll.u32 %v3548, 16
        %v3678 = vrot.slane %v3676, 1
        %v3679 = vor.u32 %v3674, %v3678
        %v3681 = vshll.u32 %v3588, 16
        %v3683 = vrot.slane %v3681, 1
        %v3684 = vsel %vm1421, %v3679, %v3683
        %v3693 = vunpack.c.l.b16 %v3229
        %v3694 = vunpack.c.l.b16 %v3230
        %v3695 = vunpack.c.l.b16 %v3231
        %v3696 = vunpack.c.l.b16 %v3232
        %v3697 = vunpack.c.l.b16 %v3233
        %v3698 = vunpack.c.l.b16 %v3234
        %v3699 = vunpack.c.l.b16 %v3235
        %v3700 = vunpack.c.l.b16 %v3236
        %v3701 = vpack.c.b16 %v3526, %v3693
        %v3702 = vpack.c.b16 %v3528, %v3694
        %v3703 = vpack.c.b16 %v3530, %v3695
        %v3704 = vpack.c.b16 %v3532, %v3696
        %v3705 = vpack.c.b16 %v3534, %v3697
        %v3706 = vpack.c.b16 %v3536, %v3698
        %v3707 = vpack.c.b16 %v3538, %v3699
        %v3708 = vpack.c.b16 %v3540, %v3700
        %v3709 = vrot.slane %v3701, 1
        %v3710 = vrot.slane %v3581, 1
        %v3711 = vsel %vm1592, %v3709, %v3710
        %v3712 = vrot.slane %v3702, 1
        %v3713 = vrot.slane %v3582, 1
        %v3714 = vsel %vm1592, %v3712, %v3713
        %v3715 = vrot.slane %v3703, 1
        %v3716 = vrot.slane %v3583, 1
        %v3717 = vsel %vm1592, %v3715, %v3716
        %v3718 = vrot.slane %v3704, 1
        %v3719 = vrot.slane %v3584, 1
        %v3720 = vsel %vm1592, %v3718, %v3719
        %v3721 = vrot.slane %v3705, 1
        %v3722 = vrot.slane %v3585, 1
        %v3723 = vsel %vm1592, %v3721, %v3722
        %v3724 = vrot.slane %v3706, 1
        %v3725 = vrot.slane %v3586, 1
        %v3726 = vsel %vm1592, %v3724, %v3725
        %v3727 = vrot.slane %v3707, 1
        %v3728 = vrot.slane %v3587, 1
        %v3729 = vsel %vm1592, %v3727, %v3728
        %v3730 = vrot.slane %v3708, 1
        %v3731 = vrot.slane %v3588, 1
        %v3732 = vsel %vm1592, %v3730, %v3731
        %3733 = vrot.lane.b32.xlu0 %v3711, 32
        %v3734 = vpop.permute.xlu0 %3733
        %3735 = vrot.lane.b32.xlu0 %v3714, 32
        %v3736 = vpop.permute.xlu0 %3735
        %3737 = vrot.lane.b32.xlu0 %v3717, 32
        %v3738 = vpop.permute.xlu0 %3737
        %3739 = vrot.lane.b32.xlu0 %v3720, 32
        %v3740 = vpop.permute.xlu0 %3739
        %3741 = vrot.lane.b32.xlu0 %v3723, 32
        %v3742 = vpop.permute.xlu0 %3741
        %3743 = vrot.lane.b32.xlu0 %v3726, 32
        %v3744 = vpop.permute.xlu0 %3743
        %3745 = vrot.lane.b32.xlu0 %v3729, 32
        %v3746 = vpop.permute.xlu0 %3745
        %3747 = vrot.lane.b32.xlu0 %v3732, 32
        %v3748 = vpop.permute.xlu0 %3747
        %v3765 = vunpack.c.l.b16 %v3237
        %v3766 = vunpack.c.l.b16 %v3238
        %v3767 = vunpack.c.l.b16 %v3239
        %v3768 = vunpack.c.l.b16 %v3240
        %v3769 = vunpack.c.l.b16 %v3241
        %v3770 = vunpack.c.l.b16 %v3242
        %v3771 = vunpack.c.l.b16 %v3243
        %v3772 = vunpack.c.l.b16 %v3244
        %v3773 = vunpack.c.l.b16 %v3245
        %v3774 = vunpack.c.l.b16 %v3246
        %v3775 = vunpack.c.l.b16 %v3247
        %v3776 = vunpack.c.l.b16 %v3248
        %v3777 = vunpack.c.l.b16 %v3249
        %v3778 = vunpack.c.l.b16 %v3250
        %v3779 = vunpack.c.l.b16 %v3251
        %v3780 = vunpack.c.l.b16 %v3252
        %v3781 = vpack.c.b16 %v3766, %v3765
        %v3782 = vpack.c.b16 %v3768, %v3767
        %v3783 = vpack.c.b16 %v3770, %v3769
        %v3784 = vpack.c.b16 %v3772, %v3771
        %v3785 = vpack.c.b16 %v3774, %v3773
        %v3786 = vpack.c.b16 %v3776, %v3775
        %v3787 = vpack.c.b16 %v3778, %v3777
        %v3788 = vpack.c.b16 %v3780, %v3779
        %3789 = vrot.lane.b32.xlu0 %v3781, 64
        %v3790 = vpop.permute.xlu0 %3789
        %3791 = vrot.lane.b32.xlu0 %v3782, 64
        %v3792 = vpop.permute.xlu0 %3791
        %3793 = vrot.lane.b32.xlu0 %v3783, 64
        %v3794 = vpop.permute.xlu0 %3793
        %3795 = vrot.lane.b32.xlu0 %v3784, 64
        %v3796 = vpop.permute.xlu0 %3795
        %3797 = vrot.lane.b32.xlu0 %v3785, 64
        %v3798 = vpop.permute.xlu0 %3797
        %3799 = vrot.lane.b32.xlu0 %v3786, 64
        %v3800 = vpop.permute.xlu0 %3799
        %3801 = vrot.lane.b32.xlu0 %v3787, 64
        %v3802 = vpop.permute.xlu0 %3801
        %3803 = vrot.lane.b32.xlu0 %v3788, 64
        %v3804 = vpop.permute.xlu0 %3803
        %v3813 = vunpack.c.l.b16 %v3253
        %v3814 = vunpack.c.l.b16 %v3254
        %v3815 = vunpack.c.l.b16 %v3255
        %v3816 = vunpack.c.l.b16 %v3256
        %v3817 = vunpack.c.l.b16 %v3257
        %v3818 = vunpack.c.l.b16 %v3258
        %v3819 = vunpack.c.l.b16 %v3259
        %v3820 = vunpack.c.l.b16 %v3260
        %v3821 = vpack.c.b16 %v3813, %v3813
        %v3822 = vpack.c.b16 %v3814, %v3814
        %v3823 = vpack.c.b16 %v3815, %v3815
        %v3824 = vpack.c.b16 %v3816, %v3816
        %v3825 = vpack.c.b16 %v3817, %v3817
        %v3826 = vpack.c.b16 %v3818, %v3818
        %v3827 = vpack.c.b16 %v3819, %v3819
        %v3828 = vpack.c.b16 %v3820, %v3820
        %v3830 = vshrl.u32 %v3781, 16
        %v3832 = vshll.u32 %v3781, 16
        %v3834 = vrot.slane %v3832, 1
        %v3835 = vor.u32 %v3830, %v3834
        %v3837 = vshll.u32 %v3821, 16
        %v3839 = vrot.slane %v3837, 1
        %v3840 = vsel %vm1421, %v3835, %v3839
        %v3842 = vshrl.u32 %v3782, 16
        %v3844 = vshll.u32 %v3782, 16
        %v3846 = vrot.slane %v3844, 1
        %v3847 = vor.u32 %v3842, %v3846
        %v3849 = vshll.u32 %v3822, 16
        %v3851 = vrot.slane %v3849, 1
        %v3852 = vsel %vm1421, %v3847, %v3851
        %v3854 = vshrl.u32 %v3783, 16
        %v3856 = vshll.u32 %v3783, 16
        %v3858 = vrot.slane %v3856, 1
        %v3859 = vor.u32 %v3854, %v3858
        %v3861 = vshll.u32 %v3823, 16
        %v3863 = vrot.slane %v3861, 1
        %v3864 = vsel %vm1421, %v3859, %v3863
        %v3866 = vshrl.u32 %v3784, 16
        %v3868 = vshll.u32 %v3784, 16
        %v3870 = vrot.slane %v3868, 1
        %v3871 = vor.u32 %v3866, %v3870
        %v3873 = vshll.u32 %v3824, 16
        %v3875 = vrot.slane %v3873, 1
        %v3876 = vsel %vm1421, %v3871, %v3875
        %v3878 = vshrl.u32 %v3785, 16
        %v3880 = vshll.u32 %v3785, 16
        %v3882 = vrot.slane %v3880, 1
        %v3883 = vor.u32 %v3878, %v3882
        %v3885 = vshll.u32 %v3825, 16
        %v3887 = vrot.slane %v3885, 1
        %v3888 = vsel %vm1421, %v3883, %v3887
        %v3890 = vshrl.u32 %v3786, 16
        %v3892 = vshll.u32 %v3786, 16
        %v3894 = vrot.slane %v3892, 1
        %v3895 = vor.u32 %v3890, %v3894
        %v3897 = vshll.u32 %v3826, 16
        %v3899 = vrot.slane %v3897, 1
        %v3900 = vsel %vm1421, %v3895, %v3899
        %v3902 = vshrl.u32 %v3787, 16
        %v3904 = vshll.u32 %v3787, 16
        %v3906 = vrot.slane %v3904, 1
        %v3907 = vor.u32 %v3902, %v3906
        %v3909 = vshll.u32 %v3827, 16
        %v3911 = vrot.slane %v3909, 1
        %v3912 = vsel %vm1421, %v3907, %v3911
        %v3914 = vshrl.u32 %v3788, 16
        %v3916 = vshll.u32 %v3788, 16
        %v3918 = vrot.slane %v3916, 1
        %v3919 = vor.u32 %v3914, %v3918
        %v3921 = vshll.u32 %v3828, 16
        %v3923 = vrot.slane %v3921, 1
        %v3924 = vsel %vm1421, %v3919, %v3923
        %3925 = vrot.lane.b32.xlu0 %v3840, 96
        %v3926 = vpop.permute.xlu0 %3925
        %3927 = vrot.lane.b32.xlu0 %v3852, 96
        %v3928 = vpop.permute.xlu0 %3927
        %3929 = vrot.lane.b32.xlu0 %v3864, 96
        %v3930 = vpop.permute.xlu0 %3929
        %3931 = vrot.lane.b32.xlu0 %v3876, 96
        %v3932 = vpop.permute.xlu0 %3931
        %3933 = vrot.lane.b32.xlu0 %v3888, 96
        %v3934 = vpop.permute.xlu0 %3933
        %3935 = vrot.lane.b32.xlu0 %v3900, 96
        %v3936 = vpop.permute.xlu0 %3935
        %3937 = vrot.lane.b32.xlu0 %v3912, 96
        %v3938 = vpop.permute.xlu0 %3937
        %3939 = vrot.lane.b32.xlu0 %v3924, 96
        %v3940 = vpop.permute.xlu0 %3939
        %v3949 = vunpack.c.l.b16 %v3261
        %v3950 = vunpack.c.l.b16 %v3262
        %v3951 = vunpack.c.l.b16 %v3263
        %v3952 = vunpack.c.l.b16 %v3264
        %v3953 = vunpack.c.l.b16 %v3265
        %v3954 = vunpack.c.l.b16 %v3266
        %v3955 = vunpack.c.l.b16 %v3267
        %v3956 = vunpack.c.l.b16 %v3268
        %v3957 = vpack.c.b16 %v3766, %v3949
        %v3958 = vpack.c.b16 %v3768, %v3950
        %v3959 = vpack.c.b16 %v3770, %v3951
        %v3960 = vpack.c.b16 %v3772, %v3952
        %v3961 = vpack.c.b16 %v3774, %v3953
        %v3962 = vpack.c.b16 %v3776, %v3954
        %v3963 = vpack.c.b16 %v3778, %v3955
        %v3964 = vpack.c.b16 %v3780, %v3956
        %v3965 = vrot.slane %v3957, 1
        %v3966 = vrot.slane %v3821, 1
        %v3967 = vsel %vm1592, %v3965, %v3966
        %v3968 = vrot.slane %v3958, 1
        %v3969 = vrot.slane %v3822, 1
        %v3970 = vsel %vm1592, %v3968, %v3969
        %v3971 = vrot.slane %v3959, 1
        %v3972 = vrot.slane %v3823, 1
        %v3973 = vsel %vm1592, %v3971, %v3972
        %v3974 = vrot.slane %v3960, 1
        %v3975 = vrot.slane %v3824, 1
        %v3976 = vsel %vm1592, %v3974, %v3975
        %v3977 = vrot.slane %v3961, 1
        %v3978 = vrot.slane %v3825, 1
        %v3979 = vsel %vm1592, %v3977, %v3978
        %v3980 = vrot.slane %v3962, 1
        %v3981 = vrot.slane %v3826, 1
        %v3982 = vsel %vm1592, %v3980, %v3981
        %v3983 = vrot.slane %v3963, 1
        %v3984 = vrot.slane %v3827, 1
        %v3985 = vsel %vm1592, %v3983, %v3984
        %v3986 = vrot.slane %v3964, 1
        %v3987 = vrot.slane %v3828, 1
        %v3988 = vsel %vm1592, %v3986, %v3987
        %v3990 = vsel %vm2243, %v3301, %v3430
        %v3992 = vsel %vm2243, %v3302, %v3432
        %v3994 = vsel %vm2243, %v3303, %v3434
        %v3996 = vsel %vm2243, %v3304, %v3436
        %v3998 = vsel %vm2243, %v3305, %v3438
        %v4000 = vsel %vm2243, %v3306, %v3440
        %v4002 = vsel %vm2243, %v3307, %v3442
        %v4004 = vsel %vm2243, %v3308, %v3444
        %v4006 = vsel %vm2264, %v3990, %v3494
        %v4008 = vsel %vm2264, %v3992, %v3496
        %v4010 = vsel %vm2264, %v3994, %v3498
        %v4012 = vsel %vm2264, %v3996, %v3500
        %v4014 = vsel %vm2264, %v3998, %v3502
        %v4016 = vsel %vm2264, %v4000, %v3504
        %v4018 = vsel %vm2264, %v4002, %v3506
        %v4020 = vsel %vm2264, %v4004, %v3508
        %v4022 = vsel %vm2285, %v4006, %v3550
        %v4025 = vsel %vm2285, %v4008, %v3552
        %v4028 = vsel %vm2285, %v4010, %v3554
        %v4031 = vsel %vm2285, %v4012, %v3556
        %v4034 = vsel %vm2285, %v4014, %v3558
        %v4037 = vsel %vm2285, %v4016, %v3560
        %v4040 = vsel %vm2285, %v4018, %v3562
        %v4043 = vsel %vm2285, %v4020, %v3564
        %v4047 = vsel %vm2243, %v3600, %v3734
        %v4050 = vsel %vm2243, %v3612, %v3736
        %v4053 = vsel %vm2243, %v3624, %v3738
        %v4056 = vsel %vm2243, %v3636, %v3740
        %v4059 = vsel %vm2243, %v3648, %v3742
        %v4062 = vsel %vm2243, %v3660, %v3744
        %v4065 = vsel %vm2243, %v3672, %v3746
        %v4068 = vsel %vm2243, %v3684, %v3748
        %v4070 = vsel %vm2264, %v4047, %v3790
        %v4072 = vsel %vm2264, %v4050, %v3792
        %v4074 = vsel %vm2264, %v4053, %v3794
        %v4076 = vsel %vm2264, %v4056, %v3796
        %v4078 = vsel %vm2264, %v4059, %v3798
        %v4080 = vsel %vm2264, %v4062, %v3800
        %v4082 = vsel %vm2264, %v4065, %v3802
        %v4084 = vsel %vm2264, %v4068, %v3804
        %v4086 = vsel %vm2285, %v4070, %v3926
        %v4089 = vsel %vm2285, %v4072, %v3928
        %v4092 = vsel %vm2285, %v4074, %v3930
        %v4095 = vsel %vm2285, %v4076, %v3932
        %v4098 = vsel %vm2285, %v4078, %v3934
        %v4101 = vsel %vm2285, %v4080, %v3936
        %v4104 = vsel %vm2285, %v4082, %v3938
        %v4107 = vsel %vm2285, %v4084, %v3940
        %v4109 = vld [vmem:[#allocation12] sm:$0xf]
        %v4110 = vld [vmem:[#allocation12 + $0x4] sm:$0xf]
        %v4111 = vld [vmem:[#allocation12 + $0x8] sm:$0xf]
        %v4112 = vld [vmem:[#allocation12 + $0xc] sm:$0xf]
        %v4113 = vld [vmem:[#allocation12 + $0x10] sm:$0xf]
        %v4114 = vld [vmem:[#allocation12 + $0x14] sm:$0xf]
        %v4115 = vld [vmem:[#allocation12 + $0x18] sm:$0xf]
        %v4116 = vld [vmem:[#allocation12 + $0x1c] sm:$0xf]
        %v4117 = vld [vmem:[#allocation12 + $0x20] sm:$0xf]
        %v4118 = vld [vmem:[#allocation12 + $0x24] sm:$0xf]
        %v4119 = vld [vmem:[#allocation12 + $0x28] sm:$0xf]
        %v4120 = vld [vmem:[#allocation12 + $0x2c] sm:$0xf]
        %v4121 = vld [vmem:[#allocation12 + $0x30] sm:$0xf]
        %v4122 = vld [vmem:[#allocation12 + $0x34] sm:$0xf]
        %v4123 = vld [vmem:[#allocation12 + $0x38] sm:$0xf]
        %v4124 = vld [vmem:[#allocation12 + $0x3c] sm:$0xf]
        %v4125 = vld [vmem:[#allocation12 + $0x40] sm:$0xf]
        %v4126 = vld [vmem:[#allocation12 + $0x44] sm:$0xf]
        %v4127 = vld [vmem:[#allocation12 + $0x48] sm:$0xf]
        %v4128 = vld [vmem:[#allocation12 + $0x4c] sm:$0xf]
        %v4129 = vld [vmem:[#allocation12 + $0x50] sm:$0xf]
        %v4130 = vld [vmem:[#allocation12 + $0x54] sm:$0xf]
        %v4131 = vld [vmem:[#allocation12 + $0x58] sm:$0xf]
        %v4132 = vld [vmem:[#allocation12 + $0x5c] sm:$0xf]
        %v4133 = vld [vmem:[#allocation12 + $0x60] sm:$0xf]
        %v4134 = vld [vmem:[#allocation12 + $0x64] sm:$0xf]
        %v4135 = vld [vmem:[#allocation12 + $0x68] sm:$0xf]
        %v4136 = vld [vmem:[#allocation12 + $0x6c] sm:$0xf]
        %v4137 = vld [vmem:[#allocation12 + $0x70] sm:$0xf]
        %v4138 = vld [vmem:[#allocation12 + $0x74] sm:$0xf]
        %v4139 = vld [vmem:[#allocation12 + $0x78] sm:$0xf]
        %v4140 = vld [vmem:[#allocation12 + $0x7c] sm:$0xf]
        %v4141 = vld [vmem:[#allocation12 + $0x80] sm:$0xf]
        %v4142 = vld [vmem:[#allocation12 + $0x84] sm:$0xf]
        %v4143 = vld [vmem:[#allocation12 + $0x88] sm:$0xf]
        %v4144 = vld [vmem:[#allocation12 + $0x8c] sm:$0xf]
        %v4145 = vld [vmem:[#allocation14] sm:$0x1]
        %v4147 = vlaneseq
        %v4148 = vshrl.u32 %v4147, 7
        %v4149 = vsub.s32 0, %v4148
        %v4150 = vrot.slane %v4145, %v4149
        %v4188 = vunpack.c.l.b16 %v4109
        %v4189 = vunpack.c.l.b16 %v4110
        %v4190 = vunpack.c.l.b16 %v4111
        %v4191 = vunpack.c.l.b16 %v4112
        %v4192 = vunpack.c.l.b16 %v4113
        %v4193 = vunpack.c.l.b16 %v4114
        %v4194 = vunpack.c.l.b16 %v4115
        %v4195 = vunpack.c.l.b16 %v4116
        %v4196 = vunpack.c.l.b16 %v4117
        %v4197 = vunpack.c.l.b16 %v4118
        %v4198 = vunpack.c.l.b16 %v4119
        %v4199 = vunpack.c.l.b16 %v4120
        %v4200 = vunpack.c.l.b16 %v4121
        %v4201 = vunpack.c.l.b16 %v4122
        %v4202 = vunpack.c.l.b16 %v4123
        %v4203 = vunpack.c.l.b16 %v4124
        %v4204 = vunpack.c.l.b16 %v4125
        %v4205 = vunpack.c.l.b16 %v4126
        %v4206 = vunpack.c.l.b16 %v4127
        %v4207 = vunpack.c.l.b16 %v4128
        %v4208 = vunpack.c.l.b16 %v4129
        %v4209 = vunpack.c.l.b16 %v4130
        %v4210 = vunpack.c.l.b16 %v4131
        %v4211 = vunpack.c.l.b16 %v4132
        %v4212 = vunpack.c.l.b16 %v4133
        %v4213 = vunpack.c.l.b16 %v4134
        %v4214 = vunpack.c.l.b16 %v4135
        %v4215 = vunpack.c.l.b16 %v4136
        %v4216 = vunpack.c.l.b16 %v4137
        %v4217 = vunpack.c.l.b16 %v4138
        %v4218 = vunpack.c.l.b16 %v4139
        %v4219 = vunpack.c.l.b16 %v4140
        %v4220 = vunpack.c.l.b16 %v4141
        %v4221 = vunpack.c.l.b16 %v4142
        %v4222 = vunpack.c.l.b16 %v4143
        %v4223 = vunpack.c.l.b16 %v4144
        %v4224 = vpack.c.b16 %v4189, %v4188
        %v4225 = vpack.c.b16 %v4191, %v4190
        %v4226 = vpack.c.b16 %v4193, %v4192
        %v4227 = vpack.c.b16 %v4195, %v4194
        %v4228 = vpack.c.b16 %v4197, %v4196
        %v4229 = vpack.c.b16 %v4199, %v4198
        %v4230 = vpack.c.b16 %v4201, %v4200
        %v4231 = vpack.c.b16 %v4203, %v4202
        %v4232 = vpack.c.b16 %v4205, %v4204
        %v4233 = vpack.c.b16 %v4207, %v4206
        %v4234 = vpack.c.b16 %v4209, %v4208
        %v4235 = vpack.c.b16 %v4211, %v4210
        %v4236 = vpack.c.b16 %v4213, %v4212
        %v4237 = vpack.c.b16 %v4215, %v4214
        %v4238 = vpack.c.b16 %v4217, %v4216
        %v4239 = vpack.c.b16 %v4219, %v4218
        %v4240 = vpack.c.b16 %v4221, %v4220
        %v4241 = vpack.c.b16 %v4223, %v4222
        %v4261 = vsel %vm2243, %v3967, 0
        %v4264 = vsel %vm2243, %v3970, 0
        %v4267 = vsel %vm2243, %v3973, 0
        %v4270 = vsel %vm2243, %v3976, 0
        %v4273 = vsel %vm2243, %v3979, 0
        %v4276 = vsel %vm2243, %v3982, 0
        %v4279 = vsel %vm2243, %v3985, 0
        %v4282 = vsel %vm2243, %v3988, 0
        %4284 = vmatprep.subr.bf16.mxu0 0
        %4285 = vmatpush1.bf16.msra.mxu0 %v4224
        %4286 = vmatprep.subr.bf16.mxu0 0
        %4287 = vmatpush1.bf16.msra.mxu0 %v4225
        %4288 = vmatprep.subr.bf16.mxu0 0
        %4289 = vmatpush1.bf16.msra.mxu0 %v4226
        %4290 = vmatprep.subr.bf16.mxu0 0
        %4291 = vmatpush1.bf16.msra.mxu0 %v4227
        %4292 = vmatprep.subr.bf16.mxu0 0
        %4293 = vmatpush1.bf16.msra.mxu0 %v4228
        %4294 = vmatprep.subr.bf16.mxu0 0
        %4295 = vmatpush1.bf16.msra.mxu0 %v4229
        %4296 = vmatprep.subr.bf16.mxu0 0
        %4297 = vmatpush1.bf16.msra.mxu0 %v4230
        %4298 = vmatprep.subr.bf16.mxu0 0
        %4299 = vmatpush1.bf16.msra.mxu0 %v4231
        %4300 = vmatprep.subr.bf16.mxu0 0
        %4301 = vmatpush1.bf16.msra.mxu0 %v4232
        %4302 = vmatprep.subr.bf16.mxu0 0
        %4303 = vmatpush1.bf16.msra.mxu0 %v4233
        %4304 = vmatprep.subr.bf16.mxu0 0
        %4305 = vmatpush1.bf16.msra.mxu0 %v4234
        %4306 = vmatprep.subr.bf16.mxu0 0
        %4307 = vmatpush1.bf16.msra.mxu0 %v4235
        %4308 = vmatprep.subr.bf16.mxu0 0
        %4309 = vmatpush1.bf16.msra.mxu0 %v4236
        %4310 = vmatprep.subr.bf16.mxu0 0
        %4311 = vmatpush1.bf16.msra.mxu0 %v4237
        %4312 = vmatprep.subr.bf16.mxu0 0
        %4313 = vmatpush1.bf16.msra.mxu0 %v4238
        %4314 = vmatprep.subr.bf16.mxu0 0
        %4315 = vmatpush1.bf16.msra.mxu0 %v4239
        %4316 = vmatprep.mubr.bf16.mxu0 %v4086
        %4317 = vmatmul.mubr.bf16.gmra.mrb[0].mxu0 %v4022
        %v4318 = vpop.f32.mrb[0].mxu0
        %v4319 = vadd.f32 %v4150, %v4318
        %v4320 = vpop.f32.mrb[0].mxu0
        %v4321 = vpop.f32.mrb[0].mxu0
        %v4322 = vadd.f32 %v4150, %v4321
        %v4323 = vpop.f32.mrb[0].mxu0
        %4324 = vmatprep.mubr.bf16.mxu0 %v4089
        %4325 = vmatmul.mubr.bf16.gmra.mrb[0].mxu0 %v4025
        %v4326 = vpop.f32.mrb[0].mxu0
        %v4327 = vadd.f32 %v4150, %v4326
        %v4328 = vpop.f32.mrb[0].mxu0
        %v4329 = vpop.f32.mrb[0].mxu0
        %v4330 = vadd.f32 %v4150, %v4329
        %v4331 = vpop.f32.mrb[0].mxu0
        %4332 = vmatprep.mubr.bf16.mxu0 %v4092
        %4333 = vmatmul.mubr.bf16.gmra.mrb[0].mxu0 %v4028
        %v4334 = vpop.f32.mrb[0].mxu0
        %v4335 = vadd.f32 %v4150, %v4334
        %v4336 = vpop.f32.mrb[0].mxu0
        %v4337 = vpop.f32.mrb[0].mxu0
        %v4338 = vadd.f32 %v4150, %v4337
        %v4339 = vpop.f32.mrb[0].mxu0
        %4340 = vmatprep.mubr.bf16.mxu0 %v4095
        %4341 = vmatmul.mubr.bf16.gmra.mrb[0].mxu0 %v4031
        %v4342 = vpop.f32.mrb[0].mxu0
        %v4343 = vadd.f32 %v4150, %v4342
        %v4344 = vpop.f32.mrb[0].mxu0
        %v4345 = vpop.f32.mrb[0].mxu0
        %v4346 = vadd.f32 %v4150, %v4345
        %v4347 = vpop.f32.mrb[0].mxu0
        %4348 = vmatprep.mubr.bf16.mxu0 %v4098
        %4349 = vmatmul.mubr.bf16.gmra.mrb[0].mxu0 %v4034
        %v4350 = vpop.f32.mrb[0].mxu0
        %v4351 = vadd.f32 %v4150, %v4350
        %v4352 = vpop.f32.mrb[0].mxu0
        %v4353 = vpop.f32.mrb[0].mxu0
        %v4354 = vadd.f32 %v4150, %v4353
        %v4355 = vpop.f32.mrb[0].mxu0
        %4356 = vmatprep.mubr.bf16.mxu0 %v4101
        %4357 = vmatmul.mubr.bf16.gmra.mrb[0].mxu0 %v4037
        %v4358 = vpop.f32.mrb[0].mxu0
        %v4359 = vadd.f32 %v4150, %v4358
        %v4360 = vpop.f32.mrb[0].mxu0
        %v4361 = vpop.f32.mrb[0].mxu0
        %v4362 = vadd.f32 %v4150, %v4361
        %v4363 = vpop.f32.mrb[0].mxu0
        %4364 = vmatprep.mubr.bf16.mxu0 %v4104
        %4365 = vmatmul.mubr.bf16.gmra.mrb[0].mxu0 %v4040
        %v4366 = vpop.f32.mrb[0].mxu0
        %v4367 = vadd.f32 %v4150, %v4366
        %v4368 = vpop.f32.mrb[0].mxu0
        %v4369 = vpop.f32.mrb[0].mxu0
        %v4370 = vadd.f32 %v4150, %v4369
        %v4371 = vpop.f32.mrb[0].mxu0
        %4372 = vmatprep.mubr.bf16.mxu0 %v4107
        %4373 = vmatmul.mubr.bf16.gmra.mrb[0].mxu0 %v4043
        %v4374 = vpop.f32.mrb[0].mxu0
        %v4375 = vadd.f32 %v4150, %v4374
        %v4376 = vpop.f32.mrb[0].mxu0
        %v4377 = vpop.f32.mrb[0].mxu0
        %v4378 = vadd.f32 %v4150, %v4377
        %v4379 = vpop.f32.mrb[0].mxu0
        %4380 = vdwg.mxu0
        %4381 = vmatprep.subr.bf16.mxu0 0
        %4382 = vmatpush1.bf16.msra.mxu0 %v4240
        %4383 = vmatprep.subr.bf16.mxu0 0
        %4384 = vmatpush1.bf16.msra.mxu0 %v4241
        %4385 = vmatprep.subr.bf16.mxu0 0
        %4386 = vmatpush1.bf16.msra.mxu0 0
        %4387 = vmatprep.subr.bf16.mxu0 0
        %4388 = vmatpush1.bf16.msra.mxu0 0
        %4389 = vmatprep.subr.bf16.mxu0 0
        %4390 = vmatpush1.bf16.msra.mxu0 0
        %4391 = vmatprep.subr.bf16.mxu0 0
        %4392 = vmatpush1.bf16.msra.mxu0 0
        %4393 = vmatprep.subr.bf16.mxu0 0
        %4394 = vmatpush1.bf16.msra.mxu0 0
        %4395 = vmatprep.subr.bf16.mxu0 0
        %4396 = vmatpush1.bf16.msra.mxu0 0
        %4397 = vmatprep.subr.bf16.mxu0 0
        %4398 = vmatpush1.bf16.msra.mxu0 0
        %4399 = vmatprep.subr.bf16.mxu0 0
        %4400 = vmatpush1.bf16.msra.mxu0 0
        %4401 = vmatprep.subr.bf16.mxu0 0
        %4402 = vmatpush1.bf16.msra.mxu0 0
        %4403 = vmatprep.subr.bf16.mxu0 0
        %4404 = vmatpush1.bf16.msra.mxu0 0
        %4405 = vmatprep.subr.bf16.mxu0 0
        %4406 = vmatpush1.bf16.msra.mxu0 0
        %4407 = vmatprep.subr.bf16.mxu0 0
        %4408 = vmatpush1.bf16.msra.mxu0 0
        %4409 = vmatprep.subr.bf16.mxu0 0
        %4410 = vmatpush1.bf16.msra.mxu0 0
        %4411 = vmatprep.subr.bf16.mxu0 0
        %4412 = vmatpush1.bf16.msra.mxu0 0
        %4413 = vmatprep.mubr.bf16.mxu0 0
        %4414 = vmatmul.mubr.bf16.gmra.mrb[0].mxu0 %v4261
        %v4415 = vpop.f32.mrb[0].mxu0
        %v4416 = vadd.f32 %v4319, %v4415
        %v4417 = vpop.f32.mrb[0].mxu0
        %v4418 = vpop.f32.mrb[0].mxu0
        %v4419 = vadd.f32 %v4322, %v4418
        %v4420 = vpop.f32.mrb[0].mxu0
        %4421 = vmatprep.mubr.bf16.mxu0 0
        %4422 = vmatmul.mubr.bf16.gmra.mrb[0].mxu0 %v4264
        %v4423 = vpop.f32.mrb[0].mxu0
        %v4424 = vadd.f32 %v4327, %v4423
        %v4425 = vpop.f32.mrb[0].mxu0
        %v4426 = vpop.f32.mrb[0].mxu0
        %v4427 = vadd.f32 %v4330, %v4426
        %v4428 = vpop.f32.mrb[0].mxu0
        %4429 = vmatprep.mubr.bf16.mxu0 0
        %4430 = vmatmul.mubr.bf16.gmra.mrb[0].mxu0 %v4267
        %v4431 = vpop.f32.mrb[0].mxu0
        %v4432 = vadd.f32 %v4335, %v4431
        %v4433 = vpop.f32.mrb[0].mxu0
        %v4434 = vpop.f32.mrb[0].mxu0
        %v4435 = vadd.f32 %v4338, %v4434
        %v4436 = vpop.f32.mrb[0].mxu0
        %4437 = vmatprep.mubr.bf16.mxu0 0
        %4438 = vmatmul.mubr.bf16.gmra.mrb[0].mxu0 %v4270
        %v4439 = vpop.f32.mrb[0].mxu0
        %v4440 = vadd.f32 %v4343, %v4439
        %v4441 = vpop.f32.mrb[0].mxu0
        %v4442 = vpop.f32.mrb[0].mxu0
        %v4443 = vadd.f32 %v4346, %v4442
        %v4444 = vpop.f32.mrb[0].mxu0
        %4445 = vmatprep.mubr.bf16.mxu0 0
        %4446 = vmatmul.mubr.bf16.gmra.mrb[0].mxu0 %v4273
        %v4447 = vpop.f32.mrb[0].mxu0
        %v4448 = vadd.f32 %v4351, %v4447
        %v4449 = vpop.f32.mrb[0].mxu0
        %v4450 = vpop.f32.mrb[0].mxu0
        %v4451 = vadd.f32 %v4354, %v4450
        %v4452 = vpop.f32.mrb[0].mxu0
        %4453 = vmatprep.mubr.bf16.mxu0 0
        %4454 = vmatmul.mubr.bf16.gmra.mrb[0].mxu0 %v4276
        %v4455 = vpop.f32.mrb[0].mxu0
        %v4456 = vadd.f32 %v4359, %v4455
        %v4457 = vpop.f32.mrb[0].mxu0
        %v4458 = vpop.f32.mrb[0].mxu0
        %v4459 = vadd.f32 %v4362, %v4458
        %v4460 = vpop.f32.mrb[0].mxu0
        %4461 = vmatprep.mubr.bf16.mxu0 0
        %4462 = vmatmul.mubr.bf16.gmra.mrb[0].mxu0 %v4279
        %v4463 = vpop.f32.mrb[0].mxu0
        %v4464 = vadd.f32 %v4367, %v4463
        %v4465 = vpop.f32.mrb[0].mxu0
        %v4466 = vpop.f32.mrb[0].mxu0
        %v4467 = vadd.f32 %v4370, %v4466
        %v4468 = vpop.f32.mrb[0].mxu0
        %4469 = vmatprep.mubr.bf16.mxu0 0
        %4470 = vmatmul.mubr.bf16.gmra.mrb[0].mxu0 %v4282
        %v4471 = vpop.f32.mrb[0].mxu0
        %v4472 = vadd.f32 %v4375, %v4471
        %v4473 = vpop.f32.mrb[0].mxu0
        %v4474 = vpop.f32.mrb[0].mxu0
        %v4475 = vadd.f32 %v4378, %v4474
        %v4476 = vpop.f32.mrb[0].mxu0
        %4477 = vdwg.mxu0
        %v4478 = vmax.f32 %v4416, 0.0
        %v4479 = vmax.f32 %v4419, 0.0
        %v4480 = vmax.f32 %v4424, 0.0
        %v4481 = vmax.f32 %v4427, 0.0
        %v4482 = vmax.f32 %v4432, 0.0
        %v4483 = vmax.f32 %v4435, 0.0
        %v4484 = vmax.f32 %v4440, 0.0
        %v4485 = vmax.f32 %v4443, 0.0
        %v4486 = vmax.f32 %v4448, 0.0
        %v4487 = vmax.f32 %v4451, 0.0
        %v4488 = vmax.f32 %v4456, 0.0
        %v4489 = vmax.f32 %v4459, 0.0
        %v4490 = vmax.f32 %v4464, 0.0
        %v4491 = vmax.f32 %v4467, 0.0
        %v4492 = vmax.f32 %v4472, 0.0
        %v4493 = vmax.f32 %v4475, 0.0
        %4494 = vxpose.xlu0.b32.start [1/16] %v4478, 128
        %4495 = vxpose.xlu0.b32.cont [2/16] %v4479, 128
        %4496 = vxpose.xlu0.b32.cont [3/16] %v4480, 128
        %4497 = vxpose.xlu0.b32.cont [4/16] %v4481, 128
        %4498 = vxpose.xlu0.b32.cont [5/16] %v4482, 128
        %4499 = vxpose.xlu0.b32.cont [6/16] %v4483, 128
        %4500 = vxpose.xlu0.b32.cont [7/16] %v4484, 128
        %4501 = vxpose.xlu0.b32.cont [8/16] %v4485, 128
        %4502 = vxpose.xlu0.b32.cont [9/16] %v4486, 128
        %4503 = vxpose.xlu0.b32.cont [10/16] %v4487, 128
        %4504 = vxpose.xlu0.b32.cont [11/16] %v4488, 128
        %4505 = vxpose.xlu0.b32.cont [12/16] %v4489, 128
        %4506 = vxpose.xlu0.b32.cont [13/16] %v4490, 128
        %4507 = vxpose.xlu0.b32.cont [14/16] %v4491, 128
        %4508 = vxpose.xlu0.b32.cont [15/16] %v4492, 128
        %4509 = vxpose.xlu0.b32.end [16/16] %v4493, 128
        %v4510 = vpop.trf.xlu0
        %v4511 = vpop.trf.xlu0
        %v4512 = vpop.trf.xlu0
        %v4513 = vpop.trf.xlu0
        %v4514 = vpop.trf.xlu0
        %v4515 = vpop.trf.xlu0
        %v4516 = vpop.trf.xlu0
        %v4517 = vpop.trf.xlu0
        %v4518 = vpop.trf.xlu0
        %v4519 = vpop.trf.xlu0
        %v4520 = vpop.trf.xlu0
        %v4521 = vpop.trf.xlu0
        %v4522 = vpop.trf.xlu0
        %v4523 = vpop.trf.xlu0
        %v4524 = vpop.trf.xlu0
        %v4525 = vpop.trf.xlu0
        %4526 = vst [vmem:[%s396] sm:$0xff] %v4510
        %4527 = vst [vmem:[%s396 + $0x8] sm:$0xff] %v4511
        %4528 = vst [vmem:[%s396 + $0x10] sm:$0xff] %v4512
        %4529 = vst [vmem:[%s396 + $0x18] sm:$0xff] %v4513
        %4530 = vst [vmem:[%s396 + $0x20] sm:$0xff] %v4514
        %4531 = vst [vmem:[%s396 + $0x28] sm:$0xff] %v4515
        %4532 = vst [vmem:[%s396 + $0x30] sm:$0xff] %v4516
        %4533 = vst [vmem:[%s396 + $0x38] sm:$0xff] %v4517
        %s4534 = sand.u32 %s203, 1
        %s4535 = scalar_lea.sflag [#allocation5], %s4534
        %s4536 = sand.u32 %s203, 1
        %s4537 = smul.addr %s4536, 64
        %s4538 = scalar_lea.vmem [#allocation15], %s4537
        // Predicated region
        $region93: #{tpu_custom_call.1} parent=47 // pred_check
          %p4539 = pneg %p213
        $region94: #{tpu_custom_call.1} parent=47 // pred_check_branch
          %4541 = sbr.rel (%p4539) target = $region96
        $region95: #{tpu_custom_call.1} parent=47 // pred_region
          %s4543 = ssub.s32 1024, 1024
          %4544 = vsyncadd %s4535, %s4543
          %s4545 = smul.addr %s31, 16
          %s4546 = sadd.s32 %s32, %s4545
          %s4547 = smul.addr %s4546, 128
          %s4548 = scalar_lea.hbm %s7, %s4547
          %s4549 = sshll.u32 %s4538, 4
          %s4550 = int_to_ptr.vmem [resolvable:$true] %s4549
          %4555 = dma.vmem_to_hbm [thread:$0]  %s4550, 1024, %s4548, %s4535, 128, 256, 8
        $region96: #{tpu_custom_call.1} parent=47 // pred_fallthru
          _
      $region48: #{tpu_custom_call.1} parent=5 // pred_fallthru
        _
      %p4556 = scmp.le.s32.totalorder 2, %s22
      // Predicated region
      $region97: #{tpu_custom_call.1} parent=5 // pred_check
        %p4557 = pneg %p4556
      $region98: #{tpu_custom_call.1} parent=5 // pred_check_branch
        %4559 = sbr.rel (%p4557) target = $region100
      $region99: #{tpu_custom_call.1} parent=5 // pred_region
        %s4560 = ssub.s32 %s22, 2
        // Predicated region
        $region101: #{tpu_custom_call.1} parent=99 // pred_check
          %p4561 = pneg %p219
        $region102: #{tpu_custom_call.1} parent=99 // pred_check_branch
          %4563 = sbr.rel (%p4561) target = $region104
        $region103: #{tpu_custom_call.1} parent=99 // pred_region
          %s4564 = sand.u32 %s204, 1
          %s4565 = scalar_lea.sflag [#allocation5], %s4564
          %s4566 = sand.u32 %s204, 1
          %s4567 = smul.addr %s4566, 64
          %s4568 = scalar_lea.vmem [#allocation15], %s4567
          %4569 = dma.done %s4565, 1024
        $region104: #{tpu_custom_call.1} parent=99 // pred_fallthru
          _
      $region100: #{tpu_custom_call.1} parent=5 // pred_fallthru
        _
    $region6: #{tpu_custom_call.1} parent=1 // loop_footer
      %s26 = sadd.s32 1, %s22
    $region7: #{tpu_custom_call.1} parent=1 // loop_footer_branch
      %21 = sbr.rel target = $region3
    $region8: #{tpu_custom_call.1} parent=1 // loop_exit
      _
    %4570 = vsyncpa [#allocation4], 1
    %s4571 = scalar_lea.sflag [#allocation4], 1
    %4572 = vsyncpa %s4571, 1
    %4573 = vsyncpa [#allocation7], 1
    %4574 = vsyncpa [#allocation10], 1
    %4575 = vsyncpa [#allocation13], 1
    %4576 = vsyncpa [#allocation5], 1
    %s4577 = scalar_lea.sflag [#allocation5], 1
    %4578 = vsyncpa %s4577, 1

</llo_original>
